<compile_context>
chip_gen: v6e
topology: v6e:2x2x1
jax: 0.10.0
libtpu: 0.0.40
codegen_flags: <defaults>
</compile_context>

<pallas_src>
import jax
import jax.numpy as jnp
from jax.experimental import pallas as pl
from jax.experimental.pallas import tpu as pltpu

D_IN, D_H1, D_H2, D_OUT = 784, 800, 200, 47
P_IN, P_H1, P_H2, P_OUT = 896, 896, 256, 128   # lane-multiple (128) padded dims


def mlp_kernel(x_ref, w1_ref, b1_ref, w2_ref, b2_ref, w3_ref, b3_ref, o_ref):
    # Layer 1: (TB, 896)bf16 @ (896, 896)bf16 -> f32 acc, bias + ReLU in f32
    h1 = jnp.dot(x_ref[...], w1_ref[...], preferred_element_type=jnp.float32)
    h1 = jnp.maximum(h1 + b1_ref[...], 0.0)
    # Layer 2: (TB, 896) @ (896, 256)
    h2 = jnp.dot(h1.astype(jnp.bfloat16), w2_ref[...],
                 preferred_element_type=jnp.float32)
    h2 = jnp.maximum(h2 + b2_ref[...], 0.0)
    # Layer 3: (TB, 256) @ (256, 128)
    out = jnp.dot(h2.astype(jnp.bfloat16), w3_ref[...],
                  preferred_element_type=jnp.float32)
    o_ref[...] = (out + b3_ref[...]).astype(o_ref.dtype)


def _pad2d(a, rows, cols, dtype=None):
    r, c = a.shape
    out = jnp.pad(a, ((0, rows - r), (0, cols - c)))
    return out.astype(dtype) if dtype is not None else out


def _choose_tile_b(batch):
    # Big tiles keep the MXU fed; keep >= 2 grid steps when the batch allows so
    # the parallel grid axis can be split across v7x's two TensorCores.
    tile_b = 512
    while tile_b > 8 and batch < 2 * tile_b:
        tile_b //= 2
    return tile_b


def big_dense_ann(x, w1, b1, w2, b2, w3, b3, *, tile_b=None):
    """x: (B, 784) f32; weights (in, out) f32; biases (1, out) f32 -> (B, 47) f32."""
    B = x.shape[0]
    if tile_b is None:
        tile_b = _choose_tile_b(B)
    b_pad = pl.cdiv(B, tile_b) * tile_b
    grid = (b_pad // tile_b,)

    # Zero-pad (exact through matmul/ReLU) and cast matmul operands to bf16.
    xp = _pad2d(x, b_pad, P_IN, jnp.bfloat16)
    w1p = _pad2d(w1, P_IN, P_H1, jnp.bfloat16)
    w2p = _pad2d(w2, P_H1, P_H2, jnp.bfloat16)
    w3p = _pad2d(w3, P_H2, P_OUT, jnp.bfloat16)
    b1p = _pad2d(b1, 1, P_H1)     # biases stay f32
    b2p = _pad2d(b2, 1, P_H2)
    b3p = _pad2d(b3, 1, P_OUT)

    full = lambda shape: pl.BlockSpec(shape, lambda i: (0, 0))

    out = pl.pallas_call(
        mlp_kernel,
        out_shape=jax.ShapeDtypeStruct((b_pad, P_OUT), jnp.float32),
        grid_spec=pltpu.PrefetchScalarGridSpec(
            num_scalar_prefetch=0,
            grid=grid,
            in_specs=[
                pl.BlockSpec((tile_b, P_IN), lambda i: (i, 0)),  # x tile streams
                full((P_IN, P_H1)),   # w1 (resident across the grid)
                full((1, P_H1)),      # b1
                full((P_H1, P_H2)),   # w2
                full((1, P_H2)),      # b2
                full((P_H2, P_OUT)),  # w3
                full((1, P_OUT)),     # b3
            ],
            out_specs=pl.BlockSpec((tile_b, P_OUT), lambda i: (i, 0)),
        ),
        compiler_params=pltpu.CompilerParams(
            dimension_semantics=("parallel",),
        ),
    )(xp, w1p, b1p, w2p, b2p, w3p, b3p)

    return out[:B, :D_OUT]


def _init_linear(key, d_in, d_out):
    # Deterministic PyTorch-style uniform(-1/sqrt(in), 1/sqrt(in)) init.
    kw, kb = jax.random.split(key)
    bound = 1.0 / jnp.sqrt(jnp.float32(d_in))
    w = jax.random.uniform(kw, (d_in, d_out), jnp.float32, -bound, bound)
    b = jax.random.uniform(kb, (1, d_out), jnp.float32, -bound, bound)
    return w, b


if __name__ == "__main__":
    key = jax.random.PRNGKey(0)
    kx, k1, k2, k3 = jax.random.split(key, 4)

    batch = 4  # small demo batch; wrapper pads batch/features and slices back
    x = jax.random.normal(kx, (batch, D_IN), jnp.float32)

    w1, b1 = _init_linear(k1, D_IN, D_H1)
    w2, b2 = _init_linear(k2, D_H1, D_H2)
    w3, b3 = _init_linear(k3, D_H2, D_OUT)

    out = jax.block_until_ready(big_dense_ann(x, w1, b1, w2, b2, w3, b3))
    assert out.shape == (batch, D_OUT)

    # Reference 1: same bf16-input / f32-accumulate math as the kernel (tight tol).
    bf = jnp.bfloat16
    h = jnp.maximum(jnp.dot(x.astype(bf), w1.astype(bf),
                            preferred_element_type=jnp.float32) + b1, 0.0)
    h = jnp.maximum(jnp.dot(h.astype(bf), w2.astype(bf),
                            preferred_element_type=jnp.float32) + b2, 0.0)
    ref_bf16 = jnp.dot(h.astype(bf), w3.astype(bf),
                       preferred_element_type=jnp.float32) + b3
    assert jnp.allclose(out, ref_bf16, atol=2e-3, rtol=2e-3), "mismatch vs bf16 reference"

    # Reference 2: full-f32 forward (loose tolerance covers bf16 cast error).
    h = jnp.maximum(x @ w1 + b1, 0.0)
    h = jnp.maximum(h @ w2 + b2, 0.0)
    ref_f32 = h @ w3 + b3
    assert jnp.allclose(out, ref_f32, atol=5e-2, rtol=5e-2), "mismatch vs f32 reference"

    print("KERNEL_OK")
</pallas_src>

<mosaic_0001>
module attributes {stable_mosaic.version = 11 : i64} {
  func.func @mlp_kernel(%arg0: i32, %arg1: memref<8x896xbf16, #tpu.memory_space<vmem>>, %arg2: memref<896x896xbf16, #tpu.memory_space<vmem>>, %arg3: memref<1x896xf32, #tpu.memory_space<vmem>>, %arg4: memref<896x256xbf16, #tpu.memory_space<vmem>>, %arg5: memref<1x256xf32, #tpu.memory_space<vmem>>, %arg6: memref<256x128xbf16, #tpu.memory_space<vmem>>, %arg7: memref<1x128xf32, #tpu.memory_space<vmem>>, %arg8: memref<8x128xf32, #tpu.memory_space<vmem>>) attributes {dimension_semantics = [#tpu.dimension_semantics<parallel>], iteration_bounds = array<i64: 1>, scalar_prefetch = 0 : i64, scratch_operands = 0 : i64, tpu.core_type = #tpu.core_type<tc>, window_params = [{transform_indices = @transform_0, window_bounds = array<i64: 8, 896>}, {pipeline_mode = #tpu.pipeline_mode<synchronous>, transform_indices = @transform_1, window_bounds = array<i64: 896, 896>}, {pipeline_mode = #tpu.pipeline_mode<synchronous>, transform_indices = @transform_2, window_bounds = array<i64: 1, 896>}, {pipeline_mode = #tpu.pipeline_mode<synchronous>, transform_indices = @transform_3, window_bounds = array<i64: 896, 256>}, {pipeline_mode = #tpu.pipeline_mode<synchronous>, transform_indices = @transform_4, window_bounds = array<i64: 1, 256>}, {pipeline_mode = #tpu.pipeline_mode<synchronous>, transform_indices = @transform_5, window_bounds = array<i64: 256, 128>}, {pipeline_mode = #tpu.pipeline_mode<synchronous>, transform_indices = @transform_6, window_bounds = array<i64: 1, 128>}, {transform_indices = @transform_7, window_bounds = array<i64: 8, 128>}]} {
    %c0 = arith.constant 0 : index
    %c0_0 = arith.constant 0 : index
    %0 = vector.load %arg1[%c0, %c0_0] : memref<8x896xbf16, #tpu.memory_space<vmem>>, vector<8x896xbf16>
    %c0_1 = arith.constant 0 : index
    %c0_2 = arith.constant 0 : index
    %1 = vector.load %arg2[%c0_1, %c0_2] : memref<896x896xbf16, #tpu.memory_space<vmem>>, vector<896x896xbf16>
    %cst = arith.constant dense<0.000000e+00> : vector<8x896xf32>
    %2 = tpu.matmul %0, %1, %cst {dimension_numbers = #tpu.dot_dimension_numbers<[1], [0], [0], [1], [0, 0, 1, 1], [], []>} : vector<8x896xbf16>, vector<896x896xbf16>, vector<8x896xf32> -> vector<8x896xf32>
    %c0_3 = arith.constant 0 : index
    %c0_4 = arith.constant 0 : index
    %3 = vector.load %arg3[%c0_3, %c0_4] : memref<1x896xf32, #tpu.memory_space<vmem>>, vector<1x896xf32>
    %4 = vector.broadcast %3 : vector<1x896xf32> to vector<8x896xf32>
    %5 = arith.addf %2, %4 : vector<8x896xf32>
    %cst_5 = arith.constant 0.000000e+00 : f32
    %6 = vector.broadcast %cst_5 : f32 to vector<8x896xf32>
    %7 = arith.maximumf %5, %6 : vector<8x896xf32>
    %8 = arith.truncf %7 : vector<8x896xf32> to vector<8x896xbf16>
    %c0_6 = arith.constant 0 : index
    %c0_7 = arith.constant 0 : index
    %9 = vector.load %arg4[%c0_6, %c0_7] : memref<896x256xbf16, #tpu.memory_space<vmem>>, vector<896x256xbf16>
    %cst_8 = arith.constant dense<0.000000e+00> : vector<8x256xf32>
    %10 = tpu.matmul %8, %9, %cst_8 {dimension_numbers = #tpu.dot_dimension_numbers<[1], [0], [0], [1], [0, 0, 1, 1], [], []>} : vector<8x896xbf16>, vector<896x256xbf16>, vector<8x256xf32> -> vector<8x256xf32>
    %c0_9 = arith.constant 0 : index
    %c0_10 = arith.constant 0 : index
    %11 = vector.load %arg5[%c0_9, %c0_10] : memref<1x256xf32, #tpu.memory_space<vmem>>, vector<1x256xf32>
    %12 = vector.broadcast %11 : vector<1x256xf32> to vector<8x256xf32>
    %13 = arith.addf %10, %12 : vector<8x256xf32>
    %cst_11 = arith.constant 0.000000e+00 : f32
    %14 = vector.broadcast %cst_11 : f32 to vector<8x256xf32>
    %15 = arith.maximumf %13, %14 : vector<8x256xf32>
    %16 = arith.truncf %15 : vector<8x256xf32> to vector<8x256xbf16>
    %c0_12 = arith.constant 0 : index
    %c0_13 = arith.constant 0 : index
    %17 = vector.load %arg6[%c0_12, %c0_13] : memref<256x128xbf16, #tpu.memory_space<vmem>>, vector<256x128xbf16>
    %cst_14 = arith.constant dense<0.000000e+00> : vector<8x128xf32>
    %18 = tpu.matmul %16, %17, %cst_14 {dimension_numbers = #tpu.dot_dimension_numbers<[1], [0], [0], [1], [0, 0, 1, 1], [], []>} : vector<8x256xbf16>, vector<256x128xbf16>, vector<8x128xf32> -> vector<8x128xf32>
    %c0_15 = arith.constant 0 : index
    %c0_16 = arith.constant 0 : index
    %19 = vector.load %arg7[%c0_15, %c0_16] : memref<1x128xf32, #tpu.memory_space<vmem>>, vector<1x128xf32>
    %20 = vector.broadcast %19 : vector<1x128xf32> to vector<8x128xf32>
    %21 = arith.addf %18, %20 : vector<8x128xf32>
    %c0_17 = arith.constant 0 : index
    %c0_18 = arith.constant 0 : index
    %22 = vector.load %arg8[%c0_17, %c0_18] : memref<8x128xf32, #tpu.memory_space<vmem>>, vector<8x128xf32>
    tpu.vector_store %arg8[%c0_17, %c0_18], %21 {strides = array<i32>} : memref<8x128xf32, #tpu.memory_space<vmem>>, vector<8x128xf32>,
    return
  }
  func.func @transform_0(%arg0: i32) -> (i32, i32) {
    %c0_i32 = arith.constant 0 : i32
    %c0_i32_0 = arith.constant 0 : i32
    return %arg0, %c0_i32 : i32, i32
  }
  func.func @transform_1(%arg0: i32) -> (i32, i32) {
    %c0_i32 = arith.constant 0 : i32
    %c0_i32_0 = arith.constant 0 : i32
    %c0_i32_1 = arith.constant 0 : i32
    return %c0_i32, %c0_i32_0 : i32, i32
  }
  func.func @transform_2(%arg0: i32) -> (i32, i32) {
    %c0_i32 = arith.constant 0 : i32
    %c0_i32_0 = arith.constant 0 : i32
    %c0_i32_1 = arith.constant 0 : i32
    return %c0_i32, %c0_i32_0 : i32, i32
  }
  func.func @transform_3(%arg0: i32) -> (i32, i32) {
    %c0_i32 = arith.constant 0 : i32
    %c0_i32_0 = arith.constant 0 : i32
    %c0_i32_1 = arith.constant 0 : i32
    return %c0_i32, %c0_i32_0 : i32, i32
  }
  func.func @transform_4(%arg0: i32) -> (i32, i32) {
    %c0_i32 = arith.constant 0 : i32
    %c0_i32_0 = arith.constant 0 : i32
    %c0_i32_1 = arith.constant 0 : i32
    return %c0_i32, %c0_i32_0 : i32, i32
  }
  func.func @transform_5(%arg0: i32) -> (i32, i32) {
    %c0_i32 = arith.constant 0 : i32
    %c0_i32_0 = arith.constant 0 : i32
    %c0_i32_1 = arith.constant 0 : i32
    return %c0_i32, %c0_i32_0 : i32, i32
  }
  func.func @transform_6(%arg0: i32) -> (i32, i32) {
    %c0_i32 = arith.constant 0 : i32
    %c0_i32_0 = arith.constant 0 : i32
    %c0_i32_1 = arith.constant 0 : i32
    return %c0_i32, %c0_i32_0 : i32, i32
  }
  func.func @transform_7(%arg0: i32) -> (i32, i32) {
    %c0_i32 = arith.constant 0 : i32
    %c0_i32_0 = arith.constant 0 : i32
    return %arg0, %c0_i32 : i32, i32
  }
}

</mosaic_0001>

<llo_original>
// kernel: tpu_custom_call.1
$region0: #{tpu_custom_call.1}
  #allocation0 [shape = 'u32[]', space=smem, size = 0x4, offset = 0x4, fixed_abs, tag = 'smem constant byte address 0x4 - core index']
  #allocation1 [shape = 'u32[144,128]{1,0:T(1,128)}', space=vmem, size = 0x12000, scoped, tag = 'internal scratch']
  %s0 = inlined_call_operand.hbm [shape: bf16[8,896], index: 0, kind: input, shape index: {}]
  %s1 = inlined_call_operand.hbm [shape: bf16[896,896], index: 1, kind: input, shape index: {}]
  %s2 = inlined_call_operand.hbm [shape: f32[1,896], index: 2, kind: input, shape index: {}]
  %s3 = inlined_call_operand.hbm [shape: bf16[896,256], index: 3, kind: input, shape index: {}]
  %s4 = inlined_call_operand.hbm [shape: f32[1,256], index: 4, kind: input, shape index: {}]
  %s5 = inlined_call_operand.hbm [shape: bf16[256,128], index: 5, kind: input, shape index: {}]
  %s6 = inlined_call_operand.hbm [shape: f32[1,128], index: 6, kind: input, shape index: {}]
  %s7 = inlined_call_operand.hbm [shape: f32[8,128], index: 7, kind: output, shape index: {}]
  %s8 = sld [smem:[#allocation0]]
  $region66: #{tpu_custom_call.1} parent=0
    _
  %s10 = ssub.s32 1, %s8
  %s11 = scalar_select 0, %s10, %s8
  $region1: #{tpu_custom_call.1} parent=0
    #allocation2 [shape = 'u8[14336]{0}', space=vmem, size = 0x3800, scoped, tag = 'input window, operand 0, single buffered']
    #allocation3 [shape = 's32[1]{0}', space=sflag, size = 0x4, scoped, tag = 'scoped memory for tpu_custom_call.1']
    #allocation4 [shape = 's32[1]{0}', space=sflag, size = 0x4, scoped, tag = 'scoped memory for tpu_custom_call.1']
    #allocation5 [shape = 'u8[1605632]{0}', space=vmem, size = 0x188000, scoped, tag = 'input window, operand 1, single buffered']
    #allocation6 [shape = 's32[1]{0}', space=sflag, size = 0x4, scoped, tag = 'scoped memory for tpu_custom_call.1']
    #allocation7 [shape = 'u8[3584]{0}', space=vmem, size = 0x1000, scoped, tag = 'input window, operand 2, single buffered']
    #allocation8 [shape = 'u8[458752]{0}', space=vmem, size = 0x70000, scoped, tag = 'input window, operand 3, single buffered']
    #allocation9 [shape = 's32[1]{0}', space=sflag, size = 0x4, scoped, tag = 'scoped memory for tpu_custom_call.1']
    #allocation10 [shape = 'u8[1024]{0}', space=vmem, size = 0x400, scoped, tag = 'input window, operand 4, single buffered']
    #allocation11 [shape = 'u8[65536]{0}', space=vmem, size = 0x10000, scoped, tag = 'input window, operand 5, single buffered']
    #allocation12 [shape = 's32[1]{0}', space=sflag, size = 0x4, scoped, tag = 'scoped memory for tpu_custom_call.1']
    #allocation13 [shape = 'u8[512]{0}', space=vmem, size = 0x400, scoped, tag = 'input window, operand 6, single buffered']
    #allocation14 [shape = 'u8[4096]{0}', space=vmem, size = 0x1000, scoped, tag = 'output window, operand 0, single buffered']
    %12 = vsyncpa [#allocation3], 0
    %13 = vsyncpa [#allocation6], 0
    %14 = vsyncpa [#allocation9], 0
    %15 = vsyncpa [#allocation12], 0
    %16 = vsyncpa [#allocation4], 0
    // Predicated region
    $region2: #{tpu_custom_call.1} parent=1 // pred_check
      _
    $region3: #{tpu_custom_call.1} parent=1 // pred_check_branch
      %18 = sbr.rel (0) target = $region5
    $region4: #{tpu_custom_call.1} parent=1 // pred_region
      %s20 = ssub.s32 448, 448
      %21 = vsyncadd [#allocation3], %s20
      %s23 = sshll.u32 [#allocation2], 4
      %s24 = int_to_ptr.vmem [resolvable:$true] %s23
      %26 = dma.hbm_to_vmem [thread:$0]  %s0, 448, %s24, [#allocation3]
    $region5: #{tpu_custom_call.1} parent=1 // pred_fallthru
      _
    // Predicated region
    $region6: #{tpu_custom_call.1} parent=1 // pred_check
      _
    $region7: #{tpu_custom_call.1} parent=1 // pred_check_branch
      %28 = sbr.rel (0) target = $region9
    $region8: #{tpu_custom_call.1} parent=1 // pred_region
      %s30 = ssub.s32 50176, 50176
      %31 = vsyncadd [#allocation6], %s30
      %s32 = sshll.u32 [#allocation5], 4
      %s33 = int_to_ptr.vmem [resolvable:$true] %s32
      %38 = dma.hbm_to_vmem [thread:$0]  %s1, 50176, %s33, [#allocation6], 448, 448, 28
    $region9: #{tpu_custom_call.1} parent=1 // pred_fallthru
      _
    // Predicated region
    $region10: #{tpu_custom_call.1} parent=1 // pred_check
      _
    $region11: #{tpu_custom_call.1} parent=1 // pred_check_branch
      %40 = sbr.rel (0) target = $region13
    $region12: #{tpu_custom_call.1} parent=1 // pred_region
      %s42 = ssub.s32 112, 112
      %43 = vsyncadd [#allocation6], %s42
      %s45 = sshll.u32 [#allocation7], 4
      %s46 = int_to_ptr.vmem [resolvable:$true] %s45
      %48 = dma.hbm_to_vmem [thread:$0]  %s2, 112, %s46, [#allocation6]
    $region13: #{tpu_custom_call.1} parent=1 // pred_fallthru
      _
    // Predicated region
    $region14: #{tpu_custom_call.1} parent=1 // pred_check
      _
    $region15: #{tpu_custom_call.1} parent=1 // pred_check_branch
      %50 = sbr.rel (0) target = $region17
    $region16: #{tpu_custom_call.1} parent=1 // pred_region
      %s52 = ssub.s32 14336, 14336
      %53 = vsyncadd [#allocation9], %s52
      %s54 = sshll.u32 [#allocation8], 4
      %s55 = int_to_ptr.vmem [resolvable:$true] %s54
      %60 = dma.hbm_to_vmem [thread:$0]  %s3, 14336, %s55, [#allocation9], 128, 128, 8
    $region17: #{tpu_custom_call.1} parent=1 // pred_fallthru
      _
    // Predicated region
    $region18: #{tpu_custom_call.1} parent=1 // pred_check
      _
    $region19: #{tpu_custom_call.1} parent=1 // pred_check_branch
      %62 = sbr.rel (0) target = $region21
    $region20: #{tpu_custom_call.1} parent=1 // pred_region
      %s64 = ssub.s32 32, 32
      %65 = vsyncadd [#allocation9], %s64
      %s67 = sshll.u32 [#allocation10], 4
      %s68 = int_to_ptr.vmem [resolvable:$true] %s67
      %70 = dma.hbm_to_vmem [thread:$0]  %s4, 32, %s68, [#allocation9]
    $region21: #{tpu_custom_call.1} parent=1 // pred_fallthru
      _
    // Predicated region
    $region22: #{tpu_custom_call.1} parent=1 // pred_check
      _
    $region23: #{tpu_custom_call.1} parent=1 // pred_check_branch
      %72 = sbr.rel (0) target = $region25
    $region24: #{tpu_custom_call.1} parent=1 // pred_region
      %s74 = ssub.s32 2048, 2048
      %75 = vsyncadd [#allocation12], %s74
      %s76 = sshll.u32 [#allocation11], 4
      %s77 = int_to_ptr.vmem [resolvable:$true] %s76
      %82 = dma.hbm_to_vmem [thread:$0]  %s5, 2048, %s77, [#allocation12], 64, 64, 4
    $region25: #{tpu_custom_call.1} parent=1 // pred_fallthru
      _
    // Predicated region
    $region26: #{tpu_custom_call.1} parent=1 // pred_check
      _
    $region27: #{tpu_custom_call.1} parent=1 // pred_check_branch
      %84 = sbr.rel (0) target = $region29
    $region28: #{tpu_custom_call.1} parent=1 // pred_region
      %s86 = ssub.s32 16, 16
      %87 = vsyncadd [#allocation12], %s86
      %s89 = sshll.u32 [#allocation13], 4
      %s90 = int_to_ptr.vmem [resolvable:$true] %s89
      %92 = dma.hbm_to_vmem [thread:$0]  %s6, 16, %s90, [#allocation12]
    $region29: #{tpu_custom_call.1} parent=1 // pred_fallthru
      _
    // Predicated region
    $region30: #{tpu_custom_call.1} parent=1 // pred_check
      _
    $region31: #{tpu_custom_call.1} parent=1 // pred_check_branch
      %94 = sbr.rel (0) target = $region33
    $region32: #{tpu_custom_call.1} parent=1 // pred_region
      %95 = dma.done [#allocation3], 448
    $region33: #{tpu_custom_call.1} parent=1 // pred_fallthru
      _
    // Predicated region
    $region34: #{tpu_custom_call.1} parent=1 // pred_check
      _
    $region35: #{tpu_custom_call.1} parent=1 // pred_check_branch
      %97 = sbr.rel (0) target = $region37
    $region36: #{tpu_custom_call.1} parent=1 // pred_region
      %98 = dma.done [#allocation6], 50176
    $region37: #{tpu_custom_call.1} parent=1 // pred_fallthru
      _
    // Predicated region
    $region38: #{tpu_custom_call.1} parent=1 // pred_check
      _
    $region39: #{tpu_custom_call.1} parent=1 // pred_check_branch
      %100 = sbr.rel (0) target = $region41
    $region40: #{tpu_custom_call.1} parent=1 // pred_region
      %101 = dma.done [#allocation6], 112
    $region41: #{tpu_custom_call.1} parent=1 // pred_fallthru
      _
    // Predicated region
    $region42: #{tpu_custom_call.1} parent=1 // pred_check
      _
    $region43: #{tpu_custom_call.1} parent=1 // pred_check_branch
      %103 = sbr.rel (0) target = $region45
    $region44: #{tpu_custom_call.1} parent=1 // pred_region
      %104 = dma.done [#allocation9], 14336
    $region45: #{tpu_custom_call.1} parent=1 // pred_fallthru
      _
    // Predicated region
    $region46: #{tpu_custom_call.1} parent=1 // pred_check
      _
    $region47: #{tpu_custom_call.1} parent=1 // pred_check_branch
      %106 = sbr.rel (0) target = $region49
    $region48: #{tpu_custom_call.1} parent=1 // pred_region
      %107 = dma.done [#allocation9], 32
    $region49: #{tpu_custom_call.1} parent=1 // pred_fallthru
      _
    // Predicated region
    $region50: #{tpu_custom_call.1} parent=1 // pred_check
      _
    $region51: #{tpu_custom_call.1} parent=1 // pred_check_branch
      %109 = sbr.rel (0) target = $region53
    $region52: #{tpu_custom_call.1} parent=1 // pred_region
      %110 = dma.done [#allocation12], 2048
    $region53: #{tpu_custom_call.1} parent=1 // pred_fallthru
      _
    // Predicated region
    $region54: #{tpu_custom_call.1} parent=1 // pred_check
      _
    $region55: #{tpu_custom_call.1} parent=1 // pred_check_branch
      %112 = sbr.rel (0) target = $region57
    $region56: #{tpu_custom_call.1} parent=1 // pred_region
      %113 = dma.done [#allocation12], 16
    $region57: #{tpu_custom_call.1} parent=1 // pred_fallthru
      _
    %v115 = vld [vmem:[#allocation2] sm:$0xff]
    %v116 = vld [vmem:[#allocation2 + $0x8] sm:$0xff]
    %v117 = vld [vmem:[#allocation2 + $0x10] sm:$0xff]
    %v118 = vld [vmem:[#allocation2 + $0x18] sm:$0xf]
    %v119 = vld [vmem:[#allocation5] sm:$0xff]
    %v120 = vld [vmem:[#allocation5 + $0x8] sm:$0xff]
    %v121 = vld [vmem:[#allocation5 + $0x10] sm:$0xff]
    %v122 = vld [vmem:[#allocation5 + $0x18] sm:$0xf]
    %v123 = vld [vmem:[#allocation5 + $0x1c] sm:$0xff]
    %v124 = vld [vmem:[#allocation5 + $0x24] sm:$0xff]
    %v125 = vld [vmem:[#allocation5 + $0x2c] sm:$0xff]
    %v126 = vld [vmem:[#allocation5 + $0x34] sm:$0xf]
    %v127 = vld [vmem:[#allocation5 + $0x38] sm:$0xff]
    %v128 = vld [vmem:[#allocation5 + $0x40] sm:$0xff]
    %v129 = vld [vmem:[#allocation5 + $0x48] sm:$0xff]
    %v130 = vld [vmem:[#allocation5 + $0x50] sm:$0xf]
    %v131 = vld [vmem:[#allocation5 + $0x54] sm:$0xff]
    %v132 = vld [vmem:[#allocation5 + $0x5c] sm:$0xff]
    %v133 = vld [vmem:[#allocation5 + $0x64] sm:$0xff]
    %v134 = vld [vmem:[#allocation5 + $0x6c] sm:$0xf]
    %v135 = vld [vmem:[#allocation5 + $0x70] sm:$0xff]
    %v136 = vld [vmem:[#allocation5 + $0x78] sm:$0xff]
    %v137 = vld [vmem:[#allocation5 + $0x80] sm:$0xff]
    %v138 = vld [vmem:[#allocation5 + $0x88] sm:$0xf]
    %v139 = vld [vmem:[#allocation5 + $0x8c] sm:$0xff]
    %v140 = vld [vmem:[#allocation5 + $0x94] sm:$0xff]
    %v141 = vld [vmem:[#allocation5 + $0x9c] sm:$0xff]
    %v142 = vld [vmem:[#allocation5 + $0xa4] sm:$0xf]
    %v143 = vld [vmem:[#allocation5 + $0xa8] sm:$0xff]
    %v144 = vld [vmem:[#allocation5 + $0xb0] sm:$0xff]
    %v145 = vld [vmem:[#allocation5 + $0xb8] sm:$0xff]
    %v146 = vld [vmem:[#allocation5 + $0xc0] sm:$0xf]
    %v147 = vld [vmem:[#allocation5 + $0xc4] sm:$0xff]
    %v148 = vld [vmem:[#allocation5 + $0xcc] sm:$0xff]
    %v149 = vld [vmem:[#allocation5 + $0xd4] sm:$0xff]
    %v150 = vld [vmem:[#allocation5 + $0xdc] sm:$0xf]
    %v151 = vld [vmem:[#allocation5 + $0xe0] sm:$0xff]
    %v152 = vld [vmem:[#allocation5 + $0xe8] sm:$0xff]
    %v153 = vld [vmem:[#allocation5 + $0xf0] sm:$0xff]
    %v154 = vld [vmem:[#allocation5 + $0xf8] sm:$0xf]
    %v155 = vld [vmem:[#allocation5 + $0xfc] sm:$0xff]
    %v156 = vld [vmem:[#allocation5 + $0x104] sm:$0xff]
    %v157 = vld [vmem:[#allocation5 + $0x10c] sm:$0xff]
    %v158 = vld [vmem:[#allocation5 + $0x114] sm:$0xf]
    %v159 = vld [vmem:[#allocation5 + $0x118] sm:$0xff]
    %v160 = vld [vmem:[#allocation5 + $0x120] sm:$0xff]
    %v161 = vld [vmem:[#allocation5 + $0x128] sm:$0xff]
    %v162 = vld [vmem:[#allocation5 + $0x130] sm:$0xf]
    %v163 = vld [vmem:[#allocation5 + $0x134] sm:$0xff]
    %v164 = vld [vmem:[#allocation5 + $0x13c] sm:$0xff]
    %v165 = vld [vmem:[#allocation5 + $0x144] sm:$0xff]
    %v166 = vld [vmem:[#allocation5 + $0x14c] sm:$0xf]
    %v167 = vld [vmem:[#allocation5 + $0x150] sm:$0xff]
    %v168 = vld [vmem:[#allocation5 + $0x158] sm:$0xff]
    %v169 = vld [vmem:[#allocation5 + $0x160] sm:$0xff]
    %v170 = vld [vmem:[#allocation5 + $0x168] sm:$0xf]
    %v171 = vld [vmem:[#allocation5 + $0x16c] sm:$0xff]
    %v172 = vld [vmem:[#allocation5 + $0x174] sm:$0xff]
    %v173 = vld [vmem:[#allocation5 + $0x17c] sm:$0xff]
    %v174 = vld [vmem:[#allocation5 + $0x184] sm:$0xf]
    %v175 = vld [vmem:[#allocation5 + $0x188] sm:$0xff]
    %v176 = vld [vmem:[#allocation5 + $0x190] sm:$0xff]
    %v177 = vld [vmem:[#allocation5 + $0x198] sm:$0xff]
    %v178 = vld [vmem:[#allocation5 + $0x1a0] sm:$0xf]
    %v179 = vld [vmem:[#allocation5 + $0x1a4] sm:$0xff]
    %v180 = vld [vmem:[#allocation5 + $0x1ac] sm:$0xff]
    %v181 = vld [vmem:[#allocation5 + $0x1b4] sm:$0xff]
    %v182 = vld [vmem:[#allocation5 + $0x1bc] sm:$0xf]
    %v183 = vld [vmem:[#allocation5 + $0x1c0] sm:$0xff]
    %v184 = vld [vmem:[#allocation5 + $0x1c8] sm:$0xff]
    %v185 = vld [vmem:[#allocation5 + $0x1d0] sm:$0xff]
    %v186 = vld [vmem:[#allocation5 + $0x1d8] sm:$0xf]
    %v187 = vld [vmem:[#allocation5 + $0x1dc] sm:$0xff]
    %v188 = vld [vmem:[#allocation5 + $0x1e4] sm:$0xff]
    %v189 = vld [vmem:[#allocation5 + $0x1ec] sm:$0xff]
    %v190 = vld [vmem:[#allocation5 + $0x1f4] sm:$0xf]
    %v191 = vld [vmem:[#allocation5 + $0x1f8] sm:$0xff]
    %v192 = vld [vmem:[#allocation5 + $0x200] sm:$0xff]
    %v193 = vld [vmem:[#allocation5 + $0x208] sm:$0xff]
    %v194 = vld [vmem:[#allocation5 + $0x210] sm:$0xf]
    %v195 = vld [vmem:[#allocation5 + $0x214] sm:$0xff]
    %v196 = vld [vmem:[#allocation5 + $0x21c] sm:$0xff]
    %v197 = vld [vmem:[#allocation5 + $0x224] sm:$0xff]
    %v198 = vld [vmem:[#allocation5 + $0x22c] sm:$0xf]
    %v199 = vld [vmem:[#allocation5 + $0x230] sm:$0xff]
    %v200 = vld [vmem:[#allocation5 + $0x238] sm:$0xff]
    %v201 = vld [vmem:[#allocation5 + $0x240] sm:$0xff]
    %v202 = vld [vmem:[#allocation5 + $0x248] sm:$0xf]
    %v203 = vld [vmem:[#allocation5 + $0x24c] sm:$0xff]
    %v204 = vld [vmem:[#allocation5 + $0x254] sm:$0xff]
    %v205 = vld [vmem:[#allocation5 + $0x25c] sm:$0xff]
    %v206 = vld [vmem:[#allocation5 + $0x264] sm:$0xf]
    %v207 = vld [vmem:[#allocation5 + $0x268] sm:$0xff]
    %v208 = vld [vmem:[#allocation5 + $0x270] sm:$0xff]
    %v209 = vld [vmem:[#allocation5 + $0x278] sm:$0xff]
    %v210 = vld [vmem:[#allocation5 + $0x280] sm:$0xf]
    %v211 = vld [vmem:[#allocation5 + $0x284] sm:$0xff]
    %v212 = vld [vmem:[#allocation5 + $0x28c] sm:$0xff]
    %v213 = vld [vmem:[#allocation5 + $0x294] sm:$0xff]
    %v214 = vld [vmem:[#allocation5 + $0x29c] sm:$0xf]
    %v215 = vld [vmem:[#allocation5 + $0x2a0] sm:$0xff]
    %v216 = vld [vmem:[#allocation5 + $0x2a8] sm:$0xff]
    %v217 = vld [vmem:[#allocation5 + $0x2b0] sm:$0xff]
    %v218 = vld [vmem:[#allocation5 + $0x2b8] sm:$0xf]
    %v219 = vld [vmem:[#allocation5 + $0x2bc] sm:$0xff]
    %v220 = vld [vmem:[#allocation5 + $0x2c4] sm:$0xff]
    %v221 = vld [vmem:[#allocation5 + $0x2cc] sm:$0xff]
    %v222 = vld [vmem:[#allocation5 + $0x2d4] sm:$0xf]
    %v223 = vld [vmem:[#allocation5 + $0x2d8] sm:$0xff]
    %v224 = vld [vmem:[#allocation5 + $0x2e0] sm:$0xff]
    %v225 = vld [vmem:[#allocation5 + $0x2e8] sm:$0xff]
    %v226 = vld [vmem:[#allocation5 + $0x2f0] sm:$0xf]
    %v227 = vld [vmem:[#allocation5 + $0x2f4] sm:$0xff]
    %v228 = vld [vmem:[#allocation5 + $0x2fc] sm:$0xff]
    %v229 = vld [vmem:[#allocation5 + $0x304] sm:$0xff]
    %v230 = vld [vmem:[#allocation5 + $0x30c] sm:$0xf]
    %v231 = vld [vmem:[#allocation5 + $0x310] sm:$0xff]
    %v232 = vld [vmem:[#allocation5 + $0x318] sm:$0xff]
    %v233 = vld [vmem:[#allocation5 + $0x320] sm:$0xff]
    %v234 = vld [vmem:[#allocation5 + $0x328] sm:$0xf]
    %v235 = vld [vmem:[#allocation5 + $0x32c] sm:$0xff]
    %v236 = vld [vmem:[#allocation5 + $0x334] sm:$0xff]
    %v237 = vld [vmem:[#allocation5 + $0x33c] sm:$0xff]
    %v238 = vld [vmem:[#allocation5 + $0x344] sm:$0xf]
    %v239 = vld [vmem:[#allocation5 + $0x348] sm:$0xff]
    %v240 = vld [vmem:[#allocation5 + $0x350] sm:$0xff]
    %v241 = vld [vmem:[#allocation5 + $0x358] sm:$0xff]
    %v242 = vld [vmem:[#allocation5 + $0x360] sm:$0xf]
    %v243 = vld [vmem:[#allocation5 + $0x364] sm:$0xff]
    %v244 = vld [vmem:[#allocation5 + $0x36c] sm:$0xff]
    %v245 = vld [vmem:[#allocation5 + $0x374] sm:$0xff]
    %v246 = vld [vmem:[#allocation5 + $0x37c] sm:$0xf]
    %v247 = vld [vmem:[#allocation5 + $0x380] sm:$0xff]
    %v248 = vld [vmem:[#allocation5 + $0x388] sm:$0xff]
    %v249 = vld [vmem:[#allocation5 + $0x390] sm:$0xff]
    %v250 = vld [vmem:[#allocation5 + $0x398] sm:$0xf]
    %v251 = vld [vmem:[#allocation5 + $0x39c] sm:$0xff]
    %v252 = vld [vmem:[#allocation5 + $0x3a4] sm:$0xff]
    %v253 = vld [vmem:[#allocation5 + $0x3ac] sm:$0xff]
    %v254 = vld [vmem:[#allocation5 + $0x3b4] sm:$0xf]
    %v255 = vld [vmem:[#allocation5 + $0x3b8] sm:$0xff]
    %v256 = vld [vmem:[#allocation5 + $0x3c0] sm:$0xff]
    %v257 = vld [vmem:[#allocation5 + $0x3c8] sm:$0xff]
    %v258 = vld [vmem:[#allocation5 + $0x3d0] sm:$0xf]
    %v259 = vld [vmem:[#allocation5 + $0x3d4] sm:$0xff]
    %v260 = vld [vmem:[#allocation5 + $0x3dc] sm:$0xff]
    %v261 = vld [vmem:[#allocation5 + $0x3e4] sm:$0xff]
    %v262 = vld [vmem:[#allocation5 + $0x3ec] sm:$0xf]
    %v263 = vld [vmem:[#allocation5 + $0x3f0] sm:$0xff]
    %v264 = vld [vmem:[#allocation5 + $0x3f8] sm:$0xff]
    %v265 = vld [vmem:[#allocation5 + $0x400] sm:$0xff]
    %v266 = vld [vmem:[#allocation5 + $0x408] sm:$0xf]
    %v267 = vld [vmem:[#allocation5 + $0x40c] sm:$0xff]
    %v268 = vld [vmem:[#allocation5 + $0x414] sm:$0xff]
    %v269 = vld [vmem:[#allocation5 + $0x41c] sm:$0xff]
    %v270 = vld [vmem:[#allocation5 + $0x424] sm:$0xf]
    %v271 = vld [vmem:[#allocation5 + $0x428] sm:$0xff]
    %v272 = vld [vmem:[#allocation5 + $0x430] sm:$0xff]
    %v273 = vld [vmem:[#allocation5 + $0x438] sm:$0xff]
    %v274 = vld [vmem:[#allocation5 + $0x440] sm:$0xf]
    %v275 = vld [vmem:[#allocation5 + $0x444] sm:$0xff]
    %v276 = vld [vmem:[#allocation5 + $0x44c] sm:$0xff]
    %v277 = vld [vmem:[#allocation5 + $0x454] sm:$0xff]
    %v278 = vld [vmem:[#allocation5 + $0x45c] sm:$0xf]
    %v279 = vld [vmem:[#allocation5 + $0x460] sm:$0xff]
    %v280 = vld [vmem:[#allocation5 + $0x468] sm:$0xff]
    %v281 = vld [vmem:[#allocation5 + $0x470] sm:$0xff]
    %v282 = vld [vmem:[#allocation5 + $0x478] sm:$0xf]
    %v283 = vld [vmem:[#allocation5 + $0x47c] sm:$0xff]
    %v284 = vld [vmem:[#allocation5 + $0x484] sm:$0xff]
    %v285 = vld [vmem:[#allocation5 + $0x48c] sm:$0xff]
    %v286 = vld [vmem:[#allocation5 + $0x494] sm:$0xf]
    %v287 = vld [vmem:[#allocation5 + $0x498] sm:$0xff]
    %v288 = vld [vmem:[#allocation5 + $0x4a0] sm:$0xff]
    %v289 = vld [vmem:[#allocation5 + $0x4a8] sm:$0xff]
    %v290 = vld [vmem:[#allocation5 + $0x4b0] sm:$0xf]
    %v291 = vld [vmem:[#allocation5 + $0x4b4] sm:$0xff]
    %v292 = vld [vmem:[#allocation5 + $0x4bc] sm:$0xff]
    %v293 = vld [vmem:[#allocation5 + $0x4c4] sm:$0xff]
    %v294 = vld [vmem:[#allocation5 + $0x4cc] sm:$0xf]
    %v295 = vld [vmem:[#allocation5 + $0x4d0] sm:$0xff]
    %v296 = vld [vmem:[#allocation5 + $0x4d8] sm:$0xff]
    %v297 = vld [vmem:[#allocation5 + $0x4e0] sm:$0xff]
    %v298 = vld [vmem:[#allocation5 + $0x4e8] sm:$0xf]
    %v299 = vld [vmem:[#allocation5 + $0x4ec] sm:$0xff]
    %v300 = vld [vmem:[#allocation5 + $0x4f4] sm:$0xff]
    %v301 = vld [vmem:[#allocation5 + $0x4fc] sm:$0xff]
    %v302 = vld [vmem:[#allocation5 + $0x504] sm:$0xf]
    %v303 = vld [vmem:[#allocation5 + $0x508] sm:$0xff]
    %v304 = vld [vmem:[#allocation5 + $0x510] sm:$0xff]
    %v305 = vld [vmem:[#allocation5 + $0x518] sm:$0xff]
    %v306 = vld [vmem:[#allocation5 + $0x520] sm:$0xf]
    %v307 = vld [vmem:[#allocation5 + $0x524] sm:$0xff]
    %v308 = vld [vmem:[#allocation5 + $0x52c] sm:$0xff]
    %v309 = vld [vmem:[#allocation5 + $0x534] sm:$0xff]
    %v310 = vld [vmem:[#allocation5 + $0x53c] sm:$0xf]
    %v311 = vld [vmem:[#allocation5 + $0x540] sm:$0xff]
    %v312 = vld [vmem:[#allocation5 + $0x548] sm:$0xff]
    %v313 = vld [vmem:[#allocation5 + $0x550] sm:$0xff]
    %v314 = vld [vmem:[#allocation5 + $0x558] sm:$0xf]
    %v315 = vld [vmem:[#allocation5 + $0x55c] sm:$0xff]
    %v316 = vld [vmem:[#allocation5 + $0x564] sm:$0xff]
    %v317 = vld [vmem:[#allocation5 + $0x56c] sm:$0xff]
    %v318 = vld [vmem:[#allocation5 + $0x574] sm:$0xf]
    %v319 = vld [vmem:[#allocation5 + $0x578] sm:$0xff]
    %v320 = vld [vmem:[#allocation5 + $0x580] sm:$0xff]
    %v321 = vld [vmem:[#allocation5 + $0x588] sm:$0xff]
    %v322 = vld [vmem:[#allocation5 + $0x590] sm:$0xf]
    %v323 = vld [vmem:[#allocation5 + $0x594] sm:$0xff]
    %v324 = vld [vmem:[#allocation5 + $0x59c] sm:$0xff]
    %v325 = vld [vmem:[#allocation5 + $0x5a4] sm:$0xff]
    %v326 = vld [vmem:[#allocation5 + $0x5ac] sm:$0xf]
    %v327 = vld [vmem:[#allocation5 + $0x5b0] sm:$0xff]
    %v328 = vld [vmem:[#allocation5 + $0x5b8] sm:$0xff]
    %v329 = vld [vmem:[#allocation5 + $0x5c0] sm:$0xff]
    %v330 = vld [vmem:[#allocation5 + $0x5c8] sm:$0xf]
    %v331 = vld [vmem:[#allocation5 + $0x5cc] sm:$0xff]
    %v332 = vld [vmem:[#allocation5 + $0x5d4] sm:$0xff]
    %v333 = vld [vmem:[#allocation5 + $0x5dc] sm:$0xff]
    %v334 = vld [vmem:[#allocation5 + $0x5e4] sm:$0xf]
    %v335 = vld [vmem:[#allocation5 + $0x5e8] sm:$0xff]
    %v336 = vld [vmem:[#allocation5 + $0x5f0] sm:$0xff]
    %v337 = vld [vmem:[#allocation5 + $0x5f8] sm:$0xff]
    %v338 = vld [vmem:[#allocation5 + $0x600] sm:$0xf]
    %v339 = vld [vmem:[#allocation5 + $0x604] sm:$0xff]
    %v340 = vld [vmem:[#allocation5 + $0x60c] sm:$0xff]
    %v341 = vld [vmem:[#allocation5 + $0x614] sm:$0xff]
    %v342 = vld [vmem:[#allocation5 + $0x61c] sm:$0xf]
    %v343 = vld [vmem:[#allocation5 + $0x620] sm:$0xff]
    %v344 = vld [vmem:[#allocation5 + $0x628] sm:$0xff]
    %v345 = vld [vmem:[#allocation5 + $0x630] sm:$0xff]
    %v346 = vld [vmem:[#allocation5 + $0x638] sm:$0xf]
    %v347 = vld [vmem:[#allocation5 + $0x63c] sm:$0xff]
    %v348 = vld [vmem:[#allocation5 + $0x644] sm:$0xff]
    %v349 = vld [vmem:[#allocation5 + $0x64c] sm:$0xff]
    %v350 = vld [vmem:[#allocation5 + $0x654] sm:$0xf]
    %v351 = vld [vmem:[#allocation5 + $0x658] sm:$0xff]
    %v352 = vld [vmem:[#allocation5 + $0x660] sm:$0xff]
    %v353 = vld [vmem:[#allocation5 + $0x668] sm:$0xff]
    %v354 = vld [vmem:[#allocation5 + $0x670] sm:$0xf]
    %v355 = vld [vmem:[#allocation5 + $0x674] sm:$0xff]
    %v356 = vld [vmem:[#allocation5 + $0x67c] sm:$0xff]
    %v357 = vld [vmem:[#allocation5 + $0x684] sm:$0xff]
    %v358 = vld [vmem:[#allocation5 + $0x68c] sm:$0xf]
    %v359 = vld [vmem:[#allocation5 + $0x690] sm:$0xff]
    %v360 = vld [vmem:[#allocation5 + $0x698] sm:$0xff]
    %v361 = vld [vmem:[#allocation5 + $0x6a0] sm:$0xff]
    %v362 = vld [vmem:[#allocation5 + $0x6a8] sm:$0xf]
    %v363 = vld [vmem:[#allocation5 + $0x6ac] sm:$0xff]
    %v364 = vld [vmem:[#allocation5 + $0x6b4] sm:$0xff]
    %v365 = vld [vmem:[#allocation5 + $0x6bc] sm:$0xff]
    %v366 = vld [vmem:[#allocation5 + $0x6c4] sm:$0xf]
    %v367 = vld [vmem:[#allocation5 + $0x6c8] sm:$0xff]
    %v368 = vld [vmem:[#allocation5 + $0x6d0] sm:$0xff]
    %v369 = vld [vmem:[#allocation5 + $0x6d8] sm:$0xff]
    %v370 = vld [vmem:[#allocation5 + $0x6e0] sm:$0xf]
    %v371 = vld [vmem:[#allocation5 + $0x6e4] sm:$0xff]
    %v372 = vld [vmem:[#allocation5 + $0x6ec] sm:$0xff]
    %v373 = vld [vmem:[#allocation5 + $0x6f4] sm:$0xff]
    %v374 = vld [vmem:[#allocation5 + $0x6fc] sm:$0xf]
    %v375 = vld [vmem:[#allocation5 + $0x700] sm:$0xff]
    %v376 = vld [vmem:[#allocation5 + $0x708] sm:$0xff]
    %v377 = vld [vmem:[#allocation5 + $0x710] sm:$0xff]
    %v378 = vld [vmem:[#allocation5 + $0x718] sm:$0xf]
    %v379 = vld [vmem:[#allocation5 + $0x71c] sm:$0xff]
    %v380 = vld [vmem:[#allocation5 + $0x724] sm:$0xff]
    %v381 = vld [vmem:[#allocation5 + $0x72c] sm:$0xff]
    %v382 = vld [vmem:[#allocation5 + $0x734] sm:$0xf]
    %v383 = vld [vmem:[#allocation5 + $0x738] sm:$0xff]
    %v384 = vld [vmem:[#allocation5 + $0x740] sm:$0xff]
    %v385 = vld [vmem:[#allocation5 + $0x748] sm:$0xff]
    %v386 = vld [vmem:[#allocation5 + $0x750] sm:$0xf]
    %v387 = vld [vmem:[#allocation5 + $0x754] sm:$0xff]
    %v388 = vld [vmem:[#allocation5 + $0x75c] sm:$0xff]
    %v389 = vld [vmem:[#allocation5 + $0x764] sm:$0xff]
    %v390 = vld [vmem:[#allocation5 + $0x76c] sm:$0xf]
    %v391 = vld [vmem:[#allocation5 + $0x770] sm:$0xff]
    %v392 = vld [vmem:[#allocation5 + $0x778] sm:$0xff]
    %v393 = vld [vmem:[#allocation5 + $0x780] sm:$0xff]
    %v394 = vld [vmem:[#allocation5 + $0x788] sm:$0xf]
    %v395 = vld [vmem:[#allocation5 + $0x78c] sm:$0xff]
    %v396 = vld [vmem:[#allocation5 + $0x794] sm:$0xff]
    %v397 = vld [vmem:[#allocation5 + $0x79c] sm:$0xff]
    %v398 = vld [vmem:[#allocation5 + $0x7a4] sm:$0xf]
    %v399 = vld [vmem:[#allocation5 + $0x7a8] sm:$0xff]
    %v400 = vld [vmem:[#allocation5 + $0x7b0] sm:$0xff]
    %v401 = vld [vmem:[#allocation5 + $0x7b8] sm:$0xff]
    %v402 = vld [vmem:[#allocation5 + $0x7c0] sm:$0xf]
    %v403 = vld [vmem:[#allocation5 + $0x7c4] sm:$0xff]
    %v404 = vld [vmem:[#allocation5 + $0x7cc] sm:$0xff]
    %v405 = vld [vmem:[#allocation5 + $0x7d4] sm:$0xff]
    %v406 = vld [vmem:[#allocation5 + $0x7dc] sm:$0xf]
    %v407 = vld [vmem:[#allocation5 + $0x7e0] sm:$0xff]
    %v408 = vld [vmem:[#allocation5 + $0x7e8] sm:$0xff]
    %v409 = vld [vmem:[#allocation5 + $0x7f0] sm:$0xff]
    %v410 = vld [vmem:[#allocation5 + $0x7f8] sm:$0xf]
    %v411 = vld [vmem:[#allocation5 + $0x7fc] sm:$0xff]
    %v412 = vld [vmem:[#allocation5 + $0x804] sm:$0xff]
    %v413 = vld [vmem:[#allocation5 + $0x80c] sm:$0xff]
    %v414 = vld [vmem:[#allocation5 + $0x814] sm:$0xf]
    %v415 = vld [vmem:[#allocation5 + $0x818] sm:$0xff]
    %v416 = vld [vmem:[#allocation5 + $0x820] sm:$0xff]
    %v417 = vld [vmem:[#allocation5 + $0x828] sm:$0xff]
    %v418 = vld [vmem:[#allocation5 + $0x830] sm:$0xf]
    %v419 = vld [vmem:[#allocation5 + $0x834] sm:$0xff]
    %v420 = vld [vmem:[#allocation5 + $0x83c] sm:$0xff]
    %v421 = vld [vmem:[#allocation5 + $0x844] sm:$0xff]
    %v422 = vld [vmem:[#allocation5 + $0x84c] sm:$0xf]
    %v423 = vld [vmem:[#allocation5 + $0x850] sm:$0xff]
    %v424 = vld [vmem:[#allocation5 + $0x858] sm:$0xff]
    %v425 = vld [vmem:[#allocation5 + $0x860] sm:$0xff]
    %v426 = vld [vmem:[#allocation5 + $0x868] sm:$0xf]
    %v427 = vld [vmem:[#allocation5 + $0x86c] sm:$0xff]
    %v428 = vld [vmem:[#allocation5 + $0x874] sm:$0xff]
    %v429 = vld [vmem:[#allocation5 + $0x87c] sm:$0xff]
    %v430 = vld [vmem:[#allocation5 + $0x884] sm:$0xf]
    %v431 = vld [vmem:[#allocation5 + $0x888] sm:$0xff]
    %v432 = vld [vmem:[#allocation5 + $0x890] sm:$0xff]
    %v433 = vld [vmem:[#allocation5 + $0x898] sm:$0xff]
    %v434 = vld [vmem:[#allocation5 + $0x8a0] sm:$0xf]
    %v435 = vld [vmem:[#allocation5 + $0x8a4] sm:$0xff]
    %v436 = vld [vmem:[#allocation5 + $0x8ac] sm:$0xff]
    %v437 = vld [vmem:[#allocation5 + $0x8b4] sm:$0xff]
    %v438 = vld [vmem:[#allocation5 + $0x8bc] sm:$0xf]
    %v439 = vld [vmem:[#allocation5 + $0x8c0] sm:$0xff]
    %v440 = vld [vmem:[#allocation5 + $0x8c8] sm:$0xff]
    %v441 = vld [vmem:[#allocation5 + $0x8d0] sm:$0xff]
    %v442 = vld [vmem:[#allocation5 + $0x8d8] sm:$0xf]
    %v443 = vld [vmem:[#allocation5 + $0x8dc] sm:$0xff]
    %v444 = vld [vmem:[#allocation5 + $0x8e4] sm:$0xff]
    %v445 = vld [vmem:[#allocation5 + $0x8ec] sm:$0xff]
    %v446 = vld [vmem:[#allocation5 + $0x8f4] sm:$0xf]
    %v447 = vld [vmem:[#allocation5 + $0x8f8] sm:$0xff]
    %v448 = vld [vmem:[#allocation5 + $0x900] sm:$0xff]
    %v449 = vld [vmem:[#allocation5 + $0x908] sm:$0xff]
    %v450 = vld [vmem:[#allocation5 + $0x910] sm:$0xf]
    %v451 = vld [vmem:[#allocation5 + $0x914] sm:$0xff]
    %v452 = vld [vmem:[#allocation5 + $0x91c] sm:$0xff]
    %v453 = vld [vmem:[#allocation5 + $0x924] sm:$0xff]
    %v454 = vld [vmem:[#allocation5 + $0x92c] sm:$0xf]
    %v455 = vld [vmem:[#allocation5 + $0x930] sm:$0xff]
    %v456 = vld [vmem:[#allocation5 + $0x938] sm:$0xff]
    %v457 = vld [vmem:[#allocation5 + $0x940] sm:$0xff]
    %v458 = vld [vmem:[#allocation5 + $0x948] sm:$0xf]
    %v459 = vld [vmem:[#allocation5 + $0x94c] sm:$0xff]
    %v460 = vld [vmem:[#allocation5 + $0x954] sm:$0xff]
    %v461 = vld [vmem:[#allocation5 + $0x95c] sm:$0xff]
    %v462 = vld [vmem:[#allocation5 + $0x964] sm:$0xf]
    %v463 = vld [vmem:[#allocation5 + $0x968] sm:$0xff]
    %v464 = vld [vmem:[#allocation5 + $0x970] sm:$0xff]
    %v465 = vld [vmem:[#allocation5 + $0x978] sm:$0xff]
    %v466 = vld [vmem:[#allocation5 + $0x980] sm:$0xf]
    %v467 = vld [vmem:[#allocation5 + $0x984] sm:$0xff]
    %v468 = vld [vmem:[#allocation5 + $0x98c] sm:$0xff]
    %v469 = vld [vmem:[#allocation5 + $0x994] sm:$0xff]
    %v470 = vld [vmem:[#allocation5 + $0x99c] sm:$0xf]
    %v471 = vld [vmem:[#allocation5 + $0x9a0] sm:$0xff]
    %v472 = vld [vmem:[#allocation5 + $0x9a8] sm:$0xff]
    %v473 = vld [vmem:[#allocation5 + $0x9b0] sm:$0xff]
    %v474 = vld [vmem:[#allocation5 + $0x9b8] sm:$0xf]
    %v475 = vld [vmem:[#allocation5 + $0x9bc] sm:$0xff]
    %v476 = vld [vmem:[#allocation5 + $0x9c4] sm:$0xff]
    %v477 = vld [vmem:[#allocation5 + $0x9cc] sm:$0xff]
    %v478 = vld [vmem:[#allocation5 + $0x9d4] sm:$0xf]
    %v479 = vld [vmem:[#allocation5 + $0x9d8] sm:$0xff]
    %v480 = vld [vmem:[#allocation5 + $0x9e0] sm:$0xff]
    %v481 = vld [vmem:[#allocation5 + $0x9e8] sm:$0xff]
    %v482 = vld [vmem:[#allocation5 + $0x9f0] sm:$0xf]
    %v483 = vld [vmem:[#allocation5 + $0x9f4] sm:$0xff]
    %v484 = vld [vmem:[#allocation5 + $0x9fc] sm:$0xff]
    %v485 = vld [vmem:[#allocation5 + $0xa04] sm:$0xff]
    %v486 = vld [vmem:[#allocation5 + $0xa0c] sm:$0xf]
    %v487 = vld [vmem:[#allocation5 + $0xa10] sm:$0xff]
    %v488 = vld [vmem:[#allocation5 + $0xa18] sm:$0xff]
    %v489 = vld [vmem:[#allocation5 + $0xa20] sm:$0xff]
    %v490 = vld [vmem:[#allocation5 + $0xa28] sm:$0xf]
    %v491 = vld [vmem:[#allocation5 + $0xa2c] sm:$0xff]
    %v492 = vld [vmem:[#allocation5 + $0xa34] sm:$0xff]
    %v493 = vld [vmem:[#allocation5 + $0xa3c] sm:$0xff]
    %v494 = vld [vmem:[#allocation5 + $0xa44] sm:$0xf]
    %v495 = vld [vmem:[#allocation5 + $0xa48] sm:$0xff]
    %v496 = vld [vmem:[#allocation5 + $0xa50] sm:$0xff]
    %v497 = vld [vmem:[#allocation5 + $0xa58] sm:$0xff]
    %v498 = vld [vmem:[#allocation5 + $0xa60] sm:$0xf]
    %v499 = vld [vmem:[#allocation5 + $0xa64] sm:$0xff]
    %v500 = vld [vmem:[#allocation5 + $0xa6c] sm:$0xff]
    %v501 = vld [vmem:[#allocation5 + $0xa74] sm:$0xff]
    %v502 = vld [vmem:[#allocation5 + $0xa7c] sm:$0xf]
    %v503 = vld [vmem:[#allocation5 + $0xa80] sm:$0xff]
    %v504 = vld [vmem:[#allocation5 + $0xa88] sm:$0xff]
    %v505 = vld [vmem:[#allocation5 + $0xa90] sm:$0xff]
    %v506 = vld [vmem:[#allocation5 + $0xa98] sm:$0xf]
    %v507 = vld [vmem:[#allocation5 + $0xa9c] sm:$0xff]
    %v508 = vld [vmem:[#allocation5 + $0xaa4] sm:$0xff]
    %v509 = vld [vmem:[#allocation5 + $0xaac] sm:$0xff]
    %v510 = vld [vmem:[#allocation5 + $0xab4] sm:$0xf]
    %v511 = vld [vmem:[#allocation5 + $0xab8] sm:$0xff]
    %v512 = vld [vmem:[#allocation5 + $0xac0] sm:$0xff]
    %v513 = vld [vmem:[#allocation5 + $0xac8] sm:$0xff]
    %v514 = vld [vmem:[#allocation5 + $0xad0] sm:$0xf]
    %v515 = vld [vmem:[#allocation5 + $0xad4] sm:$0xff]
    %v516 = vld [vmem:[#allocation5 + $0xadc] sm:$0xff]
    %v517 = vld [vmem:[#allocation5 + $0xae4] sm:$0xff]
    %v518 = vld [vmem:[#allocation5 + $0xaec] sm:$0xf]
    %v519 = vld [vmem:[#allocation5 + $0xaf0] sm:$0xff]
    %v520 = vld [vmem:[#allocation5 + $0xaf8] sm:$0xff]
    %v521 = vld [vmem:[#allocation5 + $0xb00] sm:$0xff]
    %v522 = vld [vmem:[#allocation5 + $0xb08] sm:$0xf]
    %v523 = vld [vmem:[#allocation5 + $0xb0c] sm:$0xff]
    %v524 = vld [vmem:[#allocation5 + $0xb14] sm:$0xff]
    %v525 = vld [vmem:[#allocation5 + $0xb1c] sm:$0xff]
    %v526 = vld [vmem:[#allocation5 + $0xb24] sm:$0xf]
    %v527 = vld [vmem:[#allocation5 + $0xb28] sm:$0xff]
    %v528 = vld [vmem:[#allocation5 + $0xb30] sm:$0xff]
    %v529 = vld [vmem:[#allocation5 + $0xb38] sm:$0xff]
    %v530 = vld [vmem:[#allocation5 + $0xb40] sm:$0xf]
    %v531 = vld [vmem:[#allocation5 + $0xb44] sm:$0xff]
    %v532 = vld [vmem:[#allocation5 + $0xb4c] sm:$0xff]
    %v533 = vld [vmem:[#allocation5 + $0xb54] sm:$0xff]
    %v534 = vld [vmem:[#allocation5 + $0xb5c] sm:$0xf]
    %v535 = vld [vmem:[#allocation5 + $0xb60] sm:$0xff]
    %v536 = vld [vmem:[#allocation5 + $0xb68] sm:$0xff]
    %v537 = vld [vmem:[#allocation5 + $0xb70] sm:$0xff]
    %v538 = vld [vmem:[#allocation5 + $0xb78] sm:$0xf]
    %v539 = vld [vmem:[#allocation5 + $0xb7c] sm:$0xff]
    %v540 = vld [vmem:[#allocation5 + $0xb84] sm:$0xff]
    %v541 = vld [vmem:[#allocation5 + $0xb8c] sm:$0xff]
    %v542 = vld [vmem:[#allocation5 + $0xb94] sm:$0xf]
    %v543 = vld [vmem:[#allocation5 + $0xb98] sm:$0xff]
    %v544 = vld [vmem:[#allocation5 + $0xba0] sm:$0xff]
    %v545 = vld [vmem:[#allocation5 + $0xba8] sm:$0xff]
    %v546 = vld [vmem:[#allocation5 + $0xbb0] sm:$0xf]
    %v547 = vld [vmem:[#allocation5 + $0xbb4] sm:$0xff]
    %v548 = vld [vmem:[#allocation5 + $0xbbc] sm:$0xff]
    %v549 = vld [vmem:[#allocation5 + $0xbc4] sm:$0xff]
    %v550 = vld [vmem:[#allocation5 + $0xbcc] sm:$0xf]
    %v551 = vld [vmem:[#allocation5 + $0xbd0] sm:$0xff]
    %v552 = vld [vmem:[#allocation5 + $0xbd8] sm:$0xff]
    %v553 = vld [vmem:[#allocation5 + $0xbe0] sm:$0xff]
    %v554 = vld [vmem:[#allocation5 + $0xbe8] sm:$0xf]
    %v555 = vld [vmem:[#allocation5 + $0xbec] sm:$0xff]
    %v556 = vld [vmem:[#allocation5 + $0xbf4] sm:$0xff]
    %v557 = vld [vmem:[#allocation5 + $0xbfc] sm:$0xff]
    %v558 = vld [vmem:[#allocation5 + $0xc04] sm:$0xf]
    %v559 = vld [vmem:[#allocation5 + $0xc08] sm:$0xff]
    %v560 = vld [vmem:[#allocation5 + $0xc10] sm:$0xff]
    %v561 = vld [vmem:[#allocation5 + $0xc18] sm:$0xff]
    %v562 = vld [vmem:[#allocation5 + $0xc20] sm:$0xf]
    %v563 = vld [vmem:[#allocation5 + $0xc24] sm:$0xff]
    %v564 = vld [vmem:[#allocation5 + $0xc2c] sm:$0xff]
    %v565 = vld [vmem:[#allocation5 + $0xc34] sm:$0xff]
    %v566 = vld [vmem:[#allocation5 + $0xc3c] sm:$0xf]
    %v567 = vld [vmem:[#allocation7] sm:$0xff]
    %v569 = vlaneseq
    %v570 = vshrl.u32 %v569, 7
    %v571 = vsub.s32 0, %v570
    %v572 = vrot.slane %v567, %v571
    %v573 = vlaneseq
    %v574 = vshrl.u32 %v573, 7
    %v575 = vsub.s32 1, %v574
    %v576 = vrot.slane %v567, %v575
    %v577 = vlaneseq
    %v578 = vshrl.u32 %v577, 7
    %v579 = vsub.s32 2, %v578
    %v580 = vrot.slane %v567, %v579
    %v581 = vlaneseq
    %v582 = vshrl.u32 %v581, 7
    %v583 = vsub.s32 3, %v582
    %v584 = vrot.slane %v567, %v583
    %v585 = vlaneseq
    %v586 = vshrl.u32 %v585, 7
    %v587 = vsub.s32 4, %v586
    %v588 = vrot.slane %v567, %v587
    %v589 = vlaneseq
    %v590 = vshrl.u32 %v589, 7
    %v591 = vsub.s32 5, %v590
    %v592 = vrot.slane %v567, %v591
    %v593 = vlaneseq
    %v594 = vshrl.u32 %v593, 7
    %v595 = vsub.s32 6, %v594
    %v596 = vrot.slane %v567, %v595
    %v608 = vunpack.c.l.b16 %v115
    %v609 = vunpack.c.h.b16 %v115
    %v610 = vunpack.c.l.b16 %v116
    %v611 = vunpack.c.h.b16 %v116
    %v612 = vunpack.c.l.b16 %v117
    %v613 = vunpack.c.h.b16 %v117
    %v614 = vunpack.c.l.b16 %v118
    %v615 = vpack.c.b16 %v608, %v608
    %v616 = vpack.c.b16 %v609, %v609
    %v617 = vpack.c.b16 %v610, %v610
    %v618 = vpack.c.b16 %v611, %v611
    %v619 = vpack.c.b16 %v612, %v612
    %v620 = vpack.c.b16 %v613, %v613
    %v621 = vpack.c.b16 %v614, %v614
    %v1077 = vunpack.c.l.b16 %v119
    %v1078 = vunpack.c.h.b16 %v119
    %v1079 = vunpack.c.l.b16 %v120
    %v1080 = vunpack.c.h.b16 %v120
    %v1081 = vunpack.c.l.b16 %v121
    %v1082 = vunpack.c.h.b16 %v121
    %v1083 = vunpack.c.l.b16 %v122
    %v1084 = vunpack.c.l.b16 %v123
    %v1085 = vunpack.c.h.b16 %v123
    %v1086 = vunpack.c.l.b16 %v124
    %v1087 = vunpack.c.h.b16 %v124
    %v1088 = vunpack.c.l.b16 %v125
    %v1089 = vunpack.c.h.b16 %v125
    %v1090 = vunpack.c.l.b16 %v126
    %v1091 = vunpack.c.l.b16 %v127
    %v1092 = vunpack.c.h.b16 %v127
    %v1093 = vunpack.c.l.b16 %v128
    %v1094 = vunpack.c.h.b16 %v128
    %v1095 = vunpack.c.l.b16 %v129
    %v1096 = vunpack.c.h.b16 %v129
    %v1097 = vunpack.c.l.b16 %v130
    %v1098 = vunpack.c.l.b16 %v131
    %v1099 = vunpack.c.h.b16 %v131
    %v1100 = vunpack.c.l.b16 %v132
    %v1101 = vunpack.c.h.b16 %v132
    %v1102 = vunpack.c.l.b16 %v133
    %v1103 = vunpack.c.h.b16 %v133
    %v1104 = vunpack.c.l.b16 %v134
    %v1105 = vunpack.c.l.b16 %v135
    %v1106 = vunpack.c.h.b16 %v135
    %v1107 = vunpack.c.l.b16 %v136
    %v1108 = vunpack.c.h.b16 %v136
    %v1109 = vunpack.c.l.b16 %v137
    %v1110 = vunpack.c.h.b16 %v137
    %v1111 = vunpack.c.l.b16 %v138
    %v1112 = vunpack.c.l.b16 %v139
    %v1113 = vunpack.c.h.b16 %v139
    %v1114 = vunpack.c.l.b16 %v140
    %v1115 = vunpack.c.h.b16 %v140
    %v1116 = vunpack.c.l.b16 %v141
    %v1117 = vunpack.c.h.b16 %v141
    %v1118 = vunpack.c.l.b16 %v142
    %v1119 = vunpack.c.l.b16 %v143
    %v1120 = vunpack.c.h.b16 %v143
    %v1121 = vunpack.c.l.b16 %v144
    %v1122 = vunpack.c.h.b16 %v144
    %v1123 = vunpack.c.l.b16 %v145
    %v1124 = vunpack.c.h.b16 %v145
    %v1125 = vunpack.c.l.b16 %v146
    %v1126 = vunpack.c.l.b16 %v147
    %v1127 = vunpack.c.h.b16 %v147
    %v1128 = vunpack.c.l.b16 %v148
    %v1129 = vunpack.c.h.b16 %v148
    %v1130 = vunpack.c.l.b16 %v149
    %v1131 = vunpack.c.h.b16 %v149
    %v1132 = vunpack.c.l.b16 %v150
    %v1133 = vunpack.c.l.b16 %v151
    %v1134 = vunpack.c.h.b16 %v151
    %v1135 = vunpack.c.l.b16 %v152
    %v1136 = vunpack.c.h.b16 %v152
    %v1137 = vunpack.c.l.b16 %v153
    %v1138 = vunpack.c.h.b16 %v153
    %v1139 = vunpack.c.l.b16 %v154
    %v1140 = vunpack.c.l.b16 %v155
    %v1141 = vunpack.c.h.b16 %v155
    %v1142 = vunpack.c.l.b16 %v156
    %v1143 = vunpack.c.h.b16 %v156
    %v1144 = vunpack.c.l.b16 %v157
    %v1145 = vunpack.c.h.b16 %v157
    %v1146 = vunpack.c.l.b16 %v158
    %v1147 = vunpack.c.l.b16 %v159
    %v1148 = vunpack.c.h.b16 %v159
    %v1149 = vunpack.c.l.b16 %v160
    %v1150 = vunpack.c.h.b16 %v160
    %v1151 = vunpack.c.l.b16 %v161
    %v1152 = vunpack.c.h.b16 %v161
    %v1153 = vunpack.c.l.b16 %v162
    %v1154 = vunpack.c.l.b16 %v163
    %v1155 = vunpack.c.h.b16 %v163
    %v1156 = vunpack.c.l.b16 %v164
    %v1157 = vunpack.c.h.b16 %v164
    %v1158 = vunpack.c.l.b16 %v165
    %v1159 = vunpack.c.h.b16 %v165
    %v1160 = vunpack.c.l.b16 %v166
    %v1161 = vunpack.c.l.b16 %v167
    %v1162 = vunpack.c.h.b16 %v167
    %v1163 = vunpack.c.l.b16 %v168
    %v1164 = vunpack.c.h.b16 %v168
    %v1165 = vunpack.c.l.b16 %v169
    %v1166 = vunpack.c.h.b16 %v169
    %v1167 = vunpack.c.l.b16 %v170
    %v1168 = vunpack.c.l.b16 %v171
    %v1169 = vunpack.c.h.b16 %v171
    %v1170 = vunpack.c.l.b16 %v172
    %v1171 = vunpack.c.h.b16 %v172
    %v1172 = vunpack.c.l.b16 %v173
    %v1173 = vunpack.c.h.b16 %v173
    %v1174 = vunpack.c.l.b16 %v174
    %v1175 = vunpack.c.l.b16 %v175
    %v1176 = vunpack.c.h.b16 %v175
    %v1177 = vunpack.c.l.b16 %v176
    %v1178 = vunpack.c.h.b16 %v176
    %v1179 = vunpack.c.l.b16 %v177
    %v1180 = vunpack.c.h.b16 %v177
    %v1181 = vunpack.c.l.b16 %v178
    %v1182 = vunpack.c.l.b16 %v179
    %v1183 = vunpack.c.h.b16 %v179
    %v1184 = vunpack.c.l.b16 %v180
    %v1185 = vunpack.c.h.b16 %v180
    %v1186 = vunpack.c.l.b16 %v181
    %v1187 = vunpack.c.h.b16 %v181
    %v1188 = vunpack.c.l.b16 %v182
    %v1189 = vunpack.c.l.b16 %v183
    %v1190 = vunpack.c.h.b16 %v183
    %v1191 = vunpack.c.l.b16 %v184
    %v1192 = vunpack.c.h.b16 %v184
    %v1193 = vunpack.c.l.b16 %v185
    %v1194 = vunpack.c.h.b16 %v185
    %v1195 = vunpack.c.l.b16 %v186
    %v1196 = vunpack.c.l.b16 %v187
    %v1197 = vunpack.c.h.b16 %v187
    %v1198 = vunpack.c.l.b16 %v188
    %v1199 = vunpack.c.h.b16 %v188
    %v1200 = vunpack.c.l.b16 %v189
    %v1201 = vunpack.c.h.b16 %v189
    %v1202 = vunpack.c.l.b16 %v190
    %v1203 = vunpack.c.l.b16 %v191
    %v1204 = vunpack.c.h.b16 %v191
    %v1205 = vunpack.c.l.b16 %v192
    %v1206 = vunpack.c.h.b16 %v192
    %v1207 = vunpack.c.l.b16 %v193
    %v1208 = vunpack.c.h.b16 %v193
    %v1209 = vunpack.c.l.b16 %v194
    %v1210 = vunpack.c.l.b16 %v195
    %v1211 = vunpack.c.h.b16 %v195
    %v1212 = vunpack.c.l.b16 %v196
    %v1213 = vunpack.c.h.b16 %v196
    %v1214 = vunpack.c.l.b16 %v197
    %v1215 = vunpack.c.h.b16 %v197
    %v1216 = vunpack.c.l.b16 %v198
    %v1217 = vunpack.c.l.b16 %v199
    %v1218 = vunpack.c.h.b16 %v199
    %v1219 = vunpack.c.l.b16 %v200
    %v1220 = vunpack.c.h.b16 %v200
    %v1221 = vunpack.c.l.b16 %v201
    %v1222 = vunpack.c.h.b16 %v201
    %v1223 = vunpack.c.l.b16 %v202
    %v1224 = vunpack.c.l.b16 %v203
    %v1225 = vunpack.c.h.b16 %v203
    %v1226 = vunpack.c.l.b16 %v204
    %v1227 = vunpack.c.h.b16 %v204
    %v1228 = vunpack.c.l.b16 %v205
    %v1229 = vunpack.c.h.b16 %v205
    %v1230 = vunpack.c.l.b16 %v206
    %v1231 = vunpack.c.l.b16 %v207
    %v1232 = vunpack.c.h.b16 %v207
    %v1233 = vunpack.c.l.b16 %v208
    %v1234 = vunpack.c.h.b16 %v208
    %v1235 = vunpack.c.l.b16 %v209
    %v1236 = vunpack.c.h.b16 %v209
    %v1237 = vunpack.c.l.b16 %v210
    %v1238 = vunpack.c.l.b16 %v211
    %v1239 = vunpack.c.h.b16 %v211
    %v1240 = vunpack.c.l.b16 %v212
    %v1241 = vunpack.c.h.b16 %v212
    %v1242 = vunpack.c.l.b16 %v213
    %v1243 = vunpack.c.h.b16 %v213
    %v1244 = vunpack.c.l.b16 %v214
    %v1245 = vunpack.c.l.b16 %v215
    %v1246 = vunpack.c.h.b16 %v215
    %v1247 = vunpack.c.l.b16 %v216
    %v1248 = vunpack.c.h.b16 %v216
    %v1249 = vunpack.c.l.b16 %v217
    %v1250 = vunpack.c.h.b16 %v217
    %v1251 = vunpack.c.l.b16 %v218
    %v1252 = vunpack.c.l.b16 %v219
    %v1253 = vunpack.c.h.b16 %v219
    %v1254 = vunpack.c.l.b16 %v220
    %v1255 = vunpack.c.h.b16 %v220
    %v1256 = vunpack.c.l.b16 %v221
    %v1257 = vunpack.c.h.b16 %v221
    %v1258 = vunpack.c.l.b16 %v222
    %v1259 = vunpack.c.l.b16 %v223
    %v1260 = vunpack.c.h.b16 %v223
    %v1261 = vunpack.c.l.b16 %v224
    %v1262 = vunpack.c.h.b16 %v224
    %v1263 = vunpack.c.l.b16 %v225
    %v1264 = vunpack.c.h.b16 %v225
    %v1265 = vunpack.c.l.b16 %v226
    %v1266 = vunpack.c.l.b16 %v227
    %v1267 = vunpack.c.h.b16 %v227
    %v1268 = vunpack.c.l.b16 %v228
    %v1269 = vunpack.c.h.b16 %v228
    %v1270 = vunpack.c.l.b16 %v229
    %v1271 = vunpack.c.h.b16 %v229
    %v1272 = vunpack.c.l.b16 %v230
    %v1273 = vunpack.c.l.b16 %v231
    %v1274 = vunpack.c.h.b16 %v231
    %v1275 = vunpack.c.l.b16 %v232
    %v1276 = vunpack.c.h.b16 %v232
    %v1277 = vunpack.c.l.b16 %v233
    %v1278 = vunpack.c.h.b16 %v233
    %v1279 = vunpack.c.l.b16 %v234
    %v1280 = vunpack.c.l.b16 %v235
    %v1281 = vunpack.c.h.b16 %v235
    %v1282 = vunpack.c.l.b16 %v236
    %v1283 = vunpack.c.h.b16 %v236
    %v1284 = vunpack.c.l.b16 %v237
    %v1285 = vunpack.c.h.b16 %v237
    %v1286 = vunpack.c.l.b16 %v238
    %v1287 = vunpack.c.l.b16 %v239
    %v1288 = vunpack.c.h.b16 %v239
    %v1289 = vunpack.c.l.b16 %v240
    %v1290 = vunpack.c.h.b16 %v240
    %v1291 = vunpack.c.l.b16 %v241
    %v1292 = vunpack.c.h.b16 %v241
    %v1293 = vunpack.c.l.b16 %v242
    %v1294 = vunpack.c.l.b16 %v243
    %v1295 = vunpack.c.h.b16 %v243
    %v1296 = vunpack.c.l.b16 %v244
    %v1297 = vunpack.c.h.b16 %v244
    %v1298 = vunpack.c.l.b16 %v245
    %v1299 = vunpack.c.h.b16 %v245
    %v1300 = vunpack.c.l.b16 %v246
    %v1301 = vunpack.c.l.b16 %v247
    %v1302 = vunpack.c.h.b16 %v247
    %v1303 = vunpack.c.l.b16 %v248
    %v1304 = vunpack.c.h.b16 %v248
    %v1305 = vunpack.c.l.b16 %v249
    %v1306 = vunpack.c.h.b16 %v249
    %v1307 = vunpack.c.l.b16 %v250
    %v1308 = vunpack.c.l.b16 %v251
    %v1309 = vunpack.c.h.b16 %v251
    %v1310 = vunpack.c.l.b16 %v252
    %v1311 = vunpack.c.h.b16 %v252
    %v1312 = vunpack.c.l.b16 %v253
    %v1313 = vunpack.c.h.b16 %v253
    %v1314 = vunpack.c.l.b16 %v254
    %v1315 = vunpack.c.l.b16 %v255
    %v1316 = vunpack.c.h.b16 %v255
    %v1317 = vunpack.c.l.b16 %v256
    %v1318 = vunpack.c.h.b16 %v256
    %v1319 = vunpack.c.l.b16 %v257
    %v1320 = vunpack.c.h.b16 %v257
    %v1321 = vunpack.c.l.b16 %v258
    %v1322 = vunpack.c.l.b16 %v259
    %v1323 = vunpack.c.h.b16 %v259
    %v1324 = vunpack.c.l.b16 %v260
    %v1325 = vunpack.c.h.b16 %v260
    %v1326 = vunpack.c.l.b16 %v261
    %v1327 = vunpack.c.h.b16 %v261
    %v1328 = vunpack.c.l.b16 %v262
    %v1329 = vunpack.c.l.b16 %v263
    %v1330 = vunpack.c.h.b16 %v263
    %v1331 = vunpack.c.l.b16 %v264
    %v1332 = vunpack.c.h.b16 %v264
    %v1333 = vunpack.c.l.b16 %v265
    %v1334 = vunpack.c.h.b16 %v265
    %v1335 = vunpack.c.l.b16 %v266
    %v1336 = vunpack.c.l.b16 %v267
    %v1337 = vunpack.c.h.b16 %v267
    %v1338 = vunpack.c.l.b16 %v268
    %v1339 = vunpack.c.h.b16 %v268
    %v1340 = vunpack.c.l.b16 %v269
    %v1341 = vunpack.c.h.b16 %v269
    %v1342 = vunpack.c.l.b16 %v270
    %v1343 = vunpack.c.l.b16 %v271
    %v1344 = vunpack.c.h.b16 %v271
    %v1345 = vunpack.c.l.b16 %v272
    %v1346 = vunpack.c.h.b16 %v272
    %v1347 = vunpack.c.l.b16 %v273
    %v1348 = vunpack.c.h.b16 %v273
    %v1349 = vunpack.c.l.b16 %v274
    %v1350 = vunpack.c.l.b16 %v275
    %v1351 = vunpack.c.h.b16 %v275
    %v1352 = vunpack.c.l.b16 %v276
    %v1353 = vunpack.c.h.b16 %v276
    %v1354 = vunpack.c.l.b16 %v277
    %v1355 = vunpack.c.h.b16 %v277
    %v1356 = vunpack.c.l.b16 %v278
    %v1357 = vunpack.c.l.b16 %v279
    %v1358 = vunpack.c.h.b16 %v279
    %v1359 = vunpack.c.l.b16 %v280
    %v1360 = vunpack.c.h.b16 %v280
    %v1361 = vunpack.c.l.b16 %v281
    %v1362 = vunpack.c.h.b16 %v281
    %v1363 = vunpack.c.l.b16 %v282
    %v1364 = vunpack.c.l.b16 %v283
    %v1365 = vunpack.c.h.b16 %v283
    %v1366 = vunpack.c.l.b16 %v284
    %v1367 = vunpack.c.h.b16 %v284
    %v1368 = vunpack.c.l.b16 %v285
    %v1369 = vunpack.c.h.b16 %v285
    %v1370 = vunpack.c.l.b16 %v286
    %v1371 = vunpack.c.l.b16 %v287
    %v1372 = vunpack.c.h.b16 %v287
    %v1373 = vunpack.c.l.b16 %v288
    %v1374 = vunpack.c.h.b16 %v288
    %v1375 = vunpack.c.l.b16 %v289
    %v1376 = vunpack.c.h.b16 %v289
    %v1377 = vunpack.c.l.b16 %v290
    %v1378 = vunpack.c.l.b16 %v291
    %v1379 = vunpack.c.h.b16 %v291
    %v1380 = vunpack.c.l.b16 %v292
    %v1381 = vunpack.c.h.b16 %v292
    %v1382 = vunpack.c.l.b16 %v293
    %v1383 = vunpack.c.h.b16 %v293
    %v1384 = vunpack.c.l.b16 %v294
    %v1385 = vunpack.c.l.b16 %v295
    %v1386 = vunpack.c.h.b16 %v295
    %v1387 = vunpack.c.l.b16 %v296
    %v1388 = vunpack.c.h.b16 %v296
    %v1389 = vunpack.c.l.b16 %v297
    %v1390 = vunpack.c.h.b16 %v297
    %v1391 = vunpack.c.l.b16 %v298
    %v1392 = vunpack.c.l.b16 %v299
    %v1393 = vunpack.c.h.b16 %v299
    %v1394 = vunpack.c.l.b16 %v300
    %v1395 = vunpack.c.h.b16 %v300
    %v1396 = vunpack.c.l.b16 %v301
    %v1397 = vunpack.c.h.b16 %v301
    %v1398 = vunpack.c.l.b16 %v302
    %v1399 = vunpack.c.l.b16 %v303
    %v1400 = vunpack.c.h.b16 %v303
    %v1401 = vunpack.c.l.b16 %v304
    %v1402 = vunpack.c.h.b16 %v304
    %v1403 = vunpack.c.l.b16 %v305
    %v1404 = vunpack.c.h.b16 %v305
    %v1405 = vunpack.c.l.b16 %v306
    %v1406 = vunpack.c.l.b16 %v307
    %v1407 = vunpack.c.h.b16 %v307
    %v1408 = vunpack.c.l.b16 %v308
    %v1409 = vunpack.c.h.b16 %v308
    %v1410 = vunpack.c.l.b16 %v309
    %v1411 = vunpack.c.h.b16 %v309
    %v1412 = vunpack.c.l.b16 %v310
    %v1413 = vunpack.c.l.b16 %v311
    %v1414 = vunpack.c.h.b16 %v311
    %v1415 = vunpack.c.l.b16 %v312
    %v1416 = vunpack.c.h.b16 %v312
    %v1417 = vunpack.c.l.b16 %v313
    %v1418 = vunpack.c.h.b16 %v313
    %v1419 = vunpack.c.l.b16 %v314
    %v1420 = vunpack.c.l.b16 %v315
    %v1421 = vunpack.c.h.b16 %v315
    %v1422 = vunpack.c.l.b16 %v316
    %v1423 = vunpack.c.h.b16 %v316
    %v1424 = vunpack.c.l.b16 %v317
    %v1425 = vunpack.c.h.b16 %v317
    %v1426 = vunpack.c.l.b16 %v318
    %v1427 = vunpack.c.l.b16 %v319
    %v1428 = vunpack.c.h.b16 %v319
    %v1429 = vunpack.c.l.b16 %v320
    %v1430 = vunpack.c.h.b16 %v320
    %v1431 = vunpack.c.l.b16 %v321
    %v1432 = vunpack.c.h.b16 %v321
    %v1433 = vunpack.c.l.b16 %v322
    %v1434 = vunpack.c.l.b16 %v323
    %v1435 = vunpack.c.h.b16 %v323
    %v1436 = vunpack.c.l.b16 %v324
    %v1437 = vunpack.c.h.b16 %v324
    %v1438 = vunpack.c.l.b16 %v325
    %v1439 = vunpack.c.h.b16 %v325
    %v1440 = vunpack.c.l.b16 %v326
    %v1441 = vunpack.c.l.b16 %v327
    %v1442 = vunpack.c.h.b16 %v327
    %v1443 = vunpack.c.l.b16 %v328
    %v1444 = vunpack.c.h.b16 %v328
    %v1445 = vunpack.c.l.b16 %v329
    %v1446 = vunpack.c.h.b16 %v329
    %v1447 = vunpack.c.l.b16 %v330
    %v1448 = vunpack.c.l.b16 %v331
    %v1449 = vunpack.c.h.b16 %v331
    %v1450 = vunpack.c.l.b16 %v332
    %v1451 = vunpack.c.h.b16 %v332
    %v1452 = vunpack.c.l.b16 %v333
    %v1453 = vunpack.c.h.b16 %v333
    %v1454 = vunpack.c.l.b16 %v334
    %v1455 = vunpack.c.l.b16 %v335
    %v1456 = vunpack.c.h.b16 %v335
    %v1457 = vunpack.c.l.b16 %v336
    %v1458 = vunpack.c.h.b16 %v336
    %v1459 = vunpack.c.l.b16 %v337
    %v1460 = vunpack.c.h.b16 %v337
    %v1461 = vunpack.c.l.b16 %v338
    %v1462 = vunpack.c.l.b16 %v339
    %v1463 = vunpack.c.h.b16 %v339
    %v1464 = vunpack.c.l.b16 %v340
    %v1465 = vunpack.c.h.b16 %v340
    %v1466 = vunpack.c.l.b16 %v341
    %v1467 = vunpack.c.h.b16 %v341
    %v1468 = vunpack.c.l.b16 %v342
    %v1469 = vunpack.c.l.b16 %v343
    %v1470 = vunpack.c.h.b16 %v343
    %v1471 = vunpack.c.l.b16 %v344
    %v1472 = vunpack.c.h.b16 %v344
    %v1473 = vunpack.c.l.b16 %v345
    %v1474 = vunpack.c.h.b16 %v345
    %v1475 = vunpack.c.l.b16 %v346
    %v1476 = vunpack.c.l.b16 %v347
    %v1477 = vunpack.c.h.b16 %v347
    %v1478 = vunpack.c.l.b16 %v348
    %v1479 = vunpack.c.h.b16 %v348
    %v1480 = vunpack.c.l.b16 %v349
    %v1481 = vunpack.c.h.b16 %v349
    %v1482 = vunpack.c.l.b16 %v350
    %v1483 = vunpack.c.l.b16 %v351
    %v1484 = vunpack.c.h.b16 %v351
    %v1485 = vunpack.c.l.b16 %v352
    %v1486 = vunpack.c.h.b16 %v352
    %v1487 = vunpack.c.l.b16 %v353
    %v1488 = vunpack.c.h.b16 %v353
    %v1489 = vunpack.c.l.b16 %v354
    %v1490 = vunpack.c.l.b16 %v355
    %v1491 = vunpack.c.h.b16 %v355
    %v1492 = vunpack.c.l.b16 %v356
    %v1493 = vunpack.c.h.b16 %v356
    %v1494 = vunpack.c.l.b16 %v357
    %v1495 = vunpack.c.h.b16 %v357
    %v1496 = vunpack.c.l.b16 %v358
    %v1497 = vunpack.c.l.b16 %v359
    %v1498 = vunpack.c.h.b16 %v359
    %v1499 = vunpack.c.l.b16 %v360
    %v1500 = vunpack.c.h.b16 %v360
    %v1501 = vunpack.c.l.b16 %v361
    %v1502 = vunpack.c.h.b16 %v361
    %v1503 = vunpack.c.l.b16 %v362
    %v1504 = vunpack.c.l.b16 %v363
    %v1505 = vunpack.c.h.b16 %v363
    %v1506 = vunpack.c.l.b16 %v364
    %v1507 = vunpack.c.h.b16 %v364
    %v1508 = vunpack.c.l.b16 %v365
    %v1509 = vunpack.c.h.b16 %v365
    %v1510 = vunpack.c.l.b16 %v366
    %v1511 = vunpack.c.l.b16 %v367
    %v1512 = vunpack.c.h.b16 %v367
    %v1513 = vunpack.c.l.b16 %v368
    %v1514 = vunpack.c.h.b16 %v368
    %v1515 = vunpack.c.l.b16 %v369
    %v1516 = vunpack.c.h.b16 %v369
    %v1517 = vunpack.c.l.b16 %v370
    %v1518 = vunpack.c.l.b16 %v371
    %v1519 = vunpack.c.h.b16 %v371
    %v1520 = vunpack.c.l.b16 %v372
    %v1521 = vunpack.c.h.b16 %v372
    %v1522 = vunpack.c.l.b16 %v373
    %v1523 = vunpack.c.h.b16 %v373
    %v1524 = vunpack.c.l.b16 %v374
    %v1525 = vunpack.c.l.b16 %v375
    %v1526 = vunpack.c.h.b16 %v375
    %v1527 = vunpack.c.l.b16 %v376
    %v1528 = vunpack.c.h.b16 %v376
    %v1529 = vunpack.c.l.b16 %v377
    %v1530 = vunpack.c.h.b16 %v377
    %v1531 = vunpack.c.l.b16 %v378
    %v1532 = vunpack.c.l.b16 %v379
    %v1533 = vunpack.c.h.b16 %v379
    %v1534 = vunpack.c.l.b16 %v380
    %v1535 = vunpack.c.h.b16 %v380
    %v1536 = vunpack.c.l.b16 %v381
    %v1537 = vunpack.c.h.b16 %v381
    %v1538 = vunpack.c.l.b16 %v382
    %v1539 = vunpack.c.l.b16 %v383
    %v1540 = vunpack.c.h.b16 %v383
    %v1541 = vunpack.c.l.b16 %v384
    %v1542 = vunpack.c.h.b16 %v384
    %v1543 = vunpack.c.l.b16 %v385
    %v1544 = vunpack.c.h.b16 %v385
    %v1545 = vunpack.c.l.b16 %v386
    %v1546 = vunpack.c.l.b16 %v387
    %v1547 = vunpack.c.h.b16 %v387
    %v1548 = vunpack.c.l.b16 %v388
    %v1549 = vunpack.c.h.b16 %v388
    %v1550 = vunpack.c.l.b16 %v389
    %v1551 = vunpack.c.h.b16 %v389
    %v1552 = vunpack.c.l.b16 %v390
    %v1553 = vunpack.c.l.b16 %v391
    %v1554 = vunpack.c.h.b16 %v391
    %v1555 = vunpack.c.l.b16 %v392
    %v1556 = vunpack.c.h.b16 %v392
    %v1557 = vunpack.c.l.b16 %v393
    %v1558 = vunpack.c.h.b16 %v393
    %v1559 = vunpack.c.l.b16 %v394
    %v1560 = vunpack.c.l.b16 %v395
    %v1561 = vunpack.c.h.b16 %v395
    %v1562 = vunpack.c.l.b16 %v396
    %v1563 = vunpack.c.h.b16 %v396
    %v1564 = vunpack.c.l.b16 %v397
    %v1565 = vunpack.c.h.b16 %v397
    %v1566 = vunpack.c.l.b16 %v398
    %v1567 = vunpack.c.l.b16 %v399
    %v1568 = vunpack.c.h.b16 %v399
    %v1569 = vunpack.c.l.b16 %v400
    %v1570 = vunpack.c.h.b16 %v400
    %v1571 = vunpack.c.l.b16 %v401
    %v1572 = vunpack.c.h.b16 %v401
    %v1573 = vunpack.c.l.b16 %v402
    %v1574 = vunpack.c.l.b16 %v403
    %v1575 = vunpack.c.h.b16 %v403
    %v1576 = vunpack.c.l.b16 %v404
    %v1577 = vunpack.c.h.b16 %v404
    %v1578 = vunpack.c.l.b16 %v405
    %v1579 = vunpack.c.h.b16 %v405
    %v1580 = vunpack.c.l.b16 %v406
    %v1581 = vunpack.c.l.b16 %v407
    %v1582 = vunpack.c.h.b16 %v407
    %v1583 = vunpack.c.l.b16 %v408
    %v1584 = vunpack.c.h.b16 %v408
    %v1585 = vunpack.c.l.b16 %v409
    %v1586 = vunpack.c.h.b16 %v409
    %v1587 = vunpack.c.l.b16 %v410
    %v1588 = vunpack.c.l.b16 %v411
    %v1589 = vunpack.c.h.b16 %v411
    %v1590 = vunpack.c.l.b16 %v412
    %v1591 = vunpack.c.h.b16 %v412
    %v1592 = vunpack.c.l.b16 %v413
    %v1593 = vunpack.c.h.b16 %v413
    %v1594 = vunpack.c.l.b16 %v414
    %v1595 = vunpack.c.l.b16 %v415
    %v1596 = vunpack.c.h.b16 %v415
    %v1597 = vunpack.c.l.b16 %v416
    %v1598 = vunpack.c.h.b16 %v416
    %v1599 = vunpack.c.l.b16 %v417
    %v1600 = vunpack.c.h.b16 %v417
    %v1601 = vunpack.c.l.b16 %v418
    %v1602 = vunpack.c.l.b16 %v419
    %v1603 = vunpack.c.h.b16 %v419
    %v1604 = vunpack.c.l.b16 %v420
    %v1605 = vunpack.c.h.b16 %v420
    %v1606 = vunpack.c.l.b16 %v421
    %v1607 = vunpack.c.h.b16 %v421
    %v1608 = vunpack.c.l.b16 %v422
    %v1609 = vunpack.c.l.b16 %v423
    %v1610 = vunpack.c.h.b16 %v423
    %v1611 = vunpack.c.l.b16 %v424
    %v1612 = vunpack.c.h.b16 %v424
    %v1613 = vunpack.c.l.b16 %v425
    %v1614 = vunpack.c.h.b16 %v425
    %v1615 = vunpack.c.l.b16 %v426
    %v1616 = vunpack.c.l.b16 %v427
    %v1617 = vunpack.c.h.b16 %v427
    %v1618 = vunpack.c.l.b16 %v428
    %v1619 = vunpack.c.h.b16 %v428
    %v1620 = vunpack.c.l.b16 %v429
    %v1621 = vunpack.c.h.b16 %v429
    %v1622 = vunpack.c.l.b16 %v430
    %v1623 = vunpack.c.l.b16 %v431
    %v1624 = vunpack.c.h.b16 %v431
    %v1625 = vunpack.c.l.b16 %v432
    %v1626 = vunpack.c.h.b16 %v432
    %v1627 = vunpack.c.l.b16 %v433
    %v1628 = vunpack.c.h.b16 %v433
    %v1629 = vunpack.c.l.b16 %v434
    %v1630 = vunpack.c.l.b16 %v435
    %v1631 = vunpack.c.h.b16 %v435
    %v1632 = vunpack.c.l.b16 %v436
    %v1633 = vunpack.c.h.b16 %v436
    %v1634 = vunpack.c.l.b16 %v437
    %v1635 = vunpack.c.h.b16 %v437
    %v1636 = vunpack.c.l.b16 %v438
    %v1637 = vunpack.c.l.b16 %v439
    %v1638 = vunpack.c.h.b16 %v439
    %v1639 = vunpack.c.l.b16 %v440
    %v1640 = vunpack.c.h.b16 %v440
    %v1641 = vunpack.c.l.b16 %v441
    %v1642 = vunpack.c.h.b16 %v441
    %v1643 = vunpack.c.l.b16 %v442
    %v1644 = vunpack.c.l.b16 %v443
    %v1645 = vunpack.c.h.b16 %v443
    %v1646 = vunpack.c.l.b16 %v444
    %v1647 = vunpack.c.h.b16 %v444
    %v1648 = vunpack.c.l.b16 %v445
    %v1649 = vunpack.c.h.b16 %v445
    %v1650 = vunpack.c.l.b16 %v446
    %v1651 = vunpack.c.l.b16 %v447
    %v1652 = vunpack.c.h.b16 %v447
    %v1653 = vunpack.c.l.b16 %v448
    %v1654 = vunpack.c.h.b16 %v448
    %v1655 = vunpack.c.l.b16 %v449
    %v1656 = vunpack.c.h.b16 %v449
    %v1657 = vunpack.c.l.b16 %v450
    %v1658 = vunpack.c.l.b16 %v451
    %v1659 = vunpack.c.h.b16 %v451
    %v1660 = vunpack.c.l.b16 %v452
    %v1661 = vunpack.c.h.b16 %v452
    %v1662 = vunpack.c.l.b16 %v453
    %v1663 = vunpack.c.h.b16 %v453
    %v1664 = vunpack.c.l.b16 %v454
    %v1665 = vunpack.c.l.b16 %v455
    %v1666 = vunpack.c.h.b16 %v455
    %v1667 = vunpack.c.l.b16 %v456
    %v1668 = vunpack.c.h.b16 %v456
    %v1669 = vunpack.c.l.b16 %v457
    %v1670 = vunpack.c.h.b16 %v457
    %v1671 = vunpack.c.l.b16 %v458
    %v1672 = vunpack.c.l.b16 %v459
    %v1673 = vunpack.c.h.b16 %v459
    %v1674 = vunpack.c.l.b16 %v460
    %v1675 = vunpack.c.h.b16 %v460
    %v1676 = vunpack.c.l.b16 %v461
    %v1677 = vunpack.c.h.b16 %v461
    %v1678 = vunpack.c.l.b16 %v462
    %v1679 = vunpack.c.l.b16 %v463
    %v1680 = vunpack.c.h.b16 %v463
    %v1681 = vunpack.c.l.b16 %v464
    %v1682 = vunpack.c.h.b16 %v464
    %v1683 = vunpack.c.l.b16 %v465
    %v1684 = vunpack.c.h.b16 %v465
    %v1685 = vunpack.c.l.b16 %v466
    %v1686 = vunpack.c.l.b16 %v467
    %v1687 = vunpack.c.h.b16 %v467
    %v1688 = vunpack.c.l.b16 %v468
    %v1689 = vunpack.c.h.b16 %v468
    %v1690 = vunpack.c.l.b16 %v469
    %v1691 = vunpack.c.h.b16 %v469
    %v1692 = vunpack.c.l.b16 %v470
    %v1693 = vunpack.c.l.b16 %v471
    %v1694 = vunpack.c.h.b16 %v471
    %v1695 = vunpack.c.l.b16 %v472
    %v1696 = vunpack.c.h.b16 %v472
    %v1697 = vunpack.c.l.b16 %v473
    %v1698 = vunpack.c.h.b16 %v473
    %v1699 = vunpack.c.l.b16 %v474
    %v1700 = vunpack.c.l.b16 %v475
    %v1701 = vunpack.c.h.b16 %v475
    %v1702 = vunpack.c.l.b16 %v476
    %v1703 = vunpack.c.h.b16 %v476
    %v1704 = vunpack.c.l.b16 %v477
    %v1705 = vunpack.c.h.b16 %v477
    %v1706 = vunpack.c.l.b16 %v478
    %v1707 = vunpack.c.l.b16 %v479
    %v1708 = vunpack.c.h.b16 %v479
    %v1709 = vunpack.c.l.b16 %v480
    %v1710 = vunpack.c.h.b16 %v480
    %v1711 = vunpack.c.l.b16 %v481
    %v1712 = vunpack.c.h.b16 %v481
    %v1713 = vunpack.c.l.b16 %v482
    %v1714 = vunpack.c.l.b16 %v483
    %v1715 = vunpack.c.h.b16 %v483
    %v1716 = vunpack.c.l.b16 %v484
    %v1717 = vunpack.c.h.b16 %v484
    %v1718 = vunpack.c.l.b16 %v485
    %v1719 = vunpack.c.h.b16 %v485
    %v1720 = vunpack.c.l.b16 %v486
    %v1721 = vunpack.c.l.b16 %v487
    %v1722 = vunpack.c.h.b16 %v487
    %v1723 = vunpack.c.l.b16 %v488
    %v1724 = vunpack.c.h.b16 %v488
    %v1725 = vunpack.c.l.b16 %v489
    %v1726 = vunpack.c.h.b16 %v489
    %v1727 = vunpack.c.l.b16 %v490
    %v1728 = vunpack.c.l.b16 %v491
    %v1729 = vunpack.c.h.b16 %v491
    %v1730 = vunpack.c.l.b16 %v492
    %v1731 = vunpack.c.h.b16 %v492
    %v1732 = vunpack.c.l.b16 %v493
    %v1733 = vunpack.c.h.b16 %v493
    %v1734 = vunpack.c.l.b16 %v494
    %v1735 = vunpack.c.l.b16 %v495
    %v1736 = vunpack.c.h.b16 %v495
    %v1737 = vunpack.c.l.b16 %v496
    %v1738 = vunpack.c.h.b16 %v496
    %v1739 = vunpack.c.l.b16 %v497
    %v1740 = vunpack.c.h.b16 %v497
    %v1741 = vunpack.c.l.b16 %v498
    %v1742 = vunpack.c.l.b16 %v499
    %v1743 = vunpack.c.h.b16 %v499
    %v1744 = vunpack.c.l.b16 %v500
    %v1745 = vunpack.c.h.b16 %v500
    %v1746 = vunpack.c.l.b16 %v501
    %v1747 = vunpack.c.h.b16 %v501
    %v1748 = vunpack.c.l.b16 %v502
    %v1749 = vunpack.c.l.b16 %v503
    %v1750 = vunpack.c.h.b16 %v503
    %v1751 = vunpack.c.l.b16 %v504
    %v1752 = vunpack.c.h.b16 %v504
    %v1753 = vunpack.c.l.b16 %v505
    %v1754 = vunpack.c.h.b16 %v505
    %v1755 = vunpack.c.l.b16 %v506
    %v1756 = vunpack.c.l.b16 %v507
    %v1757 = vunpack.c.h.b16 %v507
    %v1758 = vunpack.c.l.b16 %v508
    %v1759 = vunpack.c.h.b16 %v508
    %v1760 = vunpack.c.l.b16 %v509
    %v1761 = vunpack.c.h.b16 %v509
    %v1762 = vunpack.c.l.b16 %v510
    %v1763 = vunpack.c.l.b16 %v511
    %v1764 = vunpack.c.h.b16 %v511
    %v1765 = vunpack.c.l.b16 %v512
    %v1766 = vunpack.c.h.b16 %v512
    %v1767 = vunpack.c.l.b16 %v513
    %v1768 = vunpack.c.h.b16 %v513
    %v1769 = vunpack.c.l.b16 %v514
    %v1770 = vunpack.c.l.b16 %v515
    %v1771 = vunpack.c.h.b16 %v515
    %v1772 = vunpack.c.l.b16 %v516
    %v1773 = vunpack.c.h.b16 %v516
    %v1774 = vunpack.c.l.b16 %v517
    %v1775 = vunpack.c.h.b16 %v517
    %v1776 = vunpack.c.l.b16 %v518
    %v1777 = vunpack.c.l.b16 %v519
    %v1778 = vunpack.c.h.b16 %v519
    %v1779 = vunpack.c.l.b16 %v520
    %v1780 = vunpack.c.h.b16 %v520
    %v1781 = vunpack.c.l.b16 %v521
    %v1782 = vunpack.c.h.b16 %v521
    %v1783 = vunpack.c.l.b16 %v522
    %v1784 = vunpack.c.l.b16 %v523
    %v1785 = vunpack.c.h.b16 %v523
    %v1786 = vunpack.c.l.b16 %v524
    %v1787 = vunpack.c.h.b16 %v524
    %v1788 = vunpack.c.l.b16 %v525
    %v1789 = vunpack.c.h.b16 %v525
    %v1790 = vunpack.c.l.b16 %v526
    %v1791 = vunpack.c.l.b16 %v527
    %v1792 = vunpack.c.h.b16 %v527
    %v1793 = vunpack.c.l.b16 %v528
    %v1794 = vunpack.c.h.b16 %v528
    %v1795 = vunpack.c.l.b16 %v529
    %v1796 = vunpack.c.h.b16 %v529
    %v1797 = vunpack.c.l.b16 %v530
    %v1798 = vunpack.c.l.b16 %v531
    %v1799 = vunpack.c.h.b16 %v531
    %v1800 = vunpack.c.l.b16 %v532
    %v1801 = vunpack.c.h.b16 %v532
    %v1802 = vunpack.c.l.b16 %v533
    %v1803 = vunpack.c.h.b16 %v533
    %v1804 = vunpack.c.l.b16 %v534
    %v1805 = vunpack.c.l.b16 %v535
    %v1806 = vunpack.c.h.b16 %v535
    %v1807 = vunpack.c.l.b16 %v536
    %v1808 = vunpack.c.h.b16 %v536
    %v1809 = vunpack.c.l.b16 %v537
    %v1810 = vunpack.c.h.b16 %v537
    %v1811 = vunpack.c.l.b16 %v538
    %v1812 = vunpack.c.l.b16 %v539
    %v1813 = vunpack.c.h.b16 %v539
    %v1814 = vunpack.c.l.b16 %v540
    %v1815 = vunpack.c.h.b16 %v540
    %v1816 = vunpack.c.l.b16 %v541
    %v1817 = vunpack.c.h.b16 %v541
    %v1818 = vunpack.c.l.b16 %v542
    %v1819 = vunpack.c.l.b16 %v543
    %v1820 = vunpack.c.h.b16 %v543
    %v1821 = vunpack.c.l.b16 %v544
    %v1822 = vunpack.c.h.b16 %v544
    %v1823 = vunpack.c.l.b16 %v545
    %v1824 = vunpack.c.h.b16 %v545
    %v1825 = vunpack.c.l.b16 %v546
    %v1826 = vunpack.c.l.b16 %v547
    %v1827 = vunpack.c.h.b16 %v547
    %v1828 = vunpack.c.l.b16 %v548
    %v1829 = vunpack.c.h.b16 %v548
    %v1830 = vunpack.c.l.b16 %v549
    %v1831 = vunpack.c.h.b16 %v549
    %v1832 = vunpack.c.l.b16 %v550
    %v1833 = vunpack.c.l.b16 %v551
    %v1834 = vunpack.c.h.b16 %v551
    %v1835 = vunpack.c.l.b16 %v552
    %v1836 = vunpack.c.h.b16 %v552
    %v1837 = vunpack.c.l.b16 %v553
    %v1838 = vunpack.c.h.b16 %v553
    %v1839 = vunpack.c.l.b16 %v554
    %v1840 = vunpack.c.l.b16 %v555
    %v1841 = vunpack.c.h.b16 %v555
    %v1842 = vunpack.c.l.b16 %v556
    %v1843 = vunpack.c.h.b16 %v556
    %v1844 = vunpack.c.l.b16 %v557
    %v1845 = vunpack.c.h.b16 %v557
    %v1846 = vunpack.c.l.b16 %v558
    %v1847 = vunpack.c.l.b16 %v559
    %v1848 = vunpack.c.h.b16 %v559
    %v1849 = vunpack.c.l.b16 %v560
    %v1850 = vunpack.c.h.b16 %v560
    %v1851 = vunpack.c.l.b16 %v561
    %v1852 = vunpack.c.h.b16 %v561
    %v1853 = vunpack.c.l.b16 %v562
    %v1854 = vunpack.c.l.b16 %v563
    %v1855 = vunpack.c.h.b16 %v563
    %v1856 = vunpack.c.l.b16 %v564
    %v1857 = vunpack.c.h.b16 %v564
    %v1858 = vunpack.c.l.b16 %v565
    %v1859 = vunpack.c.h.b16 %v565
    %v1860 = vunpack.c.l.b16 %v566
    %v1861 = vpack.c.b16 %v1084, %v1077
    %v1862 = vpack.c.b16 %v1085, %v1078
    %v1863 = vpack.c.b16 %v1086, %v1079
    %v1864 = vpack.c.b16 %v1087, %v1080
    %v1865 = vpack.c.b16 %v1088, %v1081
    %v1866 = vpack.c.b16 %v1089, %v1082
    %v1867 = vpack.c.b16 %v1090, %v1083
    %v1868 = vpack.c.b16 %v1098, %v1091
    %v1869 = vpack.c.b16 %v1099, %v1092
    %v1870 = vpack.c.b16 %v1100, %v1093
    %v1871 = vpack.c.b16 %v1101, %v1094
    %v1872 = vpack.c.b16 %v1102, %v1095
    %v1873 = vpack.c.b16 %v1103, %v1096
    %v1874 = vpack.c.b16 %v1104, %v1097
    %v1875 = vpack.c.b16 %v1112, %v1105
    %v1876 = vpack.c.b16 %v1113, %v1106
    %v1877 = vpack.c.b16 %v1114, %v1107
    %v1878 = vpack.c.b16 %v1115, %v1108
    %v1879 = vpack.c.b16 %v1116, %v1109
    %v1880 = vpack.c.b16 %v1117, %v1110
    %v1881 = vpack.c.b16 %v1118, %v1111
    %v1882 = vpack.c.b16 %v1126, %v1119
    %v1883 = vpack.c.b16 %v1127, %v1120
    %v1884 = vpack.c.b16 %v1128, %v1121
    %v1885 = vpack.c.b16 %v1129, %v1122
    %v1886 = vpack.c.b16 %v1130, %v1123
    %v1887 = vpack.c.b16 %v1131, %v1124
    %v1888 = vpack.c.b16 %v1132, %v1125
    %v1889 = vpack.c.b16 %v1140, %v1133
    %v1890 = vpack.c.b16 %v1141, %v1134
    %v1891 = vpack.c.b16 %v1142, %v1135
    %v1892 = vpack.c.b16 %v1143, %v1136
    %v1893 = vpack.c.b16 %v1144, %v1137
    %v1894 = vpack.c.b16 %v1145, %v1138
    %v1895 = vpack.c.b16 %v1146, %v1139
    %v1896 = vpack.c.b16 %v1154, %v1147
    %v1897 = vpack.c.b16 %v1155, %v1148
    %v1898 = vpack.c.b16 %v1156, %v1149
    %v1899 = vpack.c.b16 %v1157, %v1150
    %v1900 = vpack.c.b16 %v1158, %v1151
    %v1901 = vpack.c.b16 %v1159, %v1152
    %v1902 = vpack.c.b16 %v1160, %v1153
    %v1903 = vpack.c.b16 %v1168, %v1161
    %v1904 = vpack.c.b16 %v1169, %v1162
    %v1905 = vpack.c.b16 %v1170, %v1163
    %v1906 = vpack.c.b16 %v1171, %v1164
    %v1907 = vpack.c.b16 %v1172, %v1165
    %v1908 = vpack.c.b16 %v1173, %v1166
    %v1909 = vpack.c.b16 %v1174, %v1167
    %v1910 = vpack.c.b16 %v1182, %v1175
    %v1911 = vpack.c.b16 %v1183, %v1176
    %v1912 = vpack.c.b16 %v1184, %v1177
    %v1913 = vpack.c.b16 %v1185, %v1178
    %v1914 = vpack.c.b16 %v1186, %v1179
    %v1915 = vpack.c.b16 %v1187, %v1180
    %v1916 = vpack.c.b16 %v1188, %v1181
    %v1917 = vpack.c.b16 %v1196, %v1189
    %v1918 = vpack.c.b16 %v1197, %v1190
    %v1919 = vpack.c.b16 %v1198, %v1191
    %v1920 = vpack.c.b16 %v1199, %v1192
    %v1921 = vpack.c.b16 %v1200, %v1193
    %v1922 = vpack.c.b16 %v1201, %v1194
    %v1923 = vpack.c.b16 %v1202, %v1195
    %v1924 = vpack.c.b16 %v1210, %v1203
    %v1925 = vpack.c.b16 %v1211, %v1204
    %v1926 = vpack.c.b16 %v1212, %v1205
    %v1927 = vpack.c.b16 %v1213, %v1206
    %v1928 = vpack.c.b16 %v1214, %v1207
    %v1929 = vpack.c.b16 %v1215, %v1208
    %v1930 = vpack.c.b16 %v1216, %v1209
    %v1931 = vpack.c.b16 %v1224, %v1217
    %v1932 = vpack.c.b16 %v1225, %v1218
    %v1933 = vpack.c.b16 %v1226, %v1219
    %v1934 = vpack.c.b16 %v1227, %v1220
    %v1935 = vpack.c.b16 %v1228, %v1221
    %v1936 = vpack.c.b16 %v1229, %v1222
    %v1937 = vpack.c.b16 %v1230, %v1223
    %v1938 = vpack.c.b16 %v1238, %v1231
    %v1939 = vpack.c.b16 %v1239, %v1232
    %v1940 = vpack.c.b16 %v1240, %v1233
    %v1941 = vpack.c.b16 %v1241, %v1234
    %v1942 = vpack.c.b16 %v1242, %v1235
    %v1943 = vpack.c.b16 %v1243, %v1236
    %v1944 = vpack.c.b16 %v1244, %v1237
    %v1945 = vpack.c.b16 %v1252, %v1245
    %v1946 = vpack.c.b16 %v1253, %v1246
    %v1947 = vpack.c.b16 %v1254, %v1247
    %v1948 = vpack.c.b16 %v1255, %v1248
    %v1949 = vpack.c.b16 %v1256, %v1249
    %v1950 = vpack.c.b16 %v1257, %v1250
    %v1951 = vpack.c.b16 %v1258, %v1251
    %v1952 = vpack.c.b16 %v1266, %v1259
    %v1953 = vpack.c.b16 %v1267, %v1260
    %v1954 = vpack.c.b16 %v1268, %v1261
    %v1955 = vpack.c.b16 %v1269, %v1262
    %v1956 = vpack.c.b16 %v1270, %v1263
    %v1957 = vpack.c.b16 %v1271, %v1264
    %v1958 = vpack.c.b16 %v1272, %v1265
    %v1959 = vpack.c.b16 %v1280, %v1273
    %v1960 = vpack.c.b16 %v1281, %v1274
    %v1961 = vpack.c.b16 %v1282, %v1275
    %v1962 = vpack.c.b16 %v1283, %v1276
    %v1963 = vpack.c.b16 %v1284, %v1277
    %v1964 = vpack.c.b16 %v1285, %v1278
    %v1965 = vpack.c.b16 %v1286, %v1279
    %v1966 = vpack.c.b16 %v1294, %v1287
    %v1967 = vpack.c.b16 %v1295, %v1288
    %v1968 = vpack.c.b16 %v1296, %v1289
    %v1969 = vpack.c.b16 %v1297, %v1290
    %v1970 = vpack.c.b16 %v1298, %v1291
    %v1971 = vpack.c.b16 %v1299, %v1292
    %v1972 = vpack.c.b16 %v1300, %v1293
    %v1973 = vpack.c.b16 %v1308, %v1301
    %v1974 = vpack.c.b16 %v1309, %v1302
    %v1975 = vpack.c.b16 %v1310, %v1303
    %v1976 = vpack.c.b16 %v1311, %v1304
    %v1977 = vpack.c.b16 %v1312, %v1305
    %v1978 = vpack.c.b16 %v1313, %v1306
    %v1979 = vpack.c.b16 %v1314, %v1307
    %v1980 = vpack.c.b16 %v1322, %v1315
    %v1981 = vpack.c.b16 %v1323, %v1316
    %v1982 = vpack.c.b16 %v1324, %v1317
    %v1983 = vpack.c.b16 %v1325, %v1318
    %v1984 = vpack.c.b16 %v1326, %v1319
    %v1985 = vpack.c.b16 %v1327, %v1320
    %v1986 = vpack.c.b16 %v1328, %v1321
    %v1987 = vpack.c.b16 %v1336, %v1329
    %v1988 = vpack.c.b16 %v1337, %v1330
    %v1989 = vpack.c.b16 %v1338, %v1331
    %v1990 = vpack.c.b16 %v1339, %v1332
    %v1991 = vpack.c.b16 %v1340, %v1333
    %v1992 = vpack.c.b16 %v1341, %v1334
    %v1993 = vpack.c.b16 %v1342, %v1335
    %v1994 = vpack.c.b16 %v1350, %v1343
    %v1995 = vpack.c.b16 %v1351, %v1344
    %v1996 = vpack.c.b16 %v1352, %v1345
    %v1997 = vpack.c.b16 %v1353, %v1346
    %v1998 = vpack.c.b16 %v1354, %v1347
    %v1999 = vpack.c.b16 %v1355, %v1348
    %v2000 = vpack.c.b16 %v1356, %v1349
    %v2001 = vpack.c.b16 %v1364, %v1357
    %v2002 = vpack.c.b16 %v1365, %v1358
    %v2003 = vpack.c.b16 %v1366, %v1359
    %v2004 = vpack.c.b16 %v1367, %v1360
    %v2005 = vpack.c.b16 %v1368, %v1361
    %v2006 = vpack.c.b16 %v1369, %v1362
    %v2007 = vpack.c.b16 %v1370, %v1363
    %v2008 = vpack.c.b16 %v1378, %v1371
    %v2009 = vpack.c.b16 %v1379, %v1372
    %v2010 = vpack.c.b16 %v1380, %v1373
    %v2011 = vpack.c.b16 %v1381, %v1374
    %v2012 = vpack.c.b16 %v1382, %v1375
    %v2013 = vpack.c.b16 %v1383, %v1376
    %v2014 = vpack.c.b16 %v1384, %v1377
    %v2015 = vpack.c.b16 %v1392, %v1385
    %v2016 = vpack.c.b16 %v1393, %v1386
    %v2017 = vpack.c.b16 %v1394, %v1387
    %v2018 = vpack.c.b16 %v1395, %v1388
    %v2019 = vpack.c.b16 %v1396, %v1389
    %v2020 = vpack.c.b16 %v1397, %v1390
    %v2021 = vpack.c.b16 %v1398, %v1391
    %v2022 = vpack.c.b16 %v1406, %v1399
    %v2023 = vpack.c.b16 %v1407, %v1400
    %v2024 = vpack.c.b16 %v1408, %v1401
    %v2025 = vpack.c.b16 %v1409, %v1402
    %v2026 = vpack.c.b16 %v1410, %v1403
    %v2027 = vpack.c.b16 %v1411, %v1404
    %v2028 = vpack.c.b16 %v1412, %v1405
    %v2029 = vpack.c.b16 %v1420, %v1413
    %v2030 = vpack.c.b16 %v1421, %v1414
    %v2031 = vpack.c.b16 %v1422, %v1415
    %v2032 = vpack.c.b16 %v1423, %v1416
    %v2033 = vpack.c.b16 %v1424, %v1417
    %v2034 = vpack.c.b16 %v1425, %v1418
    %v2035 = vpack.c.b16 %v1426, %v1419
    %v2036 = vpack.c.b16 %v1434, %v1427
    %v2037 = vpack.c.b16 %v1435, %v1428
    %v2038 = vpack.c.b16 %v1436, %v1429
    %v2039 = vpack.c.b16 %v1437, %v1430
    %v2040 = vpack.c.b16 %v1438, %v1431
    %v2041 = vpack.c.b16 %v1439, %v1432
    %v2042 = vpack.c.b16 %v1440, %v1433
    %v2043 = vpack.c.b16 %v1448, %v1441
    %v2044 = vpack.c.b16 %v1449, %v1442
    %v2045 = vpack.c.b16 %v1450, %v1443
    %v2046 = vpack.c.b16 %v1451, %v1444
    %v2047 = vpack.c.b16 %v1452, %v1445
    %v2048 = vpack.c.b16 %v1453, %v1446
    %v2049 = vpack.c.b16 %v1454, %v1447
    %v2050 = vpack.c.b16 %v1462, %v1455
    %v2051 = vpack.c.b16 %v1463, %v1456
    %v2052 = vpack.c.b16 %v1464, %v1457
    %v2053 = vpack.c.b16 %v1465, %v1458
    %v2054 = vpack.c.b16 %v1466, %v1459
    %v2055 = vpack.c.b16 %v1467, %v1460
    %v2056 = vpack.c.b16 %v1468, %v1461
    %v2057 = vpack.c.b16 %v1476, %v1469
    %v2058 = vpack.c.b16 %v1477, %v1470
    %v2059 = vpack.c.b16 %v1478, %v1471
    %v2060 = vpack.c.b16 %v1479, %v1472
    %v2061 = vpack.c.b16 %v1480, %v1473
    %v2062 = vpack.c.b16 %v1481, %v1474
    %v2063 = vpack.c.b16 %v1482, %v1475
    %v2064 = vpack.c.b16 %v1490, %v1483
    %v2065 = vpack.c.b16 %v1491, %v1484
    %v2066 = vpack.c.b16 %v1492, %v1485
    %v2067 = vpack.c.b16 %v1493, %v1486
    %v2068 = vpack.c.b16 %v1494, %v1487
    %v2069 = vpack.c.b16 %v1495, %v1488
    %v2070 = vpack.c.b16 %v1496, %v1489
    %v2071 = vpack.c.b16 %v1504, %v1497
    %v2072 = vpack.c.b16 %v1505, %v1498
    %v2073 = vpack.c.b16 %v1506, %v1499
    %v2074 = vpack.c.b16 %v1507, %v1500
    %v2075 = vpack.c.b16 %v1508, %v1501
    %v2076 = vpack.c.b16 %v1509, %v1502
    %v2077 = vpack.c.b16 %v1510, %v1503
    %v2078 = vpack.c.b16 %v1518, %v1511
    %v2079 = vpack.c.b16 %v1519, %v1512
    %v2080 = vpack.c.b16 %v1520, %v1513
    %v2081 = vpack.c.b16 %v1521, %v1514
    %v2082 = vpack.c.b16 %v1522, %v1515
    %v2083 = vpack.c.b16 %v1523, %v1516
    %v2084 = vpack.c.b16 %v1524, %v1517
    %v2085 = vpack.c.b16 %v1532, %v1525
    %v2086 = vpack.c.b16 %v1533, %v1526
    %v2087 = vpack.c.b16 %v1534, %v1527
    %v2088 = vpack.c.b16 %v1535, %v1528
    %v2089 = vpack.c.b16 %v1536, %v1529
    %v2090 = vpack.c.b16 %v1537, %v1530
    %v2091 = vpack.c.b16 %v1538, %v1531
    %v2092 = vpack.c.b16 %v1546, %v1539
    %v2093 = vpack.c.b16 %v1547, %v1540
    %v2094 = vpack.c.b16 %v1548, %v1541
    %v2095 = vpack.c.b16 %v1549, %v1542
    %v2096 = vpack.c.b16 %v1550, %v1543
    %v2097 = vpack.c.b16 %v1551, %v1544
    %v2098 = vpack.c.b16 %v1552, %v1545
    %v2099 = vpack.c.b16 %v1560, %v1553
    %v2100 = vpack.c.b16 %v1561, %v1554
    %v2101 = vpack.c.b16 %v1562, %v1555
    %v2102 = vpack.c.b16 %v1563, %v1556
    %v2103 = vpack.c.b16 %v1564, %v1557
    %v2104 = vpack.c.b16 %v1565, %v1558
    %v2105 = vpack.c.b16 %v1566, %v1559
    %v2106 = vpack.c.b16 %v1574, %v1567
    %v2107 = vpack.c.b16 %v1575, %v1568
    %v2108 = vpack.c.b16 %v1576, %v1569
    %v2109 = vpack.c.b16 %v1577, %v1570
    %v2110 = vpack.c.b16 %v1578, %v1571
    %v2111 = vpack.c.b16 %v1579, %v1572
    %v2112 = vpack.c.b16 %v1580, %v1573
    %v2113 = vpack.c.b16 %v1588, %v1581
    %v2114 = vpack.c.b16 %v1589, %v1582
    %v2115 = vpack.c.b16 %v1590, %v1583
    %v2116 = vpack.c.b16 %v1591, %v1584
    %v2117 = vpack.c.b16 %v1592, %v1585
    %v2118 = vpack.c.b16 %v1593, %v1586
    %v2119 = vpack.c.b16 %v1594, %v1587
    %v2120 = vpack.c.b16 %v1602, %v1595
    %v2121 = vpack.c.b16 %v1603, %v1596
    %v2122 = vpack.c.b16 %v1604, %v1597
    %v2123 = vpack.c.b16 %v1605, %v1598
    %v2124 = vpack.c.b16 %v1606, %v1599
    %v2125 = vpack.c.b16 %v1607, %v1600
    %v2126 = vpack.c.b16 %v1608, %v1601
    %v2127 = vpack.c.b16 %v1616, %v1609
    %v2128 = vpack.c.b16 %v1617, %v1610
    %v2129 = vpack.c.b16 %v1618, %v1611
    %v2130 = vpack.c.b16 %v1619, %v1612
    %v2131 = vpack.c.b16 %v1620, %v1613
    %v2132 = vpack.c.b16 %v1621, %v1614
    %v2133 = vpack.c.b16 %v1622, %v1615
    %v2134 = vpack.c.b16 %v1630, %v1623
    %v2135 = vpack.c.b16 %v1631, %v1624
    %v2136 = vpack.c.b16 %v1632, %v1625
    %v2137 = vpack.c.b16 %v1633, %v1626
    %v2138 = vpack.c.b16 %v1634, %v1627
    %v2139 = vpack.c.b16 %v1635, %v1628
    %v2140 = vpack.c.b16 %v1636, %v1629
    %v2141 = vpack.c.b16 %v1644, %v1637
    %v2142 = vpack.c.b16 %v1645, %v1638
    %v2143 = vpack.c.b16 %v1646, %v1639
    %v2144 = vpack.c.b16 %v1647, %v1640
    %v2145 = vpack.c.b16 %v1648, %v1641
    %v2146 = vpack.c.b16 %v1649, %v1642
    %v2147 = vpack.c.b16 %v1650, %v1643
    %v2148 = vpack.c.b16 %v1658, %v1651
    %v2149 = vpack.c.b16 %v1659, %v1652
    %v2150 = vpack.c.b16 %v1660, %v1653
    %v2151 = vpack.c.b16 %v1661, %v1654
    %v2152 = vpack.c.b16 %v1662, %v1655
    %v2153 = vpack.c.b16 %v1663, %v1656
    %v2154 = vpack.c.b16 %v1664, %v1657
    %v2155 = vpack.c.b16 %v1672, %v1665
    %v2156 = vpack.c.b16 %v1673, %v1666
    %v2157 = vpack.c.b16 %v1674, %v1667
    %v2158 = vpack.c.b16 %v1675, %v1668
    %v2159 = vpack.c.b16 %v1676, %v1669
    %v2160 = vpack.c.b16 %v1677, %v1670
    %v2161 = vpack.c.b16 %v1678, %v1671
    %v2162 = vpack.c.b16 %v1686, %v1679
    %v2163 = vpack.c.b16 %v1687, %v1680
    %v2164 = vpack.c.b16 %v1688, %v1681
    %v2165 = vpack.c.b16 %v1689, %v1682
    %v2166 = vpack.c.b16 %v1690, %v1683
    %v2167 = vpack.c.b16 %v1691, %v1684
    %v2168 = vpack.c.b16 %v1692, %v1685
    %v2169 = vpack.c.b16 %v1700, %v1693
    %v2170 = vpack.c.b16 %v1701, %v1694
    %v2171 = vpack.c.b16 %v1702, %v1695
    %v2172 = vpack.c.b16 %v1703, %v1696
    %v2173 = vpack.c.b16 %v1704, %v1697
    %v2174 = vpack.c.b16 %v1705, %v1698
    %v2175 = vpack.c.b16 %v1706, %v1699
    %v2176 = vpack.c.b16 %v1714, %v1707
    %v2177 = vpack.c.b16 %v1715, %v1708
    %v2178 = vpack.c.b16 %v1716, %v1709
    %v2179 = vpack.c.b16 %v1717, %v1710
    %v2180 = vpack.c.b16 %v1718, %v1711
    %v2181 = vpack.c.b16 %v1719, %v1712
    %v2182 = vpack.c.b16 %v1720, %v1713
    %v2183 = vpack.c.b16 %v1728, %v1721
    %v2184 = vpack.c.b16 %v1729, %v1722
    %v2185 = vpack.c.b16 %v1730, %v1723
    %v2186 = vpack.c.b16 %v1731, %v1724
    %v2187 = vpack.c.b16 %v1732, %v1725
    %v2188 = vpack.c.b16 %v1733, %v1726
    %v2189 = vpack.c.b16 %v1734, %v1727
    %v2190 = vpack.c.b16 %v1742, %v1735
    %v2191 = vpack.c.b16 %v1743, %v1736
    %v2192 = vpack.c.b16 %v1744, %v1737
    %v2193 = vpack.c.b16 %v1745, %v1738
    %v2194 = vpack.c.b16 %v1746, %v1739
    %v2195 = vpack.c.b16 %v1747, %v1740
    %v2196 = vpack.c.b16 %v1748, %v1741
    %v2197 = vpack.c.b16 %v1756, %v1749
    %v2198 = vpack.c.b16 %v1757, %v1750
    %v2199 = vpack.c.b16 %v1758, %v1751
    %v2200 = vpack.c.b16 %v1759, %v1752
    %v2201 = vpack.c.b16 %v1760, %v1753
    %v2202 = vpack.c.b16 %v1761, %v1754
    %v2203 = vpack.c.b16 %v1762, %v1755
    %v2204 = vpack.c.b16 %v1770, %v1763
    %v2205 = vpack.c.b16 %v1771, %v1764
    %v2206 = vpack.c.b16 %v1772, %v1765
    %v2207 = vpack.c.b16 %v1773, %v1766
    %v2208 = vpack.c.b16 %v1774, %v1767
    %v2209 = vpack.c.b16 %v1775, %v1768
    %v2210 = vpack.c.b16 %v1776, %v1769
    %v2211 = vpack.c.b16 %v1784, %v1777
    %v2212 = vpack.c.b16 %v1785, %v1778
    %v2213 = vpack.c.b16 %v1786, %v1779
    %v2214 = vpack.c.b16 %v1787, %v1780
    %v2215 = vpack.c.b16 %v1788, %v1781
    %v2216 = vpack.c.b16 %v1789, %v1782
    %v2217 = vpack.c.b16 %v1790, %v1783
    %v2218 = vpack.c.b16 %v1798, %v1791
    %v2219 = vpack.c.b16 %v1799, %v1792
    %v2220 = vpack.c.b16 %v1800, %v1793
    %v2221 = vpack.c.b16 %v1801, %v1794
    %v2222 = vpack.c.b16 %v1802, %v1795
    %v2223 = vpack.c.b16 %v1803, %v1796
    %v2224 = vpack.c.b16 %v1804, %v1797
    %v2225 = vpack.c.b16 %v1812, %v1805
    %v2226 = vpack.c.b16 %v1813, %v1806
    %v2227 = vpack.c.b16 %v1814, %v1807
    %v2228 = vpack.c.b16 %v1815, %v1808
    %v2229 = vpack.c.b16 %v1816, %v1809
    %v2230 = vpack.c.b16 %v1817, %v1810
    %v2231 = vpack.c.b16 %v1818, %v1811
    %v2232 = vpack.c.b16 %v1826, %v1819
    %v2233 = vpack.c.b16 %v1827, %v1820
    %v2234 = vpack.c.b16 %v1828, %v1821
    %v2235 = vpack.c.b16 %v1829, %v1822
    %v2236 = vpack.c.b16 %v1830, %v1823
    %v2237 = vpack.c.b16 %v1831, %v1824
    %v2238 = vpack.c.b16 %v1832, %v1825
    %v2239 = vpack.c.b16 %v1840, %v1833
    %v2240 = vpack.c.b16 %v1841, %v1834
    %v2241 = vpack.c.b16 %v1842, %v1835
    %v2242 = vpack.c.b16 %v1843, %v1836
    %v2243 = vpack.c.b16 %v1844, %v1837
    %v2244 = vpack.c.b16 %v1845, %v1838
    %v2245 = vpack.c.b16 %v1846, %v1839
    %v2246 = vpack.c.b16 %v1854, %v1847
    %v2247 = vpack.c.b16 %v1855, %v1848
    %v2248 = vpack.c.b16 %v1856, %v1849
    %v2249 = vpack.c.b16 %v1857, %v1850
    %v2250 = vpack.c.b16 %v1858, %v1851
    %v2251 = vpack.c.b16 %v1859, %v1852
    %v2252 = vpack.c.b16 %v1860, %v1853
    %2645 = vmatprep.subr.bf16.mxu0 %v1911
    %2646 = vmatpush1.bf16.msra.mxu0 %v1910
    %2647 = vmatprep.subr.bf16.mxu0 %v1904
    %2648 = vmatpush1.bf16.msra.mxu0 %v1903
    %2649 = vmatprep.subr.bf16.mxu0 %v1897
    %2650 = vmatpush1.bf16.msra.mxu0 %v1896
    %2651 = vmatprep.subr.bf16.mxu0 %v1890
    %2652 = vmatpush1.bf16.msra.mxu0 %v1889
    %2653 = vmatprep.subr.bf16.mxu0 %v1883
    %2654 = vmatpush1.bf16.msra.mxu0 %v1882
    %2655 = vmatprep.subr.bf16.mxu0 %v1876
    %2656 = vmatpush1.bf16.msra.mxu0 %v1875
    %2657 = vmatprep.subr.bf16.mxu0 %v1869
    %2658 = vmatpush1.bf16.msra.mxu0 %v1868
    %2659 = vmatprep.subr.bf16.mxu0 %v1862
    %2660 = vmatpush1.bf16.msra.mxu0 %v1861
    %2661 = vmatprep.subr.bf16.mxu0 %v1967
    %2662 = vmatpush2.bf16.msra.mxu0 %v1966
    %2663 = vmatprep.subr.bf16.mxu0 %v1960
    %2664 = vmatpush2.bf16.msra.mxu0 %v1959
    %2665 = vmatprep.subr.bf16.mxu0 %v1953
    %2666 = vmatpush2.bf16.msra.mxu0 %v1952
    %2667 = vmatprep.subr.bf16.mxu0 %v1946
    %2668 = vmatpush2.bf16.msra.mxu0 %v1945
    %2669 = vmatprep.subr.bf16.mxu0 %v1939
    %2670 = vmatpush2.bf16.msra.mxu0 %v1938
    %2671 = vmatprep.subr.bf16.mxu0 %v1932
    %2672 = vmatpush2.bf16.msra.mxu0 %v1931
    %2673 = vmatprep.subr.bf16.mxu0 %v1925
    %2674 = vmatpush2.bf16.msra.mxu0 %v1924
    %2675 = vmatprep.subr.bf16.mxu0 %v1918
    %2676 = vmatpush2.bf16.msra.mxu0 %v1917
    %2677 = vmatprep.mubr.bf16.mxu0 %v616
    %2678 = vmatmul.mubr.bf16.gmra.mxu0 %v615
    %v2679 = vpop.f32.mrf.mxu0
    %v2680 = vadd.f32 %v572, %v2679
    %v2681 = vpop.f32.mrf.mxu0
    %v2682 = vadd.f32 %v576, %v2681
    %v2683 = vpop.f32.mrf.mxu0
    %v2684 = vpop.f32.mrf.mxu0
    %2685 = vdwg.mxu0
    %2686 = vmatprep.subr.bf16.mxu0 %v2023
    %2687 = vmatpush1.bf16.msra.mxu0 %v2022
    %2688 = vmatprep.subr.bf16.mxu0 %v2016
    %2689 = vmatpush1.bf16.msra.mxu0 %v2015
    %2690 = vmatprep.subr.bf16.mxu0 %v2009
    %2691 = vmatpush1.bf16.msra.mxu0 %v2008
    %2692 = vmatprep.subr.bf16.mxu0 %v2002
    %2693 = vmatpush1.bf16.msra.mxu0 %v2001
    %2694 = vmatprep.subr.bf16.mxu0 %v1995
    %2695 = vmatpush1.bf16.msra.mxu0 %v1994
    %2696 = vmatprep.subr.bf16.mxu0 %v1988
    %2697 = vmatpush1.bf16.msra.mxu0 %v1987
    %2698 = vmatprep.subr.bf16.mxu0 %v1981
    %2699 = vmatpush1.bf16.msra.mxu0 %v1980
    %2700 = vmatprep.subr.bf16.mxu0 %v1974
    %2701 = vmatpush1.bf16.msra.mxu0 %v1973
    %2702 = vmatprep.subr.bf16.mxu0 %v2079
    %2703 = vmatpush2.bf16.msra.mxu0 %v2078
    %2704 = vmatprep.subr.bf16.mxu0 %v2072
    %2705 = vmatpush2.bf16.msra.mxu0 %v2071
    %2706 = vmatprep.subr.bf16.mxu0 %v2065
    %2707 = vmatpush2.bf16.msra.mxu0 %v2064
    %2708 = vmatprep.subr.bf16.mxu0 %v2058
    %2709 = vmatpush2.bf16.msra.mxu0 %v2057
    %2710 = vmatprep.subr.bf16.mxu0 %v2051
    %2711 = vmatpush2.bf16.msra.mxu0 %v2050
    %2712 = vmatprep.subr.bf16.mxu0 %v2044
    %2713 = vmatpush2.bf16.msra.mxu0 %v2043
    %2714 = vmatprep.subr.bf16.mxu0 %v2037
    %2715 = vmatpush2.bf16.msra.mxu0 %v2036
    %2716 = vmatprep.subr.bf16.mxu0 %v2030
    %2717 = vmatpush2.bf16.msra.mxu0 %v2029
    %2718 = vmatprep.mubr.bf16.mxu0 %v618
    %2719 = vmatmul.mubr.bf16.gmra.mxu0 %v617
    %v2720 = vpop.f32.mrf.mxu0
    %v2721 = vadd.f32 %v2680, %v2720
    %v2722 = vpop.f32.mrf.mxu0
    %v2723 = vadd.f32 %v2682, %v2722
    %v2724 = vpop.f32.mrf.mxu0
    %v2725 = vpop.f32.mrf.mxu0
    %2726 = vdwg.mxu0
    %2727 = vmatprep.subr.bf16.mxu0 %v2135
    %2728 = vmatpush1.bf16.msra.mxu0 %v2134
    %2729 = vmatprep.subr.bf16.mxu0 %v2128
    %2730 = vmatpush1.bf16.msra.mxu0 %v2127
    %2731 = vmatprep.subr.bf16.mxu0 %v2121
    %2732 = vmatpush1.bf16.msra.mxu0 %v2120
    %2733 = vmatprep.subr.bf16.mxu0 %v2114
    %2734 = vmatpush1.bf16.msra.mxu0 %v2113
    %2735 = vmatprep.subr.bf16.mxu0 %v2107
    %2736 = vmatpush1.bf16.msra.mxu0 %v2106
    %2737 = vmatprep.subr.bf16.mxu0 %v2100
    %2738 = vmatpush1.bf16.msra.mxu0 %v2099
    %2739 = vmatprep.subr.bf16.mxu0 %v2093
    %2740 = vmatpush1.bf16.msra.mxu0 %v2092
    %2741 = vmatprep.subr.bf16.mxu0 %v2086
    %2742 = vmatpush1.bf16.msra.mxu0 %v2085
    %2743 = vmatprep.subr.bf16.mxu0 %v2191
    %2744 = vmatpush2.bf16.msra.mxu0 %v2190
    %2745 = vmatprep.subr.bf16.mxu0 %v2184
    %2746 = vmatpush2.bf16.msra.mxu0 %v2183
    %2747 = vmatprep.subr.bf16.mxu0 %v2177
    %2748 = vmatpush2.bf16.msra.mxu0 %v2176
    %2749 = vmatprep.subr.bf16.mxu0 %v2170
    %2750 = vmatpush2.bf16.msra.mxu0 %v2169
    %2751 = vmatprep.subr.bf16.mxu0 %v2163
    %2752 = vmatpush2.bf16.msra.mxu0 %v2162
    %2753 = vmatprep.subr.bf16.mxu0 %v2156
    %2754 = vmatpush2.bf16.msra.mxu0 %v2155
    %2755 = vmatprep.subr.bf16.mxu0 %v2149
    %2756 = vmatpush2.bf16.msra.mxu0 %v2148
    %2757 = vmatprep.subr.bf16.mxu0 %v2142
    %2758 = vmatpush2.bf16.msra.mxu0 %v2141
    %2759 = vmatprep.mubr.bf16.mxu0 %v620
    %2760 = vmatmul.mubr.bf16.gmra.mxu0 %v619
    %v2761 = vpop.f32.mrf.mxu0
    %v2762 = vadd.f32 %v2721, %v2761
    %v2763 = vpop.f32.mrf.mxu0
    %v2764 = vadd.f32 %v2723, %v2763
    %v2765 = vpop.f32.mrf.mxu0
    %v2766 = vpop.f32.mrf.mxu0
    %2767 = vdwg.mxu0
    %2768 = vmatprep.subr.bf16.mxu0 %v2247
    %2769 = vmatpush1.bf16.msra.mxu0 %v2246
    %2770 = vmatprep.subr.bf16.mxu0 %v2240
    %2771 = vmatpush1.bf16.msra.mxu0 %v2239
    %2772 = vmatprep.subr.bf16.mxu0 %v2233
    %2773 = vmatpush1.bf16.msra.mxu0 %v2232
    %2774 = vmatprep.subr.bf16.mxu0 %v2226
    %2775 = vmatpush1.bf16.msra.mxu0 %v2225
    %2776 = vmatprep.subr.bf16.mxu0 %v2219
    %2777 = vmatpush1.bf16.msra.mxu0 %v2218
    %2778 = vmatprep.subr.bf16.mxu0 %v2212
    %2779 = vmatpush1.bf16.msra.mxu0 %v2211
    %2780 = vmatprep.subr.bf16.mxu0 %v2205
    %2781 = vmatpush1.bf16.msra.mxu0 %v2204
    %2782 = vmatprep.subr.bf16.mxu0 %v2198
    %2783 = vmatpush1.bf16.msra.mxu0 %v2197
    %2784 = vmatprep.subr.bf16.mxu0 0
    %2785 = vmatpush2.bf16.msra.mxu0 0
    %2786 = vmatprep.subr.bf16.mxu0 0
    %2787 = vmatpush2.bf16.msra.mxu0 0
    %2788 = vmatprep.subr.bf16.mxu0 0
    %2789 = vmatpush2.bf16.msra.mxu0 0
    %2790 = vmatprep.subr.bf16.mxu0 0
    %2791 = vmatpush2.bf16.msra.mxu0 0
    %2792 = vmatprep.subr.bf16.mxu0 0
    %2793 = vmatpush2.bf16.msra.mxu0 0
    %2794 = vmatprep.subr.bf16.mxu0 0
    %2795 = vmatpush2.bf16.msra.mxu0 0
    %2796 = vmatprep.subr.bf16.mxu0 0
    %2797 = vmatpush2.bf16.msra.mxu0 0
    %2798 = vmatprep.subr.bf16.mxu0 0
    %2799 = vmatpush2.bf16.msra.mxu0 0
    %2800 = vmatprep.mubr.bf16.mxu0 0
    %2801 = vmatmul.mubr.bf16.gmra.mxu0 %v621
    %v2802 = vpop.f32.mrf.mxu0
    %v2803 = vadd.f32 %v2762, %v2802
    %v2804 = vpop.f32.mrf.mxu0
    %v2805 = vadd.f32 %v2764, %v2804
    %v2806 = vpop.f32.mrf.mxu0
    %v2807 = vpop.f32.mrf.mxu0
    %2808 = vdwg.mxu0
    %2809 = vmatprep.subr.bf16.mxu0 %v1913
    %2810 = vmatpush1.bf16.msra.mxu0 %v1912
    %2811 = vmatprep.subr.bf16.mxu0 %v1906
    %2812 = vmatpush1.bf16.msra.mxu0 %v1905
    %2813 = vmatprep.subr.bf16.mxu0 %v1899
    %2814 = vmatpush1.bf16.msra.mxu0 %v1898
    %2815 = vmatprep.subr.bf16.mxu0 %v1892
    %2816 = vmatpush1.bf16.msra.mxu0 %v1891
    %2817 = vmatprep.subr.bf16.mxu0 %v1885
    %2818 = vmatpush1.bf16.msra.mxu0 %v1884
    %2819 = vmatprep.subr.bf16.mxu0 %v1878
    %2820 = vmatpush1.bf16.msra.mxu0 %v1877
    %2821 = vmatprep.subr.bf16.mxu0 %v1871
    %2822 = vmatpush1.bf16.msra.mxu0 %v1870
    %2823 = vmatprep.subr.bf16.mxu0 %v1864
    %2824 = vmatpush1.bf16.msra.mxu0 %v1863
    %2825 = vmatprep.subr.bf16.mxu0 %v1969
    %2826 = vmatpush2.bf16.msra.mxu0 %v1968
    %2827 = vmatprep.subr.bf16.mxu0 %v1962
    %2828 = vmatpush2.bf16.msra.mxu0 %v1961
    %2829 = vmatprep.subr.bf16.mxu0 %v1955
    %2830 = vmatpush2.bf16.msra.mxu0 %v1954
    %2831 = vmatprep.subr.bf16.mxu0 %v1948
    %2832 = vmatpush2.bf16.msra.mxu0 %v1947
    %2833 = vmatprep.subr.bf16.mxu0 %v1941
    %2834 = vmatpush2.bf16.msra.mxu0 %v1940
    %2835 = vmatprep.subr.bf16.mxu0 %v1934
    %2836 = vmatpush2.bf16.msra.mxu0 %v1933
    %2837 = vmatprep.subr.bf16.mxu0 %v1927
    %2838 = vmatpush2.bf16.msra.mxu0 %v1926
    %2839 = vmatprep.subr.bf16.mxu0 %v1920
    %2840 = vmatpush2.bf16.msra.mxu0 %v1919
    %2841 = vmatprep.mubr.bf16.mxu0 %v616
    %2842 = vmatmul.mubr.bf16.gmra.mxu0 %v615
    %v2843 = vpop.f32.mrf.mxu0
    %v2844 = vadd.f32 %v580, %v2843
    %v2845 = vpop.f32.mrf.mxu0
    %v2846 = vadd.f32 %v584, %v2845
    %v2847 = vpop.f32.mrf.mxu0
    %v2848 = vpop.f32.mrf.mxu0
    %2849 = vdwg.mxu0
    %2850 = vmatprep.subr.bf16.mxu0 %v2025
    %2851 = vmatpush1.bf16.msra.mxu0 %v2024
    %2852 = vmatprep.subr.bf16.mxu0 %v2018
    %2853 = vmatpush1.bf16.msra.mxu0 %v2017
    %2854 = vmatprep.subr.bf16.mxu0 %v2011
    %2855 = vmatpush1.bf16.msra.mxu0 %v2010
    %2856 = vmatprep.subr.bf16.mxu0 %v2004
    %2857 = vmatpush1.bf16.msra.mxu0 %v2003
    %2858 = vmatprep.subr.bf16.mxu0 %v1997
    %2859 = vmatpush1.bf16.msra.mxu0 %v1996
    %2860 = vmatprep.subr.bf16.mxu0 %v1990
    %2861 = vmatpush1.bf16.msra.mxu0 %v1989
    %2862 = vmatprep.subr.bf16.mxu0 %v1983
    %2863 = vmatpush1.bf16.msra.mxu0 %v1982
    %2864 = vmatprep.subr.bf16.mxu0 %v1976
    %2865 = vmatpush1.bf16.msra.mxu0 %v1975
    %2866 = vmatprep.subr.bf16.mxu0 %v2081
    %2867 = vmatpush2.bf16.msra.mxu0 %v2080
    %2868 = vmatprep.subr.bf16.mxu0 %v2074
    %2869 = vmatpush2.bf16.msra.mxu0 %v2073
    %2870 = vmatprep.subr.bf16.mxu0 %v2067
    %2871 = vmatpush2.bf16.msra.mxu0 %v2066
    %2872 = vmatprep.subr.bf16.mxu0 %v2060
    %2873 = vmatpush2.bf16.msra.mxu0 %v2059
    %2874 = vmatprep.subr.bf16.mxu0 %v2053
    %2875 = vmatpush2.bf16.msra.mxu0 %v2052
    %2876 = vmatprep.subr.bf16.mxu0 %v2046
    %2877 = vmatpush2.bf16.msra.mxu0 %v2045
    %2878 = vmatprep.subr.bf16.mxu0 %v2039
    %2879 = vmatpush2.bf16.msra.mxu0 %v2038
    %2880 = vmatprep.subr.bf16.mxu0 %v2032
    %2881 = vmatpush2.bf16.msra.mxu0 %v2031
    %2882 = vmatprep.mubr.bf16.mxu0 %v618
    %2883 = vmatmul.mubr.bf16.gmra.mxu0 %v617
    %v2884 = vpop.f32.mrf.mxu0
    %v2885 = vadd.f32 %v2844, %v2884
    %v2886 = vpop.f32.mrf.mxu0
    %v2887 = vadd.f32 %v2846, %v2886
    %v2888 = vpop.f32.mrf.mxu0
    %v2889 = vpop.f32.mrf.mxu0
    %2890 = vdwg.mxu0
    %2891 = vmatprep.subr.bf16.mxu0 %v2137
    %2892 = vmatpush1.bf16.msra.mxu0 %v2136
    %2893 = vmatprep.subr.bf16.mxu0 %v2130
    %2894 = vmatpush1.bf16.msra.mxu0 %v2129
    %2895 = vmatprep.subr.bf16.mxu0 %v2123
    %2896 = vmatpush1.bf16.msra.mxu0 %v2122
    %2897 = vmatprep.subr.bf16.mxu0 %v2116
    %2898 = vmatpush1.bf16.msra.mxu0 %v2115
    %2899 = vmatprep.subr.bf16.mxu0 %v2109
    %2900 = vmatpush1.bf16.msra.mxu0 %v2108
    %2901 = vmatprep.subr.bf16.mxu0 %v2102
    %2902 = vmatpush1.bf16.msra.mxu0 %v2101
    %2903 = vmatprep.subr.bf16.mxu0 %v2095
    %2904 = vmatpush1.bf16.msra.mxu0 %v2094
    %2905 = vmatprep.subr.bf16.mxu0 %v2088
    %2906 = vmatpush1.bf16.msra.mxu0 %v2087
    %2907 = vmatprep.subr.bf16.mxu0 %v2193
    %2908 = vmatpush2.bf16.msra.mxu0 %v2192
    %2909 = vmatprep.subr.bf16.mxu0 %v2186
    %2910 = vmatpush2.bf16.msra.mxu0 %v2185
    %2911 = vmatprep.subr.bf16.mxu0 %v2179
    %2912 = vmatpush2.bf16.msra.mxu0 %v2178
    %2913 = vmatprep.subr.bf16.mxu0 %v2172
    %2914 = vmatpush2.bf16.msra.mxu0 %v2171
    %2915 = vmatprep.subr.bf16.mxu0 %v2165
    %2916 = vmatpush2.bf16.msra.mxu0 %v2164
    %2917 = vmatprep.subr.bf16.mxu0 %v2158
    %2918 = vmatpush2.bf16.msra.mxu0 %v2157
    %2919 = vmatprep.subr.bf16.mxu0 %v2151
    %2920 = vmatpush2.bf16.msra.mxu0 %v2150
    %2921 = vmatprep.subr.bf16.mxu0 %v2144
    %2922 = vmatpush2.bf16.msra.mxu0 %v2143
    %2923 = vmatprep.mubr.bf16.mxu0 %v620
    %2924 = vmatmul.mubr.bf16.gmra.mxu0 %v619
    %v2925 = vpop.f32.mrf.mxu0
    %v2926 = vadd.f32 %v2885, %v2925
    %v2927 = vpop.f32.mrf.mxu0
    %v2928 = vadd.f32 %v2887, %v2927
    %v2929 = vpop.f32.mrf.mxu0
    %v2930 = vpop.f32.mrf.mxu0
    %2931 = vdwg.mxu0
    %2932 = vmatprep.subr.bf16.mxu0 %v2249
    %2933 = vmatpush1.bf16.msra.mxu0 %v2248
    %2934 = vmatprep.subr.bf16.mxu0 %v2242
    %2935 = vmatpush1.bf16.msra.mxu0 %v2241
    %2936 = vmatprep.subr.bf16.mxu0 %v2235
    %2937 = vmatpush1.bf16.msra.mxu0 %v2234
    %2938 = vmatprep.subr.bf16.mxu0 %v2228
    %2939 = vmatpush1.bf16.msra.mxu0 %v2227
    %2940 = vmatprep.subr.bf16.mxu0 %v2221
    %2941 = vmatpush1.bf16.msra.mxu0 %v2220
    %2942 = vmatprep.subr.bf16.mxu0 %v2214
    %2943 = vmatpush1.bf16.msra.mxu0 %v2213
    %2944 = vmatprep.subr.bf16.mxu0 %v2207
    %2945 = vmatpush1.bf16.msra.mxu0 %v2206
    %2946 = vmatprep.subr.bf16.mxu0 %v2200
    %2947 = vmatpush1.bf16.msra.mxu0 %v2199
    %2948 = vmatprep.subr.bf16.mxu0 0
    %2949 = vmatpush2.bf16.msra.mxu0 0
    %2950 = vmatprep.subr.bf16.mxu0 0
    %2951 = vmatpush2.bf16.msra.mxu0 0
    %2952 = vmatprep.subr.bf16.mxu0 0
    %2953 = vmatpush2.bf16.msra.mxu0 0
    %2954 = vmatprep.subr.bf16.mxu0 0
    %2955 = vmatpush2.bf16.msra.mxu0 0
    %2956 = vmatprep.subr.bf16.mxu0 0
    %2957 = vmatpush2.bf16.msra.mxu0 0
    %2958 = vmatprep.subr.bf16.mxu0 0
    %2959 = vmatpush2.bf16.msra.mxu0 0
    %2960 = vmatprep.subr.bf16.mxu0 0
    %2961 = vmatpush2.bf16.msra.mxu0 0
    %2962 = vmatprep.subr.bf16.mxu0 0
    %2963 = vmatpush2.bf16.msra.mxu0 0
    %2964 = vmatprep.mubr.bf16.mxu0 0
    %2965 = vmatmul.mubr.bf16.gmra.mxu0 %v621
    %v2966 = vpop.f32.mrf.mxu0
    %v2967 = vadd.f32 %v2926, %v2966
    %v2968 = vpop.f32.mrf.mxu0
    %v2969 = vadd.f32 %v2928, %v2968
    %v2970 = vpop.f32.mrf.mxu0
    %v2971 = vpop.f32.mrf.mxu0
    %2972 = vdwg.mxu0
    %2973 = vmatprep.subr.bf16.mxu0 %v1915
    %2974 = vmatpush1.bf16.msra.mxu0 %v1914
    %2975 = vmatprep.subr.bf16.mxu0 %v1908
    %2976 = vmatpush1.bf16.msra.mxu0 %v1907
    %2977 = vmatprep.subr.bf16.mxu0 %v1901
    %2978 = vmatpush1.bf16.msra.mxu0 %v1900
    %2979 = vmatprep.subr.bf16.mxu0 %v1894
    %2980 = vmatpush1.bf16.msra.mxu0 %v1893
    %2981 = vmatprep.subr.bf16.mxu0 %v1887
    %2982 = vmatpush1.bf16.msra.mxu0 %v1886
    %2983 = vmatprep.subr.bf16.mxu0 %v1880
    %2984 = vmatpush1.bf16.msra.mxu0 %v1879
    %2985 = vmatprep.subr.bf16.mxu0 %v1873
    %2986 = vmatpush1.bf16.msra.mxu0 %v1872
    %2987 = vmatprep.subr.bf16.mxu0 %v1866
    %2988 = vmatpush1.bf16.msra.mxu0 %v1865
    %2989 = vmatprep.subr.bf16.mxu0 %v1971
    %2990 = vmatpush2.bf16.msra.mxu0 %v1970
    %2991 = vmatprep.subr.bf16.mxu0 %v1964
    %2992 = vmatpush2.bf16.msra.mxu0 %v1963
    %2993 = vmatprep.subr.bf16.mxu0 %v1957
    %2994 = vmatpush2.bf16.msra.mxu0 %v1956
    %2995 = vmatprep.subr.bf16.mxu0 %v1950
    %2996 = vmatpush2.bf16.msra.mxu0 %v1949
    %2997 = vmatprep.subr.bf16.mxu0 %v1943
    %2998 = vmatpush2.bf16.msra.mxu0 %v1942
    %2999 = vmatprep.subr.bf16.mxu0 %v1936
    %3000 = vmatpush2.bf16.msra.mxu0 %v1935
    %3001 = vmatprep.subr.bf16.mxu0 %v1929
    %3002 = vmatpush2.bf16.msra.mxu0 %v1928
    %3003 = vmatprep.subr.bf16.mxu0 %v1922
    %3004 = vmatpush2.bf16.msra.mxu0 %v1921
    %3005 = vmatprep.mubr.bf16.mxu0 %v616
    %3006 = vmatmul.mubr.bf16.gmra.mxu0 %v615
    %v3007 = vpop.f32.mrf.mxu0
    %v3008 = vadd.f32 %v588, %v3007
    %v3009 = vpop.f32.mrf.mxu0
    %v3010 = vadd.f32 %v592, %v3009
    %v3011 = vpop.f32.mrf.mxu0
    %v3012 = vpop.f32.mrf.mxu0
    %3013 = vdwg.mxu0
    %3014 = vmatprep.subr.bf16.mxu0 %v2027
    %3015 = vmatpush1.bf16.msra.mxu0 %v2026
    %3016 = vmatprep.subr.bf16.mxu0 %v2020
    %3017 = vmatpush1.bf16.msra.mxu0 %v2019
    %3018 = vmatprep.subr.bf16.mxu0 %v2013
    %3019 = vmatpush1.bf16.msra.mxu0 %v2012
    %3020 = vmatprep.subr.bf16.mxu0 %v2006
    %3021 = vmatpush1.bf16.msra.mxu0 %v2005
    %3022 = vmatprep.subr.bf16.mxu0 %v1999
    %3023 = vmatpush1.bf16.msra.mxu0 %v1998
    %3024 = vmatprep.subr.bf16.mxu0 %v1992
    %3025 = vmatpush1.bf16.msra.mxu0 %v1991
    %3026 = vmatprep.subr.bf16.mxu0 %v1985
    %3027 = vmatpush1.bf16.msra.mxu0 %v1984
    %3028 = vmatprep.subr.bf16.mxu0 %v1978
    %3029 = vmatpush1.bf16.msra.mxu0 %v1977
    %3030 = vmatprep.subr.bf16.mxu0 %v2083
    %3031 = vmatpush2.bf16.msra.mxu0 %v2082
    %3032 = vmatprep.subr.bf16.mxu0 %v2076
    %3033 = vmatpush2.bf16.msra.mxu0 %v2075
    %3034 = vmatprep.subr.bf16.mxu0 %v2069
    %3035 = vmatpush2.bf16.msra.mxu0 %v2068
    %3036 = vmatprep.subr.bf16.mxu0 %v2062
    %3037 = vmatpush2.bf16.msra.mxu0 %v2061
    %3038 = vmatprep.subr.bf16.mxu0 %v2055
    %3039 = vmatpush2.bf16.msra.mxu0 %v2054
    %3040 = vmatprep.subr.bf16.mxu0 %v2048
    %3041 = vmatpush2.bf16.msra.mxu0 %v2047
    %3042 = vmatprep.subr.bf16.mxu0 %v2041
    %3043 = vmatpush2.bf16.msra.mxu0 %v2040
    %3044 = vmatprep.subr.bf16.mxu0 %v2034
    %3045 = vmatpush2.bf16.msra.mxu0 %v2033
    %3046 = vmatprep.mubr.bf16.mxu0 %v618
    %3047 = vmatmul.mubr.bf16.gmra.mxu0 %v617
    %v3048 = vpop.f32.mrf.mxu0
    %v3049 = vadd.f32 %v3008, %v3048
    %v3050 = vpop.f32.mrf.mxu0
    %v3051 = vadd.f32 %v3010, %v3050
    %v3052 = vpop.f32.mrf.mxu0
    %v3053 = vpop.f32.mrf.mxu0
    %3054 = vdwg.mxu0
    %3055 = vmatprep.subr.bf16.mxu0 %v2139
    %3056 = vmatpush1.bf16.msra.mxu0 %v2138
    %3057 = vmatprep.subr.bf16.mxu0 %v2132
    %3058 = vmatpush1.bf16.msra.mxu0 %v2131
    %3059 = vmatprep.subr.bf16.mxu0 %v2125
    %3060 = vmatpush1.bf16.msra.mxu0 %v2124
    %3061 = vmatprep.subr.bf16.mxu0 %v2118
    %3062 = vmatpush1.bf16.msra.mxu0 %v2117
    %3063 = vmatprep.subr.bf16.mxu0 %v2111
    %3064 = vmatpush1.bf16.msra.mxu0 %v2110
    %3065 = vmatprep.subr.bf16.mxu0 %v2104
    %3066 = vmatpush1.bf16.msra.mxu0 %v2103
    %3067 = vmatprep.subr.bf16.mxu0 %v2097
    %3068 = vmatpush1.bf16.msra.mxu0 %v2096
    %3069 = vmatprep.subr.bf16.mxu0 %v2090
    %3070 = vmatpush1.bf16.msra.mxu0 %v2089
    %3071 = vmatprep.subr.bf16.mxu0 %v2195
    %3072 = vmatpush2.bf16.msra.mxu0 %v2194
    %3073 = vmatprep.subr.bf16.mxu0 %v2188
    %3074 = vmatpush2.bf16.msra.mxu0 %v2187
    %3075 = vmatprep.subr.bf16.mxu0 %v2181
    %3076 = vmatpush2.bf16.msra.mxu0 %v2180
    %3077 = vmatprep.subr.bf16.mxu0 %v2174
    %3078 = vmatpush2.bf16.msra.mxu0 %v2173
    %3079 = vmatprep.subr.bf16.mxu0 %v2167
    %3080 = vmatpush2.bf16.msra.mxu0 %v2166
    %3081 = vmatprep.subr.bf16.mxu0 %v2160
    %3082 = vmatpush2.bf16.msra.mxu0 %v2159
    %3083 = vmatprep.subr.bf16.mxu0 %v2153
    %3084 = vmatpush2.bf16.msra.mxu0 %v2152
    %3085 = vmatprep.subr.bf16.mxu0 %v2146
    %3086 = vmatpush2.bf16.msra.mxu0 %v2145
    %3087 = vmatprep.mubr.bf16.mxu0 %v620
    %3088 = vmatmul.mubr.bf16.gmra.mxu0 %v619
    %v3089 = vpop.f32.mrf.mxu0
    %v3090 = vadd.f32 %v3049, %v3089
    %v3091 = vpop.f32.mrf.mxu0
    %v3092 = vadd.f32 %v3051, %v3091
    %v3093 = vpop.f32.mrf.mxu0
    %v3094 = vpop.f32.mrf.mxu0
    %3095 = vdwg.mxu0
    %3096 = vmatprep.subr.bf16.mxu0 %v2251
    %3097 = vmatpush1.bf16.msra.mxu0 %v2250
    %3098 = vmatprep.subr.bf16.mxu0 %v2244
    %3099 = vmatpush1.bf16.msra.mxu0 %v2243
    %3100 = vmatprep.subr.bf16.mxu0 %v2237
    %3101 = vmatpush1.bf16.msra.mxu0 %v2236
    %3102 = vmatprep.subr.bf16.mxu0 %v2230
    %3103 = vmatpush1.bf16.msra.mxu0 %v2229
    %3104 = vmatprep.subr.bf16.mxu0 %v2223
    %3105 = vmatpush1.bf16.msra.mxu0 %v2222
    %3106 = vmatprep.subr.bf16.mxu0 %v2216
    %3107 = vmatpush1.bf16.msra.mxu0 %v2215
    %3108 = vmatprep.subr.bf16.mxu0 %v2209
    %3109 = vmatpush1.bf16.msra.mxu0 %v2208
    %3110 = vmatprep.subr.bf16.mxu0 %v2202
    %3111 = vmatpush1.bf16.msra.mxu0 %v2201
    %3112 = vmatprep.subr.bf16.mxu0 0
    %3113 = vmatpush2.bf16.msra.mxu0 0
    %3114 = vmatprep.subr.bf16.mxu0 0
    %3115 = vmatpush2.bf16.msra.mxu0 0
    %3116 = vmatprep.subr.bf16.mxu0 0
    %3117 = vmatpush2.bf16.msra.mxu0 0
    %3118 = vmatprep.subr.bf16.mxu0 0
    %3119 = vmatpush2.bf16.msra.mxu0 0
    %3120 = vmatprep.subr.bf16.mxu0 0
    %3121 = vmatpush2.bf16.msra.mxu0 0
    %3122 = vmatprep.subr.bf16.mxu0 0
    %3123 = vmatpush2.bf16.msra.mxu0 0
    %3124 = vmatprep.subr.bf16.mxu0 0
    %3125 = vmatpush2.bf16.msra.mxu0 0
    %3126 = vmatprep.subr.bf16.mxu0 0
    %3127 = vmatpush2.bf16.msra.mxu0 0
    %3128 = vmatprep.mubr.bf16.mxu0 0
    %3129 = vmatmul.mubr.bf16.gmra.mxu0 %v621
    %v3130 = vpop.f32.mrf.mxu0
    %v3131 = vadd.f32 %v3090, %v3130
    %v3132 = vpop.f32.mrf.mxu0
    %v3133 = vadd.f32 %v3092, %v3132
    %v3134 = vpop.f32.mrf.mxu0
    %v3135 = vpop.f32.mrf.mxu0
    %3136 = vdwg.mxu0
    %3137 = vmatprep.subr.bf16.mxu0 0
    %3138 = vmatpush1.bf16.msra.mxu0 %v1916
    %3139 = vmatprep.subr.bf16.mxu0 0
    %3140 = vmatpush1.bf16.msra.mxu0 %v1909
    %3141 = vmatprep.subr.bf16.mxu0 0
    %3142 = vmatpush1.bf16.msra.mxu0 %v1902
    %3143 = vmatprep.subr.bf16.mxu0 0
    %3144 = vmatpush1.bf16.msra.mxu0 %v1895
    %3145 = vmatprep.subr.bf16.mxu0 0
    %3146 = vmatpush1.bf16.msra.mxu0 %v1888
    %3147 = vmatprep.subr.bf16.mxu0 0
    %3148 = vmatpush1.bf16.msra.mxu0 %v1881
    %3149 = vmatprep.subr.bf16.mxu0 0
    %3150 = vmatpush1.bf16.msra.mxu0 %v1874
    %3151 = vmatprep.subr.bf16.mxu0 0
    %3152 = vmatpush1.bf16.msra.mxu0 %v1867
    %3153 = vmatprep.subr.bf16.mxu0 0
    %3154 = vmatpush2.bf16.msra.mxu0 %v1972
    %3155 = vmatprep.subr.bf16.mxu0 0
    %3156 = vmatpush2.bf16.msra.mxu0 %v1965
    %3157 = vmatprep.subr.bf16.mxu0 0
    %3158 = vmatpush2.bf16.msra.mxu0 %v1958
    %3159 = vmatprep.subr.bf16.mxu0 0
    %3160 = vmatpush2.bf16.msra.mxu0 %v1951
    %3161 = vmatprep.subr.bf16.mxu0 0
    %3162 = vmatpush2.bf16.msra.mxu0 %v1944
    %3163 = vmatprep.subr.bf16.mxu0 0
    %3164 = vmatpush2.bf16.msra.mxu0 %v1937
    %3165 = vmatprep.subr.bf16.mxu0 0
    %3166 = vmatpush2.bf16.msra.mxu0 %v1930
    %3167 = vmatprep.subr.bf16.mxu0 0
    %3168 = vmatpush2.bf16.msra.mxu0 %v1923
    %3169 = vmatprep.mubr.bf16.mxu0 %v616
    %3170 = vmatmul.mubr.bf16.gmra.mxu0 %v615
    %v3171 = vpop.f32.mrf.mxu0
    %v3172 = vadd.f32 %v596, %v3171
    %v3173 = vpop.f32.mrf.mxu0
    %v3174 = vpop.f32.mrf.mxu0
    %v3175 = vpop.f32.mrf.mxu0
    %3176 = vdwg.mxu0
    %3177 = vmatprep.subr.bf16.mxu0 0
    %3178 = vmatpush1.bf16.msra.mxu0 %v2028
    %3179 = vmatprep.subr.bf16.mxu0 0
    %3180 = vmatpush1.bf16.msra.mxu0 %v2021
    %3181 = vmatprep.subr.bf16.mxu0 0
    %3182 = vmatpush1.bf16.msra.mxu0 %v2014
    %3183 = vmatprep.subr.bf16.mxu0 0
    %3184 = vmatpush1.bf16.msra.mxu0 %v2007
    %3185 = vmatprep.subr.bf16.mxu0 0
    %3186 = vmatpush1.bf16.msra.mxu0 %v2000
    %3187 = vmatprep.subr.bf16.mxu0 0
    %3188 = vmatpush1.bf16.msra.mxu0 %v1993
    %3189 = vmatprep.subr.bf16.mxu0 0
    %3190 = vmatpush1.bf16.msra.mxu0 %v1986
    %3191 = vmatprep.subr.bf16.mxu0 0
    %3192 = vmatpush1.bf16.msra.mxu0 %v1979
    %3193 = vmatprep.subr.bf16.mxu0 0
    %3194 = vmatpush2.bf16.msra.mxu0 %v2084
    %3195 = vmatprep.subr.bf16.mxu0 0
    %3196 = vmatpush2.bf16.msra.mxu0 %v2077
    %3197 = vmatprep.subr.bf16.mxu0 0
    %3198 = vmatpush2.bf16.msra.mxu0 %v2070
    %3199 = vmatprep.subr.bf16.mxu0 0
    %3200 = vmatpush2.bf16.msra.mxu0 %v2063
    %3201 = vmatprep.subr.bf16.mxu0 0
    %3202 = vmatpush2.bf16.msra.mxu0 %v2056
    %3203 = vmatprep.subr.bf16.mxu0 0
    %3204 = vmatpush2.bf16.msra.mxu0 %v2049
    %3205 = vmatprep.subr.bf16.mxu0 0
    %3206 = vmatpush2.bf16.msra.mxu0 %v2042
    %3207 = vmatprep.subr.bf16.mxu0 0
    %3208 = vmatpush2.bf16.msra.mxu0 %v2035
    %3209 = vmatprep.mubr.bf16.mxu0 %v618
    %3210 = vmatmul.mubr.bf16.gmra.mxu0 %v617
    %v3211 = vpop.f32.mrf.mxu0
    %v3212 = vadd.f32 %v3172, %v3211
    %v3213 = vpop.f32.mrf.mxu0
    %v3214 = vpop.f32.mrf.mxu0
    %v3215 = vpop.f32.mrf.mxu0
    %3216 = vdwg.mxu0
    %3217 = vmatprep.subr.bf16.mxu0 0
    %3218 = vmatpush1.bf16.msra.mxu0 %v2140
    %3219 = vmatprep.subr.bf16.mxu0 0
    %3220 = vmatpush1.bf16.msra.mxu0 %v2133
    %3221 = vmatprep.subr.bf16.mxu0 0
    %3222 = vmatpush1.bf16.msra.mxu0 %v2126
    %3223 = vmatprep.subr.bf16.mxu0 0
    %3224 = vmatpush1.bf16.msra.mxu0 %v2119
    %3225 = vmatprep.subr.bf16.mxu0 0
    %3226 = vmatpush1.bf16.msra.mxu0 %v2112
    %3227 = vmatprep.subr.bf16.mxu0 0
    %3228 = vmatpush1.bf16.msra.mxu0 %v2105
    %3229 = vmatprep.subr.bf16.mxu0 0
    %3230 = vmatpush1.bf16.msra.mxu0 %v2098
    %3231 = vmatprep.subr.bf16.mxu0 0
    %3232 = vmatpush1.bf16.msra.mxu0 %v2091
    %3233 = vmatprep.subr.bf16.mxu0 0
    %3234 = vmatpush2.bf16.msra.mxu0 %v2196
    %3235 = vmatprep.subr.bf16.mxu0 0
    %3236 = vmatpush2.bf16.msra.mxu0 %v2189
    %3237 = vmatprep.subr.bf16.mxu0 0
    %3238 = vmatpush2.bf16.msra.mxu0 %v2182
    %3239 = vmatprep.subr.bf16.mxu0 0
    %3240 = vmatpush2.bf16.msra.mxu0 %v2175
    %3241 = vmatprep.subr.bf16.mxu0 0
    %3242 = vmatpush2.bf16.msra.mxu0 %v2168
    %3243 = vmatprep.subr.bf16.mxu0 0
    %3244 = vmatpush2.bf16.msra.mxu0 %v2161
    %3245 = vmatprep.subr.bf16.mxu0 0
    %3246 = vmatpush2.bf16.msra.mxu0 %v2154
    %3247 = vmatprep.subr.bf16.mxu0 0
    %3248 = vmatpush2.bf16.msra.mxu0 %v2147
    %3249 = vmatprep.mubr.bf16.mxu0 %v620
    %3250 = vmatmul.mubr.bf16.gmra.mxu0 %v619
    %v3251 = vpop.f32.mrf.mxu0
    %v3252 = vadd.f32 %v3212, %v3251
    %v3253 = vpop.f32.mrf.mxu0
    %v3254 = vpop.f32.mrf.mxu0
    %v3255 = vpop.f32.mrf.mxu0
    %3256 = vdwg.mxu0
    %3257 = vmatprep.subr.bf16.mxu0 0
    %3258 = vmatpush1.bf16.msra.mxu0 %v2252
    %3259 = vmatprep.subr.bf16.mxu0 0
    %3260 = vmatpush1.bf16.msra.mxu0 %v2245
    %3261 = vmatprep.subr.bf16.mxu0 0
    %3262 = vmatpush1.bf16.msra.mxu0 %v2238
    %3263 = vmatprep.subr.bf16.mxu0 0
    %3264 = vmatpush1.bf16.msra.mxu0 %v2231
    %3265 = vmatprep.subr.bf16.mxu0 0
    %3266 = vmatpush1.bf16.msra.mxu0 %v2224
    %3267 = vmatprep.subr.bf16.mxu0 0
    %3268 = vmatpush1.bf16.msra.mxu0 %v2217
    %3269 = vmatprep.subr.bf16.mxu0 0
    %3270 = vmatpush1.bf16.msra.mxu0 %v2210
    %3271 = vmatprep.subr.bf16.mxu0 0
    %3272 = vmatpush1.bf16.msra.mxu0 %v2203
    %3273 = vmatprep.subr.bf16.mxu0 0
    %3274 = vmatpush2.bf16.msra.mxu0 0
    %3275 = vmatprep.subr.bf16.mxu0 0
    %3276 = vmatpush2.bf16.msra.mxu0 0
    %3277 = vmatprep.subr.bf16.mxu0 0
    %3278 = vmatpush2.bf16.msra.mxu0 0
    %3279 = vmatprep.subr.bf16.mxu0 0
    %3280 = vmatpush2.bf16.msra.mxu0 0
    %3281 = vmatprep.subr.bf16.mxu0 0
    %3282 = vmatpush2.bf16.msra.mxu0 0
    %3283 = vmatprep.subr.bf16.mxu0 0
    %3284 = vmatpush2.bf16.msra.mxu0 0
    %3285 = vmatprep.subr.bf16.mxu0 0
    %3286 = vmatpush2.bf16.msra.mxu0 0
    %3287 = vmatprep.subr.bf16.mxu0 0
    %3288 = vmatpush2.bf16.msra.mxu0 0
    %3289 = vmatprep.mubr.bf16.mxu0 0
    %3290 = vmatmul.mubr.bf16.gmra.mxu0 %v621
    %v3291 = vpop.f32.mrf.mxu0
    %v3292 = vadd.f32 %v3252, %v3291
    %v3293 = vpop.f32.mrf.mxu0
    %v3294 = vpop.f32.mrf.mxu0
    %v3295 = vpop.f32.mrf.mxu0
    %3296 = vdwg.mxu0
    %v3297 = vmax.f32 %v2803, 0.0
    %v3298 = vmax.f32 %v2805, 0.0
    %v3299 = vmax.f32 %v2967, 0.0
    %v3300 = vmax.f32 %v2969, 0.0
    %v3301 = vmax.f32 %v3131, 0.0
    %v3302 = vmax.f32 %v3133, 0.0
    %v3303 = vmax.f32 %v3292, 0.0
    %v3304 = vpack.c.bf16 %v3297, %v3297
    %v3305 = vpack.c.bf16 %v3298, %v3298
    %v3306 = vpack.c.bf16 %v3299, %v3299
    %v3307 = vpack.c.bf16 %v3300, %v3300
    %v3308 = vpack.c.bf16 %v3301, %v3301
    %v3309 = vpack.c.bf16 %v3302, %v3302
    %v3310 = vpack.c.bf16 %v3303, %v3303
    %v3311 = vld [vmem:[#allocation8] sm:$0xff]
    %v3312 = vld [vmem:[#allocation8 + $0x8] sm:$0xff]
    %v3313 = vld [vmem:[#allocation8 + $0x10] sm:$0xff]
    %v3314 = vld [vmem:[#allocation8 + $0x18] sm:$0xff]
    %v3315 = vld [vmem:[#allocation8 + $0x20] sm:$0xff]
    %v3316 = vld [vmem:[#allocation8 + $0x28] sm:$0xff]
    %v3317 = vld [vmem:[#allocation8 + $0x30] sm:$0xff]
    %v3318 = vld [vmem:[#allocation8 + $0x38] sm:$0xff]
    %v3319 = vld [vmem:[#allocation8 + $0x40] sm:$0xff]
    %v3320 = vld [vmem:[#allocation8 + $0x48] sm:$0xff]
    %v3321 = vld [vmem:[#allocation8 + $0x50] sm:$0xff]
    %v3322 = vld [vmem:[#allocation8 + $0x58] sm:$0xff]
    %v3323 = vld [vmem:[#allocation8 + $0x60] sm:$0xff]
    %v3324 = vld [vmem:[#allocation8 + $0x68] sm:$0xff]
    %v3325 = vld [vmem:[#allocation8 + $0x70] sm:$0xff]
    %v3326 = vld [vmem:[#allocation8 + $0x78] sm:$0xff]
    %v3327 = vld [vmem:[#allocation8 + $0x80] sm:$0xff]
    %v3328 = vld [vmem:[#allocation8 + $0x88] sm:$0xff]
    %v3329 = vld [vmem:[#allocation8 + $0x90] sm:$0xff]
    %v3330 = vld [vmem:[#allocation8 + $0x98] sm:$0xff]
    %v3331 = vld [vmem:[#allocation8 + $0xa0] sm:$0xff]
    %v3332 = vld [vmem:[#allocation8 + $0xa8] sm:$0xff]
    %v3333 = vld [vmem:[#allocation8 + $0xb0] sm:$0xff]
    %v3334 = vld [vmem:[#allocation8 + $0xb8] sm:$0xff]
    %v3335 = vld [vmem:[#allocation8 + $0xc0] sm:$0xff]
    %v3336 = vld [vmem:[#allocation8 + $0xc8] sm:$0xff]
    %v3337 = vld [vmem:[#allocation8 + $0xd0] sm:$0xff]
    %v3338 = vld [vmem:[#allocation8 + $0xd8] sm:$0xff]
    %v3339 = vld [vmem:[#allocation8 + $0xe0] sm:$0xff]
    %v3340 = vld [vmem:[#allocation8 + $0xe8] sm:$0xff]
    %v3341 = vld [vmem:[#allocation8 + $0xf0] sm:$0xff]
    %v3342 = vld [vmem:[#allocation8 + $0xf8] sm:$0xff]
    %v3343 = vld [vmem:[#allocation8 + $0x100] sm:$0xff]
    %v3344 = vld [vmem:[#allocation8 + $0x108] sm:$0xff]
    %v3345 = vld [vmem:[#allocation8 + $0x110] sm:$0xff]
    %v3346 = vld [vmem:[#allocation8 + $0x118] sm:$0xff]
    %v3347 = vld [vmem:[#allocation8 + $0x120] sm:$0xff]
    %v3348 = vld [vmem:[#allocation8 + $0x128] sm:$0xff]
    %v3349 = vld [vmem:[#allocation8 + $0x130] sm:$0xff]
    %v3350 = vld [vmem:[#allocation8 + $0x138] sm:$0xff]
    %v3351 = vld [vmem:[#allocation8 + $0x140] sm:$0xff]
    %v3352 = vld [vmem:[#allocation8 + $0x148] sm:$0xff]
    %v3353 = vld [vmem:[#allocation8 + $0x150] sm:$0xff]
    %v3354 = vld [vmem:[#allocation8 + $0x158] sm:$0xff]
    %v3355 = vld [vmem:[#allocation8 + $0x160] sm:$0xff]
    %v3356 = vld [vmem:[#allocation8 + $0x168] sm:$0xff]
    %v3357 = vld [vmem:[#allocation8 + $0x170] sm:$0xff]
    %v3358 = vld [vmem:[#allocation8 + $0x178] sm:$0xff]
    %v3359 = vld [vmem:[#allocation8 + $0x180] sm:$0xff]
    %v3360 = vld [vmem:[#allocation8 + $0x188] sm:$0xff]
    %v3361 = vld [vmem:[#allocation8 + $0x190] sm:$0xff]
    %v3362 = vld [vmem:[#allocation8 + $0x198] sm:$0xff]
    %v3363 = vld [vmem:[#allocation8 + $0x1a0] sm:$0xff]
    %v3364 = vld [vmem:[#allocation8 + $0x1a8] sm:$0xff]
    %v3365 = vld [vmem:[#allocation8 + $0x1b0] sm:$0xff]
    %v3366 = vld [vmem:[#allocation8 + $0x1b8] sm:$0xff]
    %v3367 = vld [vmem:[#allocation8 + $0x1c0] sm:$0xff]
    %v3368 = vld [vmem:[#allocation8 + $0x1c8] sm:$0xff]
    %v3369 = vld [vmem:[#allocation8 + $0x1d0] sm:$0xff]
    %v3370 = vld [vmem:[#allocation8 + $0x1d8] sm:$0xff]
    %v3371 = vld [vmem:[#allocation8 + $0x1e0] sm:$0xff]
    %v3372 = vld [vmem:[#allocation8 + $0x1e8] sm:$0xff]
    %v3373 = vld [vmem:[#allocation8 + $0x1f0] sm:$0xff]
    %v3374 = vld [vmem:[#allocation8 + $0x1f8] sm:$0xff]
    %v3375 = vld [vmem:[#allocation8 + $0x200] sm:$0xff]
    %v3376 = vld [vmem:[#allocation8 + $0x208] sm:$0xff]
    %v3377 = vld [vmem:[#allocation8 + $0x210] sm:$0xff]
    %v3378 = vld [vmem:[#allocation8 + $0x218] sm:$0xff]
    %v3379 = vld [vmem:[#allocation8 + $0x220] sm:$0xff]
    %v3380 = vld [vmem:[#allocation8 + $0x228] sm:$0xff]
    %v3381 = vld [vmem:[#allocation8 + $0x230] sm:$0xff]
    %v3382 = vld [vmem:[#allocation8 + $0x238] sm:$0xff]
    %v3383 = vld [vmem:[#allocation8 + $0x240] sm:$0xff]
    %v3384 = vld [vmem:[#allocation8 + $0x248] sm:$0xff]
    %v3385 = vld [vmem:[#allocation8 + $0x250] sm:$0xff]
    %v3386 = vld [vmem:[#allocation8 + $0x258] sm:$0xff]
    %v3387 = vld [vmem:[#allocation8 + $0x260] sm:$0xff]
    %v3388 = vld [vmem:[#allocation8 + $0x268] sm:$0xff]
    %v3389 = vld [vmem:[#allocation8 + $0x270] sm:$0xff]
    %v3390 = vld [vmem:[#allocation8 + $0x278] sm:$0xff]
    %v3391 = vld [vmem:[#allocation8 + $0x280] sm:$0xff]
    %v3392 = vld [vmem:[#allocation8 + $0x288] sm:$0xff]
    %v3393 = vld [vmem:[#allocation8 + $0x290] sm:$0xff]
    %v3394 = vld [vmem:[#allocation8 + $0x298] sm:$0xff]
    %v3395 = vld [vmem:[#allocation8 + $0x2a0] sm:$0xff]
    %v3396 = vld [vmem:[#allocation8 + $0x2a8] sm:$0xff]
    %v3397 = vld [vmem:[#allocation8 + $0x2b0] sm:$0xff]
    %v3398 = vld [vmem:[#allocation8 + $0x2b8] sm:$0xff]
    %v3399 = vld [vmem:[#allocation8 + $0x2c0] sm:$0xff]
    %v3400 = vld [vmem:[#allocation8 + $0x2c8] sm:$0xff]
    %v3401 = vld [vmem:[#allocation8 + $0x2d0] sm:$0xff]
    %v3402 = vld [vmem:[#allocation8 + $0x2d8] sm:$0xff]
    %v3403 = vld [vmem:[#allocation8 + $0x2e0] sm:$0xff]
    %v3404 = vld [vmem:[#allocation8 + $0x2e8] sm:$0xff]
    %v3405 = vld [vmem:[#allocation8 + $0x2f0] sm:$0xff]
    %v3406 = vld [vmem:[#allocation8 + $0x2f8] sm:$0xff]
    %v3407 = vld [vmem:[#allocation8 + $0x300] sm:$0xff]
    %v3408 = vld [vmem:[#allocation8 + $0x308] sm:$0xff]
    %v3409 = vld [vmem:[#allocation8 + $0x310] sm:$0xff]
    %v3410 = vld [vmem:[#allocation8 + $0x318] sm:$0xff]
    %v3411 = vld [vmem:[#allocation8 + $0x320] sm:$0xff]
    %v3412 = vld [vmem:[#allocation8 + $0x328] sm:$0xff]
    %v3413 = vld [vmem:[#allocation8 + $0x330] sm:$0xff]
    %v3414 = vld [vmem:[#allocation8 + $0x338] sm:$0xff]
    %v3415 = vld [vmem:[#allocation8 + $0x340] sm:$0xff]
    %v3416 = vld [vmem:[#allocation8 + $0x348] sm:$0xff]
    %v3417 = vld [vmem:[#allocation8 + $0x350] sm:$0xff]
    %v3418 = vld [vmem:[#allocation8 + $0x358] sm:$0xff]
    %v3419 = vld [vmem:[#allocation8 + $0x360] sm:$0xff]
    %v3420 = vld [vmem:[#allocation8 + $0x368] sm:$0xff]
    %v3421 = vld [vmem:[#allocation8 + $0x370] sm:$0xff]
    %v3422 = vld [vmem:[#allocation8 + $0x378] sm:$0xff]
    %v3423 = vld [vmem:[#allocation10] sm:$0x3]
    %v3425 = vlaneseq
    %v3426 = vshrl.u32 %v3425, 7
    %v3427 = vsub.s32 0, %v3426
    %v3428 = vrot.slane %v3423, %v3427
    %v3429 = vlaneseq
    %v3430 = vshrl.u32 %v3429, 7
    %v3431 = vsub.s32 1, %v3430
    %v3432 = vrot.slane %v3423, %v3431
    %v3547 = vunpack.c.l.b16 %v3311
    %v3548 = vunpack.c.h.b16 %v3311
    %v3549 = vunpack.c.l.b16 %v3312
    %v3550 = vunpack.c.h.b16 %v3312
    %v3551 = vunpack.c.l.b16 %v3313
    %v3552 = vunpack.c.h.b16 %v3313
    %v3553 = vunpack.c.l.b16 %v3314
    %v3554 = vunpack.c.h.b16 %v3314
    %v3555 = vunpack.c.l.b16 %v3315
    %v3556 = vunpack.c.h.b16 %v3315
    %v3557 = vunpack.c.l.b16 %v3316
    %v3558 = vunpack.c.h.b16 %v3316
    %v3559 = vunpack.c.l.b16 %v3317
    %v3560 = vunpack.c.h.b16 %v3317
    %v3561 = vunpack.c.l.b16 %v3318
    %v3562 = vunpack.c.h.b16 %v3318
    %v3563 = vunpack.c.l.b16 %v3319
    %v3564 = vunpack.c.h.b16 %v3319
    %v3565 = vunpack.c.l.b16 %v3320
    %v3566 = vunpack.c.h.b16 %v3320
    %v3567 = vunpack.c.l.b16 %v3321
    %v3568 = vunpack.c.h.b16 %v3321
    %v3569 = vunpack.c.l.b16 %v3322
    %v3570 = vunpack.c.h.b16 %v3322
    %v3571 = vunpack.c.l.b16 %v3323
    %v3572 = vunpack.c.h.b16 %v3323
    %v3573 = vunpack.c.l.b16 %v3324
    %v3574 = vunpack.c.h.b16 %v3324
    %v3575 = vunpack.c.l.b16 %v3325
    %v3576 = vunpack.c.h.b16 %v3325
    %v3577 = vunpack.c.l.b16 %v3326
    %v3578 = vunpack.c.h.b16 %v3326
    %v3579 = vunpack.c.l.b16 %v3327
    %v3580 = vunpack.c.h.b16 %v3327
    %v3581 = vunpack.c.l.b16 %v3328
    %v3582 = vunpack.c.h.b16 %v3328
    %v3583 = vunpack.c.l.b16 %v3329
    %v3584 = vunpack.c.h.b16 %v3329
    %v3585 = vunpack.c.l.b16 %v3330
    %v3586 = vunpack.c.h.b16 %v3330
    %v3587 = vunpack.c.l.b16 %v3331
    %v3588 = vunpack.c.h.b16 %v3331
    %v3589 = vunpack.c.l.b16 %v3332
    %v3590 = vunpack.c.h.b16 %v3332
    %v3591 = vunpack.c.l.b16 %v3333
    %v3592 = vunpack.c.h.b16 %v3333
    %v3593 = vunpack.c.l.b16 %v3334
    %v3594 = vunpack.c.h.b16 %v3334
    %v3595 = vunpack.c.l.b16 %v3335
    %v3596 = vunpack.c.h.b16 %v3335
    %v3597 = vunpack.c.l.b16 %v3336
    %v3598 = vunpack.c.h.b16 %v3336
    %v3599 = vunpack.c.l.b16 %v3337
    %v3600 = vunpack.c.h.b16 %v3337
    %v3601 = vunpack.c.l.b16 %v3338
    %v3602 = vunpack.c.h.b16 %v3338
    %v3603 = vunpack.c.l.b16 %v3339
    %v3604 = vunpack.c.h.b16 %v3339
    %v3605 = vunpack.c.l.b16 %v3340
    %v3606 = vunpack.c.h.b16 %v3340
    %v3607 = vunpack.c.l.b16 %v3341
    %v3608 = vunpack.c.h.b16 %v3341
    %v3609 = vunpack.c.l.b16 %v3342
    %v3610 = vunpack.c.h.b16 %v3342
    %v3611 = vunpack.c.l.b16 %v3343
    %v3612 = vunpack.c.h.b16 %v3343
    %v3613 = vunpack.c.l.b16 %v3344
    %v3614 = vunpack.c.h.b16 %v3344
    %v3615 = vunpack.c.l.b16 %v3345
    %v3616 = vunpack.c.h.b16 %v3345
    %v3617 = vunpack.c.l.b16 %v3346
    %v3618 = vunpack.c.h.b16 %v3346
    %v3619 = vunpack.c.l.b16 %v3347
    %v3620 = vunpack.c.h.b16 %v3347
    %v3621 = vunpack.c.l.b16 %v3348
    %v3622 = vunpack.c.h.b16 %v3348
    %v3623 = vunpack.c.l.b16 %v3349
    %v3624 = vunpack.c.h.b16 %v3349
    %v3625 = vunpack.c.l.b16 %v3350
    %v3626 = vunpack.c.h.b16 %v3350
    %v3627 = vunpack.c.l.b16 %v3351
    %v3628 = vunpack.c.h.b16 %v3351
    %v3629 = vunpack.c.l.b16 %v3352
    %v3630 = vunpack.c.h.b16 %v3352
    %v3631 = vunpack.c.l.b16 %v3353
    %v3632 = vunpack.c.h.b16 %v3353
    %v3633 = vunpack.c.l.b16 %v3354
    %v3634 = vunpack.c.h.b16 %v3354
    %v3635 = vunpack.c.l.b16 %v3355
    %v3636 = vunpack.c.h.b16 %v3355
    %v3637 = vunpack.c.l.b16 %v3356
    %v3638 = vunpack.c.h.b16 %v3356
    %v3639 = vunpack.c.l.b16 %v3357
    %v3640 = vunpack.c.h.b16 %v3357
    %v3641 = vunpack.c.l.b16 %v3358
    %v3642 = vunpack.c.h.b16 %v3358
    %v3643 = vunpack.c.l.b16 %v3359
    %v3644 = vunpack.c.h.b16 %v3359
    %v3645 = vunpack.c.l.b16 %v3360
    %v3646 = vunpack.c.h.b16 %v3360
    %v3647 = vunpack.c.l.b16 %v3361
    %v3648 = vunpack.c.h.b16 %v3361
    %v3649 = vunpack.c.l.b16 %v3362
    %v3650 = vunpack.c.h.b16 %v3362
    %v3651 = vunpack.c.l.b16 %v3363
    %v3652 = vunpack.c.h.b16 %v3363
    %v3653 = vunpack.c.l.b16 %v3364
    %v3654 = vunpack.c.h.b16 %v3364
    %v3655 = vunpack.c.l.b16 %v3365
    %v3656 = vunpack.c.h.b16 %v3365
    %v3657 = vunpack.c.l.b16 %v3366
    %v3658 = vunpack.c.h.b16 %v3366
    %v3659 = vunpack.c.l.b16 %v3367
    %v3660 = vunpack.c.h.b16 %v3367
    %v3661 = vunpack.c.l.b16 %v3368
    %v3662 = vunpack.c.h.b16 %v3368
    %v3663 = vunpack.c.l.b16 %v3369
    %v3664 = vunpack.c.h.b16 %v3369
    %v3665 = vunpack.c.l.b16 %v3370
    %v3666 = vunpack.c.h.b16 %v3370
    %v3667 = vunpack.c.l.b16 %v3371
    %v3668 = vunpack.c.h.b16 %v3371
    %v3669 = vunpack.c.l.b16 %v3372
    %v3670 = vunpack.c.h.b16 %v3372
    %v3671 = vunpack.c.l.b16 %v3373
    %v3672 = vunpack.c.h.b16 %v3373
    %v3673 = vunpack.c.l.b16 %v3374
    %v3674 = vunpack.c.h.b16 %v3374
    %v3675 = vunpack.c.l.b16 %v3375
    %v3676 = vunpack.c.h.b16 %v3375
    %v3677 = vunpack.c.l.b16 %v3376
    %v3678 = vunpack.c.h.b16 %v3376
    %v3679 = vunpack.c.l.b16 %v3377
    %v3680 = vunpack.c.h.b16 %v3377
    %v3681 = vunpack.c.l.b16 %v3378
    %v3682 = vunpack.c.h.b16 %v3378
    %v3683 = vunpack.c.l.b16 %v3379
    %v3684 = vunpack.c.h.b16 %v3379
    %v3685 = vunpack.c.l.b16 %v3380
    %v3686 = vunpack.c.h.b16 %v3380
    %v3687 = vunpack.c.l.b16 %v3381
    %v3688 = vunpack.c.h.b16 %v3381
    %v3689 = vunpack.c.l.b16 %v3382
    %v3690 = vunpack.c.h.b16 %v3382
    %v3691 = vunpack.c.l.b16 %v3383
    %v3692 = vunpack.c.h.b16 %v3383
    %v3693 = vunpack.c.l.b16 %v3384
    %v3694 = vunpack.c.h.b16 %v3384
    %v3695 = vunpack.c.l.b16 %v3385
    %v3696 = vunpack.c.h.b16 %v3385
    %v3697 = vunpack.c.l.b16 %v3386
    %v3698 = vunpack.c.h.b16 %v3386
    %v3699 = vunpack.c.l.b16 %v3387
    %v3700 = vunpack.c.h.b16 %v3387
    %v3701 = vunpack.c.l.b16 %v3388
    %v3702 = vunpack.c.h.b16 %v3388
    %v3703 = vunpack.c.l.b16 %v3389
    %v3704 = vunpack.c.h.b16 %v3389
    %v3705 = vunpack.c.l.b16 %v3390
    %v3706 = vunpack.c.h.b16 %v3390
    %v3707 = vunpack.c.l.b16 %v3391
    %v3708 = vunpack.c.h.b16 %v3391
    %v3709 = vunpack.c.l.b16 %v3392
    %v3710 = vunpack.c.h.b16 %v3392
    %v3711 = vunpack.c.l.b16 %v3393
    %v3712 = vunpack.c.h.b16 %v3393
    %v3713 = vunpack.c.l.b16 %v3394
    %v3714 = vunpack.c.h.b16 %v3394
    %v3715 = vunpack.c.l.b16 %v3395
    %v3716 = vunpack.c.h.b16 %v3395
    %v3717 = vunpack.c.l.b16 %v3396
    %v3718 = vunpack.c.h.b16 %v3396
    %v3719 = vunpack.c.l.b16 %v3397
    %v3720 = vunpack.c.h.b16 %v3397
    %v3721 = vunpack.c.l.b16 %v3398
    %v3722 = vunpack.c.h.b16 %v3398
    %v3723 = vunpack.c.l.b16 %v3399
    %v3724 = vunpack.c.h.b16 %v3399
    %v3725 = vunpack.c.l.b16 %v3400
    %v3726 = vunpack.c.h.b16 %v3400
    %v3727 = vunpack.c.l.b16 %v3401
    %v3728 = vunpack.c.h.b16 %v3401
    %v3729 = vunpack.c.l.b16 %v3402
    %v3730 = vunpack.c.h.b16 %v3402
    %v3731 = vunpack.c.l.b16 %v3403
    %v3732 = vunpack.c.h.b16 %v3403
    %v3733 = vunpack.c.l.b16 %v3404
    %v3734 = vunpack.c.h.b16 %v3404
    %v3735 = vunpack.c.l.b16 %v3405
    %v3736 = vunpack.c.h.b16 %v3405
    %v3737 = vunpack.c.l.b16 %v3406
    %v3738 = vunpack.c.h.b16 %v3406
    %v3739 = vunpack.c.l.b16 %v3407
    %v3740 = vunpack.c.h.b16 %v3407
    %v3741 = vunpack.c.l.b16 %v3408
    %v3742 = vunpack.c.h.b16 %v3408
    %v3743 = vunpack.c.l.b16 %v3409
    %v3744 = vunpack.c.h.b16 %v3409
    %v3745 = vunpack.c.l.b16 %v3410
    %v3746 = vunpack.c.h.b16 %v3410
    %v3747 = vunpack.c.l.b16 %v3411
    %v3748 = vunpack.c.h.b16 %v3411
    %v3749 = vunpack.c.l.b16 %v3412
    %v3750 = vunpack.c.h.b16 %v3412
    %v3751 = vunpack.c.l.b16 %v3413
    %v3752 = vunpack.c.h.b16 %v3413
    %v3753 = vunpack.c.l.b16 %v3414
    %v3754 = vunpack.c.h.b16 %v3414
    %v3755 = vunpack.c.l.b16 %v3415
    %v3756 = vunpack.c.h.b16 %v3415
    %v3757 = vunpack.c.l.b16 %v3416
    %v3758 = vunpack.c.h.b16 %v3416
    %v3759 = vunpack.c.l.b16 %v3417
    %v3760 = vunpack.c.h.b16 %v3417
    %v3761 = vunpack.c.l.b16 %v3418
    %v3762 = vunpack.c.h.b16 %v3418
    %v3763 = vunpack.c.l.b16 %v3419
    %v3764 = vunpack.c.h.b16 %v3419
    %v3765 = vunpack.c.l.b16 %v3420
    %v3766 = vunpack.c.h.b16 %v3420
    %v3767 = vunpack.c.l.b16 %v3421
    %v3768 = vunpack.c.h.b16 %v3421
    %v3769 = vunpack.c.l.b16 %v3422
    %v3770 = vunpack.c.h.b16 %v3422
    %v3771 = vpack.c.b16 %v3549, %v3547
    %v3772 = vpack.c.b16 %v3550, %v3548
    %v3773 = vpack.c.b16 %v3553, %v3551
    %v3774 = vpack.c.b16 %v3554, %v3552
    %v3775 = vpack.c.b16 %v3557, %v3555
    %v3776 = vpack.c.b16 %v3558, %v3556
    %v3777 = vpack.c.b16 %v3561, %v3559
    %v3778 = vpack.c.b16 %v3562, %v3560
    %v3779 = vpack.c.b16 %v3565, %v3563
    %v3780 = vpack.c.b16 %v3566, %v3564
    %v3781 = vpack.c.b16 %v3569, %v3567
    %v3782 = vpack.c.b16 %v3570, %v3568
    %v3783 = vpack.c.b16 %v3573, %v3571
    %v3784 = vpack.c.b16 %v3574, %v3572
    %v3785 = vpack.c.b16 %v3577, %v3575
    %v3786 = vpack.c.b16 %v3578, %v3576
    %v3787 = vpack.c.b16 %v3581, %v3579
    %v3788 = vpack.c.b16 %v3582, %v3580
    %v3789 = vpack.c.b16 %v3585, %v3583
    %v3790 = vpack.c.b16 %v3586, %v3584
    %v3791 = vpack.c.b16 %v3589, %v3587
    %v3792 = vpack.c.b16 %v3590, %v3588
    %v3793 = vpack.c.b16 %v3593, %v3591
    %v3794 = vpack.c.b16 %v3594, %v3592
    %v3795 = vpack.c.b16 %v3597, %v3595
    %v3796 = vpack.c.b16 %v3598, %v3596
    %v3797 = vpack.c.b16 %v3601, %v3599
    %v3798 = vpack.c.b16 %v3602, %v3600
    %v3799 = vpack.c.b16 %v3605, %v3603
    %v3800 = vpack.c.b16 %v3606, %v3604
    %v3801 = vpack.c.b16 %v3609, %v3607
    %v3802 = vpack.c.b16 %v3610, %v3608
    %v3803 = vpack.c.b16 %v3613, %v3611
    %v3804 = vpack.c.b16 %v3614, %v3612
    %v3805 = vpack.c.b16 %v3617, %v3615
    %v3806 = vpack.c.b16 %v3618, %v3616
    %v3807 = vpack.c.b16 %v3621, %v3619
    %v3808 = vpack.c.b16 %v3622, %v3620
    %v3809 = vpack.c.b16 %v3625, %v3623
    %v3810 = vpack.c.b16 %v3626, %v3624
    %v3811 = vpack.c.b16 %v3629, %v3627
    %v3812 = vpack.c.b16 %v3630, %v3628
    %v3813 = vpack.c.b16 %v3633, %v3631
    %v3814 = vpack.c.b16 %v3634, %v3632
    %v3815 = vpack.c.b16 %v3637, %v3635
    %v3816 = vpack.c.b16 %v3638, %v3636
    %v3817 = vpack.c.b16 %v3641, %v3639
    %v3818 = vpack.c.b16 %v3642, %v3640
    %v3819 = vpack.c.b16 %v3645, %v3643
    %v3820 = vpack.c.b16 %v3646, %v3644
    %v3821 = vpack.c.b16 %v3649, %v3647
    %v3822 = vpack.c.b16 %v3650, %v3648
    %v3823 = vpack.c.b16 %v3653, %v3651
    %v3824 = vpack.c.b16 %v3654, %v3652
    %v3825 = vpack.c.b16 %v3657, %v3655
    %v3826 = vpack.c.b16 %v3658, %v3656
    %v3827 = vpack.c.b16 %v3661, %v3659
    %v3828 = vpack.c.b16 %v3662, %v3660
    %v3829 = vpack.c.b16 %v3665, %v3663
    %v3830 = vpack.c.b16 %v3666, %v3664
    %v3831 = vpack.c.b16 %v3669, %v3667
    %v3832 = vpack.c.b16 %v3670, %v3668
    %v3833 = vpack.c.b16 %v3673, %v3671
    %v3834 = vpack.c.b16 %v3674, %v3672
    %v3835 = vpack.c.b16 %v3677, %v3675
    %v3836 = vpack.c.b16 %v3678, %v3676
    %v3837 = vpack.c.b16 %v3681, %v3679
    %v3838 = vpack.c.b16 %v3682, %v3680
    %v3839 = vpack.c.b16 %v3685, %v3683
    %v3840 = vpack.c.b16 %v3686, %v3684
    %v3841 = vpack.c.b16 %v3689, %v3687
    %v3842 = vpack.c.b16 %v3690, %v3688
    %v3843 = vpack.c.b16 %v3693, %v3691
    %v3844 = vpack.c.b16 %v3694, %v3692
    %v3845 = vpack.c.b16 %v3697, %v3695
    %v3846 = vpack.c.b16 %v3698, %v3696
    %v3847 = vpack.c.b16 %v3701, %v3699
    %v3848 = vpack.c.b16 %v3702, %v3700
    %v3849 = vpack.c.b16 %v3705, %v3703
    %v3850 = vpack.c.b16 %v3706, %v3704
    %v3851 = vpack.c.b16 %v3709, %v3707
    %v3852 = vpack.c.b16 %v3710, %v3708
    %v3853 = vpack.c.b16 %v3713, %v3711
    %v3854 = vpack.c.b16 %v3714, %v3712
    %v3855 = vpack.c.b16 %v3717, %v3715
    %v3856 = vpack.c.b16 %v3718, %v3716
    %v3857 = vpack.c.b16 %v3721, %v3719
    %v3858 = vpack.c.b16 %v3722, %v3720
    %v3859 = vpack.c.b16 %v3725, %v3723
    %v3860 = vpack.c.b16 %v3726, %v3724
    %v3861 = vpack.c.b16 %v3729, %v3727
    %v3862 = vpack.c.b16 %v3730, %v3728
    %v3863 = vpack.c.b16 %v3733, %v3731
    %v3864 = vpack.c.b16 %v3734, %v3732
    %v3865 = vpack.c.b16 %v3737, %v3735
    %v3866 = vpack.c.b16 %v3738, %v3736
    %v3867 = vpack.c.b16 %v3741, %v3739
    %v3868 = vpack.c.b16 %v3742, %v3740
    %v3869 = vpack.c.b16 %v3745, %v3743
    %v3870 = vpack.c.b16 %v3746, %v3744
    %v3871 = vpack.c.b16 %v3749, %v3747
    %v3872 = vpack.c.b16 %v3750, %v3748
    %v3873 = vpack.c.b16 %v3753, %v3751
    %v3874 = vpack.c.b16 %v3754, %v3752
    %v3875 = vpack.c.b16 %v3757, %v3755
    %v3876 = vpack.c.b16 %v3758, %v3756
    %v3877 = vpack.c.b16 %v3761, %v3759
    %v3878 = vpack.c.b16 %v3762, %v3760
    %v3879 = vpack.c.b16 %v3765, %v3763
    %v3880 = vpack.c.b16 %v3766, %v3764
    %v3881 = vpack.c.b16 %v3769, %v3767
    %v3882 = vpack.c.b16 %v3770, %v3768
    %3995 = vmatprep.subr.bf16.mxu0 %v3786
    %3996 = vmatpush1.bf16.msra.mxu0 %v3785
    %3997 = vmatprep.subr.bf16.mxu0 %v3784
    %3998 = vmatpush1.bf16.msra.mxu0 %v3783
    %3999 = vmatprep.subr.bf16.mxu0 %v3782
    %4000 = vmatpush1.bf16.msra.mxu0 %v3781
    %4001 = vmatprep.subr.bf16.mxu0 %v3780
    %4002 = vmatpush1.bf16.msra.mxu0 %v3779
    %4003 = vmatprep.subr.bf16.mxu0 %v3778
    %4004 = vmatpush1.bf16.msra.mxu0 %v3777
    %4005 = vmatprep.subr.bf16.mxu0 %v3776
    %4006 = vmatpush1.bf16.msra.mxu0 %v3775
    %4007 = vmatprep.subr.bf16.mxu0 %v3774
    %4008 = vmatpush1.bf16.msra.mxu0 %v3773
    %4009 = vmatprep.subr.bf16.mxu0 %v3772
    %4010 = vmatpush1.bf16.msra.mxu0 %v3771
    %4011 = vmatprep.subr.bf16.mxu0 %v3802
    %4012 = vmatpush2.bf16.msra.mxu0 %v3801
    %4013 = vmatprep.subr.bf16.mxu0 %v3800
    %4014 = vmatpush2.bf16.msra.mxu0 %v3799
    %4015 = vmatprep.subr.bf16.mxu0 %v3798
    %4016 = vmatpush2.bf16.msra.mxu0 %v3797
    %4017 = vmatprep.subr.bf16.mxu0 %v3796
    %4018 = vmatpush2.bf16.msra.mxu0 %v3795
    %4019 = vmatprep.subr.bf16.mxu0 %v3794
    %4020 = vmatpush2.bf16.msra.mxu0 %v3793
    %4021 = vmatprep.subr.bf16.mxu0 %v3792
    %4022 = vmatpush2.bf16.msra.mxu0 %v3791
    %4023 = vmatprep.subr.bf16.mxu0 %v3790
    %4024 = vmatpush2.bf16.msra.mxu0 %v3789
    %4025 = vmatprep.subr.bf16.mxu0 %v3788
    %4026 = vmatpush2.bf16.msra.mxu0 %v3787
    %4027 = vmatprep.mubr.bf16.mxu0 %v3305
    %4028 = vmatmul.mubr.bf16.gmra.mxu0 %v3304
    %v4029 = vpop.f32.mrf.mxu0
    %v4030 = vadd.f32 %v3428, %v4029
    %v4031 = vpop.f32.mrf.mxu0
    %v4032 = vadd.f32 %v3432, %v4031
    %v4033 = vpop.f32.mrf.mxu0
    %v4034 = vpop.f32.mrf.mxu0
    %4035 = vdwg.mxu0
    %4036 = vmatprep.subr.bf16.mxu0 %v3818
    %4037 = vmatpush1.bf16.msra.mxu0 %v3817
    %4038 = vmatprep.subr.bf16.mxu0 %v3816
    %4039 = vmatpush1.bf16.msra.mxu0 %v3815
    %4040 = vmatprep.subr.bf16.mxu0 %v3814
    %4041 = vmatpush1.bf16.msra.mxu0 %v3813
    %4042 = vmatprep.subr.bf16.mxu0 %v3812
    %4043 = vmatpush1.bf16.msra.mxu0 %v3811
    %4044 = vmatprep.subr.bf16.mxu0 %v3810
    %4045 = vmatpush1.bf16.msra.mxu0 %v3809
    %4046 = vmatprep.subr.bf16.mxu0 %v3808
    %4047 = vmatpush1.bf16.msra.mxu0 %v3807
    %4048 = vmatprep.subr.bf16.mxu0 %v3806
    %4049 = vmatpush1.bf16.msra.mxu0 %v3805
    %4050 = vmatprep.subr.bf16.mxu0 %v3804
    %4051 = vmatpush1.bf16.msra.mxu0 %v3803
    %4052 = vmatprep.subr.bf16.mxu0 %v3834
    %4053 = vmatpush2.bf16.msra.mxu0 %v3833
    %4054 = vmatprep.subr.bf16.mxu0 %v3832
    %4055 = vmatpush2.bf16.msra.mxu0 %v3831
    %4056 = vmatprep.subr.bf16.mxu0 %v3830
    %4057 = vmatpush2.bf16.msra.mxu0 %v3829
    %4058 = vmatprep.subr.bf16.mxu0 %v3828
    %4059 = vmatpush2.bf16.msra.mxu0 %v3827
    %4060 = vmatprep.subr.bf16.mxu0 %v3826
    %4061 = vmatpush2.bf16.msra.mxu0 %v3825
    %4062 = vmatprep.subr.bf16.mxu0 %v3824
    %4063 = vmatpush2.bf16.msra.mxu0 %v3823
    %4064 = vmatprep.subr.bf16.mxu0 %v3822
    %4065 = vmatpush2.bf16.msra.mxu0 %v3821
    %4066 = vmatprep.subr.bf16.mxu0 %v3820
    %4067 = vmatpush2.bf16.msra.mxu0 %v3819
    %4068 = vmatprep.mubr.bf16.mxu0 %v3307
    %4069 = vmatmul.mubr.bf16.gmra.mxu0 %v3306
    %v4070 = vpop.f32.mrf.mxu0
    %v4071 = vadd.f32 %v4030, %v4070
    %v4072 = vpop.f32.mrf.mxu0
    %v4073 = vadd.f32 %v4032, %v4072
    %v4074 = vpop.f32.mrf.mxu0
    %v4075 = vpop.f32.mrf.mxu0
    %4076 = vdwg.mxu0
    %4077 = vmatprep.subr.bf16.mxu0 %v3850
    %4078 = vmatpush1.bf16.msra.mxu0 %v3849
    %4079 = vmatprep.subr.bf16.mxu0 %v3848
    %4080 = vmatpush1.bf16.msra.mxu0 %v3847
    %4081 = vmatprep.subr.bf16.mxu0 %v3846
    %4082 = vmatpush1.bf16.msra.mxu0 %v3845
    %4083 = vmatprep.subr.bf16.mxu0 %v3844
    %4084 = vmatpush1.bf16.msra.mxu0 %v3843
    %4085 = vmatprep.subr.bf16.mxu0 %v3842
    %4086 = vmatpush1.bf16.msra.mxu0 %v3841
    %4087 = vmatprep.subr.bf16.mxu0 %v3840
    %4088 = vmatpush1.bf16.msra.mxu0 %v3839
    %4089 = vmatprep.subr.bf16.mxu0 %v3838
    %4090 = vmatpush1.bf16.msra.mxu0 %v3837
    %4091 = vmatprep.subr.bf16.mxu0 %v3836
    %4092 = vmatpush1.bf16.msra.mxu0 %v3835
    %4093 = vmatprep.subr.bf16.mxu0 %v3866
    %4094 = vmatpush2.bf16.msra.mxu0 %v3865
    %4095 = vmatprep.subr.bf16.mxu0 %v3864
    %4096 = vmatpush2.bf16.msra.mxu0 %v3863
    %4097 = vmatprep.subr.bf16.mxu0 %v3862
    %4098 = vmatpush2.bf16.msra.mxu0 %v3861
    %4099 = vmatprep.subr.bf16.mxu0 %v3860
    %4100 = vmatpush2.bf16.msra.mxu0 %v3859
    %4101 = vmatprep.subr.bf16.mxu0 %v3858
    %4102 = vmatpush2.bf16.msra.mxu0 %v3857
    %4103 = vmatprep.subr.bf16.mxu0 %v3856
    %4104 = vmatpush2.bf16.msra.mxu0 %v3855
    %4105 = vmatprep.subr.bf16.mxu0 %v3854
    %4106 = vmatpush2.bf16.msra.mxu0 %v3853
    %4107 = vmatprep.subr.bf16.mxu0 %v3852
    %4108 = vmatpush2.bf16.msra.mxu0 %v3851
    %4109 = vmatprep.mubr.bf16.mxu0 %v3309
    %4110 = vmatmul.mubr.bf16.gmra.mxu0 %v3308
    %v4111 = vpop.f32.mrf.mxu0
    %v4112 = vadd.f32 %v4071, %v4111
    %v4113 = vpop.f32.mrf.mxu0
    %v4114 = vadd.f32 %v4073, %v4113
    %v4115 = vpop.f32.mrf.mxu0
    %v4116 = vpop.f32.mrf.mxu0
    %4117 = vdwg.mxu0
    %4118 = vmatprep.subr.bf16.mxu0 %v3882
    %4119 = vmatpush1.bf16.msra.mxu0 %v3881
    %4120 = vmatprep.subr.bf16.mxu0 %v3880
    %4121 = vmatpush1.bf16.msra.mxu0 %v3879
    %4122 = vmatprep.subr.bf16.mxu0 %v3878
    %4123 = vmatpush1.bf16.msra.mxu0 %v3877
    %4124 = vmatprep.subr.bf16.mxu0 %v3876
    %4125 = vmatpush1.bf16.msra.mxu0 %v3875
    %4126 = vmatprep.subr.bf16.mxu0 %v3874
    %4127 = vmatpush1.bf16.msra.mxu0 %v3873
    %4128 = vmatprep.subr.bf16.mxu0 %v3872
    %4129 = vmatpush1.bf16.msra.mxu0 %v3871
    %4130 = vmatprep.subr.bf16.mxu0 %v3870
    %4131 = vmatpush1.bf16.msra.mxu0 %v3869
    %4132 = vmatprep.subr.bf16.mxu0 %v3868
    %4133 = vmatpush1.bf16.msra.mxu0 %v3867
    %4134 = vmatprep.subr.bf16.mxu0 0
    %4135 = vmatpush2.bf16.msra.mxu0 0
    %4136 = vmatprep.subr.bf16.mxu0 0
    %4137 = vmatpush2.bf16.msra.mxu0 0
    %4138 = vmatprep.subr.bf16.mxu0 0
    %4139 = vmatpush2.bf16.msra.mxu0 0
    %4140 = vmatprep.subr.bf16.mxu0 0
    %4141 = vmatpush2.bf16.msra.mxu0 0
    %4142 = vmatprep.subr.bf16.mxu0 0
    %4143 = vmatpush2.bf16.msra.mxu0 0
    %4144 = vmatprep.subr.bf16.mxu0 0
    %4145 = vmatpush2.bf16.msra.mxu0 0
    %4146 = vmatprep.subr.bf16.mxu0 0
    %4147 = vmatpush2.bf16.msra.mxu0 0
    %4148 = vmatprep.subr.bf16.mxu0 0
    %4149 = vmatpush2.bf16.msra.mxu0 0
    %4150 = vmatprep.mubr.bf16.mxu0 0
    %4151 = vmatmul.mubr.bf16.gmra.mxu0 %v3310
    %v4152 = vpop.f32.mrf.mxu0
    %v4153 = vadd.f32 %v4112, %v4152
    %v4154 = vpop.f32.mrf.mxu0
    %v4155 = vadd.f32 %v4114, %v4154
    %v4156 = vpop.f32.mrf.mxu0
    %v4157 = vpop.f32.mrf.mxu0
    %4158 = vdwg.mxu0
    %v4159 = vmax.f32 %v4153, 0.0
    %v4160 = vmax.f32 %v4155, 0.0
    %v4161 = vpack.c.bf16 %v4159, %v4159
    %v4162 = vpack.c.bf16 %v4160, %v4160
    %v4163 = vld [vmem:[#allocation11] sm:$0xf]
    %v4164 = vld [vmem:[#allocation11 + $0x4] sm:$0xf]
    %v4165 = vld [vmem:[#allocation11 + $0x8] sm:$0xf]
    %v4166 = vld [vmem:[#allocation11 + $0xc] sm:$0xf]
    %v4167 = vld [vmem:[#allocation11 + $0x10] sm:$0xf]
    %v4168 = vld [vmem:[#allocation11 + $0x14] sm:$0xf]
    %v4169 = vld [vmem:[#allocation11 + $0x18] sm:$0xf]
    %v4170 = vld [vmem:[#allocation11 + $0x1c] sm:$0xf]
    %v4171 = vld [vmem:[#allocation11 + $0x20] sm:$0xf]
    %v4172 = vld [vmem:[#allocation11 + $0x24] sm:$0xf]
    %v4173 = vld [vmem:[#allocation11 + $0x28] sm:$0xf]
    %v4174 = vld [vmem:[#allocation11 + $0x2c] sm:$0xf]
    %v4175 = vld [vmem:[#allocation11 + $0x30] sm:$0xf]
    %v4176 = vld [vmem:[#allocation11 + $0x34] sm:$0xf]
    %v4177 = vld [vmem:[#allocation11 + $0x38] sm:$0xf]
    %v4178 = vld [vmem:[#allocation11 + $0x3c] sm:$0xf]
    %v4179 = vld [vmem:[#allocation11 + $0x40] sm:$0xf]
    %v4180 = vld [vmem:[#allocation11 + $0x44] sm:$0xf]
    %v4181 = vld [vmem:[#allocation11 + $0x48] sm:$0xf]
    %v4182 = vld [vmem:[#allocation11 + $0x4c] sm:$0xf]
    %v4183 = vld [vmem:[#allocation11 + $0x50] sm:$0xf]
    %v4184 = vld [vmem:[#allocation11 + $0x54] sm:$0xf]
    %v4185 = vld [vmem:[#allocation11 + $0x58] sm:$0xf]
    %v4186 = vld [vmem:[#allocation11 + $0x5c] sm:$0xf]
    %v4187 = vld [vmem:[#allocation11 + $0x60] sm:$0xf]
    %v4188 = vld [vmem:[#allocation11 + $0x64] sm:$0xf]
    %v4189 = vld [vmem:[#allocation11 + $0x68] sm:$0xf]
    %v4190 = vld [vmem:[#allocation11 + $0x6c] sm:$0xf]
    %v4191 = vld [vmem:[#allocation11 + $0x70] sm:$0xf]
    %v4192 = vld [vmem:[#allocation11 + $0x74] sm:$0xf]
    %v4193 = vld [vmem:[#allocation11 + $0x78] sm:$0xf]
    %v4194 = vld [vmem:[#allocation11 + $0x7c] sm:$0xf]
    %v4195 = vld [vmem:[#allocation13] sm:$0x1]
    %v4197 = vlaneseq
    %v4198 = vshrl.u32 %v4197, 7
    %v4199 = vsub.s32 0, %v4198
    %v4200 = vrot.slane %v4195, %v4199
    %v4234 = vunpack.c.l.b16 %v4163
    %v4235 = vunpack.c.l.b16 %v4164
    %v4236 = vunpack.c.l.b16 %v4165
    %v4237 = vunpack.c.l.b16 %v4166
    %v4238 = vunpack.c.l.b16 %v4167
    %v4239 = vunpack.c.l.b16 %v4168
    %v4240 = vunpack.c.l.b16 %v4169
    %v4241 = vunpack.c.l.b16 %v4170
    %v4242 = vunpack.c.l.b16 %v4171
    %v4243 = vunpack.c.l.b16 %v4172
    %v4244 = vunpack.c.l.b16 %v4173
    %v4245 = vunpack.c.l.b16 %v4174
    %v4246 = vunpack.c.l.b16 %v4175
    %v4247 = vunpack.c.l.b16 %v4176
    %v4248 = vunpack.c.l.b16 %v4177
    %v4249 = vunpack.c.l.b16 %v4178
    %v4250 = vunpack.c.l.b16 %v4179
    %v4251 = vunpack.c.l.b16 %v4180
    %v4252 = vunpack.c.l.b16 %v4181
    %v4253 = vunpack.c.l.b16 %v4182
    %v4254 = vunpack.c.l.b16 %v4183
    %v4255 = vunpack.c.l.b16 %v4184
    %v4256 = vunpack.c.l.b16 %v4185
    %v4257 = vunpack.c.l.b16 %v4186
    %v4258 = vunpack.c.l.b16 %v4187
    %v4259 = vunpack.c.l.b16 %v4188
    %v4260 = vunpack.c.l.b16 %v4189
    %v4261 = vunpack.c.l.b16 %v4190
    %v4262 = vunpack.c.l.b16 %v4191
    %v4263 = vunpack.c.l.b16 %v4192
    %v4264 = vunpack.c.l.b16 %v4193
    %v4265 = vunpack.c.l.b16 %v4194
    %v4266 = vpack.c.b16 %v4235, %v4234
    %v4267 = vpack.c.b16 %v4237, %v4236
    %v4268 = vpack.c.b16 %v4239, %v4238
    %v4269 = vpack.c.b16 %v4241, %v4240
    %v4270 = vpack.c.b16 %v4243, %v4242
    %v4271 = vpack.c.b16 %v4245, %v4244
    %v4272 = vpack.c.b16 %v4247, %v4246
    %v4273 = vpack.c.b16 %v4249, %v4248
    %v4274 = vpack.c.b16 %v4251, %v4250
    %v4275 = vpack.c.b16 %v4253, %v4252
    %v4276 = vpack.c.b16 %v4255, %v4254
    %v4277 = vpack.c.b16 %v4257, %v4256
    %v4278 = vpack.c.b16 %v4259, %v4258
    %v4279 = vpack.c.b16 %v4261, %v4260
    %v4280 = vpack.c.b16 %v4263, %v4262
    %v4281 = vpack.c.b16 %v4265, %v4264
    %4298 = vmatprep.subr.bf16.mxu0 0
    %4299 = vmatpush1.bf16.msra.mxu0 %v4273
    %4300 = vmatprep.subr.bf16.mxu0 0
    %4301 = vmatpush1.bf16.msra.mxu0 %v4272
    %4302 = vmatprep.subr.bf16.mxu0 0
    %4303 = vmatpush1.bf16.msra.mxu0 %v4271
    %4304 = vmatprep.subr.bf16.mxu0 0
    %4305 = vmatpush1.bf16.msra.mxu0 %v4270
    %4306 = vmatprep.subr.bf16.mxu0 0
    %4307 = vmatpush1.bf16.msra.mxu0 %v4269
    %4308 = vmatprep.subr.bf16.mxu0 0
    %4309 = vmatpush1.bf16.msra.mxu0 %v4268
    %4310 = vmatprep.subr.bf16.mxu0 0
    %4311 = vmatpush1.bf16.msra.mxu0 %v4267
    %4312 = vmatprep.subr.bf16.mxu0 0
    %4313 = vmatpush1.bf16.msra.mxu0 %v4266
    %4314 = vmatprep.subr.bf16.mxu0 0
    %4315 = vmatpush2.bf16.msra.mxu0 %v4281
    %4316 = vmatprep.subr.bf16.mxu0 0
    %4317 = vmatpush2.bf16.msra.mxu0 %v4280
    %4318 = vmatprep.subr.bf16.mxu0 0
    %4319 = vmatpush2.bf16.msra.mxu0 %v4279
    %4320 = vmatprep.subr.bf16.mxu0 0
    %4321 = vmatpush2.bf16.msra.mxu0 %v4278
    %4322 = vmatprep.subr.bf16.mxu0 0
    %4323 = vmatpush2.bf16.msra.mxu0 %v4277
    %4324 = vmatprep.subr.bf16.mxu0 0
    %4325 = vmatpush2.bf16.msra.mxu0 %v4276
    %4326 = vmatprep.subr.bf16.mxu0 0
    %4327 = vmatpush2.bf16.msra.mxu0 %v4275
    %4328 = vmatprep.subr.bf16.mxu0 0
    %4329 = vmatpush2.bf16.msra.mxu0 %v4274
    %4330 = vmatprep.mubr.bf16.mxu0 %v4162
    %4331 = vmatmul.mubr.bf16.gmra.mxu0 %v4161
    %v4332 = vpop.f32.mrf.mxu0
    %v4333 = vadd.f32 %v4200, %v4332
    %v4334 = vpop.f32.mrf.mxu0
    %v4335 = vpop.f32.mrf.mxu0
    %v4336 = vpop.f32.mrf.mxu0
    %4337 = vdwg.mxu0
    %4338 = vst [vmem:[#allocation14] sm:$0xff] %v4333
    // Predicated region
    $region58: #{tpu_custom_call.1} parent=1 // pred_check
      _
    $region59: #{tpu_custom_call.1} parent=1 // pred_check_branch
      %4340 = sbr.rel (0) target = $region61
    $region60: #{tpu_custom_call.1} parent=1 // pred_region
      %s4342 = ssub.s32 128, 128
      %4343 = vsyncadd [#allocation4], %s4342
      %s4345 = sshll.u32 [#allocation14], 4
      %s4346 = int_to_ptr.vmem [resolvable:$true] %s4345
      %4348 = dma.vmem_to_hbm [thread:$0]  %s4346, 128, %s7, [#allocation4]
    $region61: #{tpu_custom_call.1} parent=1 // pred_fallthru
      _
    // Predicated region
    $region62: #{tpu_custom_call.1} parent=1 // pred_check
      _
    $region63: #{tpu_custom_call.1} parent=1 // pred_check_branch
      %4350 = sbr.rel (0) target = $region65
    $region64: #{tpu_custom_call.1} parent=1 // pred_region
      %4351 = dma.done [#allocation4], 128
    $region65: #{tpu_custom_call.1} parent=1 // pred_fallthru
      _
    %4352 = vsyncpa [#allocation3], 1
    %4353 = vsyncpa [#allocation6], 1
    %4354 = vsyncpa [#allocation9], 1
    %4355 = vsyncpa [#allocation12], 1
    %4356 = vsyncpa [#allocation4], 1

</llo_original>
